<compile_context>
chip_gen: v7x
topology: tpu7x:2x2x1
jax: 0.10.0
libtpu: 0.0.40
codegen_flags: <defaults>
</compile_context>

<pallas_src>
import math
from functools import partial

import jax
import jax.numpy as jnp
from jax.experimental import pallas as pl
from jax.experimental.pallas import tpu as pltpu


# ------------------------------ fused kernel ------------------------------- #

def _fused_forward_kernel(onehot_ref, emb_ref, pe_ref, mask_ref,
                          ln1_w_ref, ln1_b_ref, qkv_w_ref, qkv_b_ref,
                          out_w_ref, out_b_ref, ln2_w_ref, ln2_b_ref,
                          w1_ref, b1_ref, w2_ref, b2_ref,
                          c1_w_ref, c1_b_ref, c2_w_ref, c2_b_ref,
                          logits_ref, attn_ref,
                          x_ref,
                          *, n_heads, batch, seq_len, d_model):
    eps = 1e-5
    B, T, C, H = batch, seq_len, d_model, n_heads
    BT = B * T
    dh = C // H
    scale = 1.0 / math.sqrt(dh)

    layer = pl.program_id(0)
    n_layers = pl.num_programs(0)

    # ---- first grid step only: embedding (one-hot matmul) + pre-tiled PE ----
    @pl.when(layer == 0)
    def _():
        x_ref[...] = (jnp.dot(onehot_ref[...], emb_ref[...],
                              preferred_element_type=jnp.float32)
                      + pe_ref[...])

    def layernorm(v, w, b):
        # fused single-pass stats: var = E[x^2] - mean^2
        mu = jnp.mean(v, axis=-1, keepdims=True)
        ex2 = jnp.mean(v * v, axis=-1, keepdims=True)
        var = ex2 - mu * mu
        return (v - mu) * jax.lax.rsqrt(var + eps) * w + b

    x = x_ref[...]                                               # (BT, C)

    # ------------------- multi-head self-attention --------------------------
    xn1 = layernorm(x, ln1_w_ref[...], ln1_b_ref[...])
    qkv = (jnp.dot(xn1, qkv_w_ref[...], preferred_element_type=jnp.float32)
           + qkv_b_ref[...])                                     # (BT, 3C)
    q2 = qkv[:, :C] * scale        # fold 1/sqrt(d_head) into Q once
    k2 = qkv[:, C:2 * C]
    v2 = qkv[:, 2 * C:]

    # Heads on a leading (major) axis; batch stays folded into the rows and is
    # separated with the additive block-diagonal mask below.
    q3 = jnp.stack([q2[:, h * dh:(h + 1) * dh] for h in range(H)], axis=0)
    k3 = jnp.stack([k2[:, h * dh:(h + 1) * dh] for h in range(H)], axis=0)
    v3 = jnp.stack([v2[:, h * dh:(h + 1) * dh] for h in range(H)], axis=0)

    s = jnp.einsum('hqd,hkd->hqk', q3, k3,
                   preferred_element_type=jnp.float32)           # (H, BT, BT)
    s = s + mask_ref[...]                # -1e30 off the per-sample diagonal
    s = s - jnp.max(s, axis=-1, keepdims=True)
    e = jnp.exp(s)                       # masked entries underflow to exactly 0
    p = e / jnp.sum(e, axis=-1, keepdims=True)   # exact softmax (no approx)

    @pl.when(layer == n_layers - 1)
    def _():
        attn_ref[...] = p                # single store; wrapper extracts blocks

    o3 = jnp.einsum('hqk,hkd->hqd', p, v3,
                    preferred_element_type=jnp.float32)          # (H, BT, dh)

    # Output projection accumulated per head against the matching W_out rows
    # (avoids a lane-dim concatenate back to (BT, C)).
    proj = out_b_ref[...]                                        # (1, C)
    for h in range(H):
        proj = proj + jnp.dot(o3[h], out_w_ref[pl.ds(h * dh, dh), :],
                              preferred_element_type=jnp.float32)
    x = x + proj                                                 # residual 1

    # ------------------------------- FFN -------------------------------------
    xn2 = layernorm(x, ln2_w_ref[...], ln2_b_ref[...])
    hdn = jnp.maximum(
        jnp.dot(xn2, w1_ref[...], preferred_element_type=jnp.float32)
        + b1_ref[...], 0.0)
    x = x + (jnp.dot(hdn, w2_ref[...], preferred_element_type=jnp.float32)
             + b2_ref[...])                                      # residual 2
    x_ref[...] = x

    # -------------- classifier head (last grid step only) --------------------
    @pl.when(layer == n_layers - 1)
    def _():
        pooled = jnp.mean(x.reshape(B, T, C), axis=1)            # (B, C)
        h1 = jnp.maximum(
            jnp.dot(pooled, c1_w_ref[...], preferred_element_type=jnp.float32)
            + c1_b_ref[...], 0.0)                                # (B, F//2)
        logits_ref[...] = (jnp.sum(h1 * c2_w_ref[...], axis=-1, keepdims=True)
                           + c2_b_ref[...])                      # (B, 1)


# -------------------------------- wrapper ----------------------------------- #

@partial(jax.jit, static_argnums=2)
def model_forward(tokens, params, n_heads):
    B, T = tokens.shape
    V, D = params["embedding"].shape
    L = params["qkv_w"].shape[0]
    F = params["w1"].shape[2]
    Fh = params["c1_w"].shape[1]
    H = n_heads
    BT = B * T
    V_pad = max(8, ((V + 7) // 8) * 8)

    # Cheap XLA-side prep, fused into the input DMAs.
    onehot = jax.nn.one_hot(tokens.reshape(BT), V_pad, dtype=jnp.float32)
    emb_pad = jnp.zeros((V_pad, D), jnp.float32).at[:V].set(params["embedding"])
    pe_tiled = jnp.tile(params["pe"][:T], (B, 1))                # (BT, D)
    row_id = jnp.arange(BT, dtype=jnp.int32) // T
    mask = jnp.where(row_id[:, None] == row_id[None, :],
                     0.0, -1e30).astype(jnp.float32)             # (BT, BT)

    kernel = partial(_fused_forward_kernel, n_heads=H, batch=B,
                     seq_len=T, d_model=D)

    def per_layer(*tail):
        return pl.BlockSpec((None,) + tail,
                            lambda l, _t=len(tail): (l,) + (0,) * _t)

    const2 = lambda l: (0, 0)
    in_specs = [
        pl.BlockSpec((BT, V_pad), const2),          # one-hot tokens
        pl.BlockSpec((V_pad, D), const2),           # (padded) embedding table
        pl.BlockSpec((BT, D), const2),              # pre-tiled positional enc.
        pl.BlockSpec((BT, BT), const2),             # block-diag attention mask
        per_layer(1, D), per_layer(1, D),           # ln1 w / b
        per_layer(D, 3 * D), per_layer(1, 3 * D),   # qkv w / b
        per_layer(D, D), per_layer(1, D),           # out-proj w / b
        per_layer(1, D), per_layer(1, D),           # ln2 w / b
        per_layer(D, F), per_layer(1, F),           # ffn w1 / b1
        per_layer(F, D), per_layer(1, D),           # ffn w2 / b2
        pl.BlockSpec((D, Fh), const2),              # classifier linear1 w
        pl.BlockSpec((1, Fh), const2),              # classifier linear1 b
        pl.BlockSpec((1, Fh), const2),              # classifier linear2 w (row)
        pl.BlockSpec((1, 1), const2),               # classifier linear2 b
    ]
    out_specs = (
        pl.BlockSpec((B, 1), lambda l: (0, 0)),
        pl.BlockSpec((H, BT, BT), lambda l: (0, 0, 0)),
    )

    logits, p_full = pl.pallas_call(
        kernel,
        grid_spec=pltpu.PrefetchScalarGridSpec(
            num_scalar_prefetch=0,
            grid=(L,),
            in_specs=in_specs,
            out_specs=out_specs,
            scratch_shapes=[pltpu.VMEM((BT, D), jnp.float32)],   # resident x
        ),
        out_shape=(jax.ShapeDtypeStruct((B, 1), jnp.float32),
                   jax.ShapeDtypeStruct((H, BT, BT), jnp.float32)),
        compiler_params=pltpu.CompilerParams(
            dimension_semantics=("arbitrary",)),
        # TODO(synk): on v7x the two batch rows could additionally be split
        # across the two TensorCores ("parallel" batch grid axis); skipped here
        # since v5e/v6e have a single TC and it would only add grid overhead.
    )(onehot, emb_pad, pe_tiled, mask,
      params["ln1_w"], params["ln1_b"], params["qkv_w"], params["qkv_b"],
      params["out_w"], params["out_b"], params["ln2_w"], params["ln2_b"],
      params["w1"], params["b1"], params["w2"], params["b2"],
      params["c1_w"], params["c1_b"], params["c2_w_row"], params["c2_b"])

    # Per-sample attention weights are the diagonal blocks of the masked softmax.
    attn = jnp.stack(
        [p_full[:, b * T:(b + 1) * T, b * T:(b + 1) * T] for b in range(B)],
        axis=0)                                                   # (B, H, T, T)
    return logits[:, 0], attn


# --------------------------- parameters / init ------------------------------ #

def positional_encoding(max_len, d_model):
    position = jnp.arange(max_len, dtype=jnp.float32)[:, None]
    div_term = jnp.exp(jnp.arange(0, d_model, 2, dtype=jnp.float32)
                       * -(math.log(10000.0) / d_model))
    pe = jnp.zeros((max_len, d_model), jnp.float32)
    pe = pe.at[:, 0::2].set(jnp.sin(position * div_term))
    pe = pe.at[:, 1::2].set(jnp.cos(position * div_term))
    return pe


def _init_linear(key, fan_in, fan_out):
    # weights stored transposed: y = x @ w + b ; w: (fan_in, fan_out)
    kw, kb = jax.random.split(key)
    bound = 1.0 / math.sqrt(fan_in)
    w = jax.random.uniform(kw, (fan_in, fan_out), jnp.float32, -bound, bound)
    b = jax.random.uniform(kb, (1, fan_out), jnp.float32, -bound, bound)
    return w, b


def init_params(key, *, seq_len, vocab_size, d_model, n_heads, ffn_dim, n_layers):
    keys = jax.random.split(key, 2 + 4 * n_layers)
    params = {}
    params["embedding"] = jax.random.normal(keys[0], (vocab_size, d_model),
                                            jnp.float32)
    params["pe"] = positional_encoding(seq_len, d_model)

    stack = {name: [] for name in
             ("ln1_w", "ln1_b", "qkv_w", "qkv_b", "out_w", "out_b",
              "ln2_w", "ln2_b", "w1", "b1", "w2", "b2")}
    for l in range(n_layers):
        k_qkv, k_out, k_f1, k_f2 = keys[1 + 4 * l: 1 + 4 * (l + 1)]
        stack["ln1_w"].append(jnp.ones((1, d_model), jnp.float32))
        stack["ln1_b"].append(jnp.zeros((1, d_model), jnp.float32))
        qkv_w, qkv_b = _init_linear(k_qkv, d_model, 3 * d_model)
        stack["qkv_w"].append(qkv_w); stack["qkv_b"].append(qkv_b)
        out_w, out_b = _init_linear(k_out, d_model, d_model)
        stack["out_w"].append(out_w); stack["out_b"].append(out_b)
        stack["ln2_w"].append(jnp.ones((1, d_model), jnp.float32))
        stack["ln2_b"].append(jnp.zeros((1, d_model), jnp.float32))
        w1, b1 = _init_linear(k_f1, d_model, ffn_dim)
        stack["w1"].append(w1); stack["b1"].append(b1)
        w2, b2 = _init_linear(k_f2, ffn_dim, d_model)
        stack["w2"].append(w2); stack["b2"].append(b2)
    for name, lst in stack.items():
        params[name] = jnp.stack(lst, axis=0)     # leading layer axis

    kc1, kc2 = jax.random.split(keys[-1])
    c1_w, c1_b = _init_linear(kc1, d_model, ffn_dim // 2)
    c2_w, c2_b = _init_linear(kc2, ffn_dim // 2, 1)
    params["c1_w"], params["c1_b"] = c1_w, c1_b
    params["c2_w_row"], params["c2_b"] = c2_w.T, c2_b   # (1, F//2), (1, 1)
    return params


# ---------------------------------- main ------------------------------------ #

if __name__ == "__main__":
    B, T = 2, 8
    vocab_size, d_model, n_heads, ffn_dim, n_layers = 4, 128, 4, 128, 3

    key = jax.random.PRNGKey(0)
    k_tok, k_par = jax.random.split(key)
    tokens = jax.random.randint(k_tok, (B, T), 0, vocab_size, dtype=jnp.int32)

    params = init_params(k_par, seq_len=T, vocab_size=vocab_size,
                         d_model=d_model, n_heads=n_heads,
                         ffn_dim=ffn_dim, n_layers=n_layers)

    logits, attn_weights = model_forward(tokens, params, n_heads)
    jax.block_until_ready((logits, attn_weights))

    assert logits.shape == (B,)
    assert attn_weights.shape == (B, n_heads, T, T)
    # each attention row is a softmax over its own sample -> sums to 1
    assert bool(jnp.allclose(jnp.sum(attn_weights, axis=-1), 1.0, atol=1e-4))
    print("KERNEL_OK")
</pallas_src>

<mosaic_0001>
module attributes {stable_mosaic.version = 11 : i64} {
  func.func @_fused_forward_kernel(%arg0: i32, %arg1: memref<16x8xf32, #tpu.memory_space<vmem>>, %arg2: memref<8x128xf32, #tpu.memory_space<vmem>>, %arg3: memref<16x128xf32, #tpu.memory_space<vmem>>, %arg4: memref<16x16xf32, #tpu.memory_space<vmem>>, %arg5: memref<1x1x128xf32, #tpu.memory_space<vmem>>, %arg6: memref<1x1x128xf32, #tpu.memory_space<vmem>>, %arg7: memref<1x128x384xf32, #tpu.memory_space<vmem>>, %arg8: memref<1x1x384xf32, #tpu.memory_space<vmem>>, %arg9: memref<1x128x128xf32, #tpu.memory_space<vmem>>, %arg10: memref<1x1x128xf32, #tpu.memory_space<vmem>>, %arg11: memref<1x1x128xf32, #tpu.memory_space<vmem>>, %arg12: memref<1x1x128xf32, #tpu.memory_space<vmem>>, %arg13: memref<1x128x128xf32, #tpu.memory_space<vmem>>, %arg14: memref<1x1x128xf32, #tpu.memory_space<vmem>>, %arg15: memref<1x128x128xf32, #tpu.memory_space<vmem>>, %arg16: memref<1x1x128xf32, #tpu.memory_space<vmem>>, %arg17: memref<128x64xf32, #tpu.memory_space<vmem>>, %arg18: memref<1x64xf32, #tpu.memory_space<vmem>>, %arg19: memref<1x64xf32, #tpu.memory_space<vmem>>, %arg20: memref<1x1xf32, #tpu.memory_space<vmem>>, %arg21: memref<2x1xf32, #tpu.memory_space<vmem>>, %arg22: memref<4x16x16xf32, #tpu.memory_space<vmem>>, %arg23: memref<16x128xf32, #tpu.memory_space<vmem>>) attributes {dimension_semantics = [#tpu.dimension_semantics<arbitrary>], iteration_bounds = array<i64: 3>, scalar_prefetch = 0 : i64, scratch_operands = 1 : i64, tpu.core_type = #tpu.core_type<tc>, window_params = [{pipeline_mode = #tpu.pipeline_mode<synchronous>, transform_indices = @transform_0, window_bounds = array<i64: 16, 8>}, {pipeline_mode = #tpu.pipeline_mode<synchronous>, transform_indices = @transform_1, window_bounds = array<i64: 8, 128>}, {pipeline_mode = #tpu.pipeline_mode<synchronous>, transform_indices = @transform_2, window_bounds = array<i64: 16, 128>}, {pipeline_mode = #tpu.pipeline_mode<synchronous>, transform_indices = @transform_3, window_bounds = array<i64: 16, 16>}, {transform_indices = @transform_4, window_bounds = array<i64: 1, 1, 128>}, {transform_indices = @transform_5, window_bounds = array<i64: 1, 1, 128>}, {transform_indices = @transform_6, window_bounds = array<i64: 1, 128, 384>}, {transform_indices = @transform_7, window_bounds = array<i64: 1, 1, 384>}, {transform_indices = @transform_8, window_bounds = array<i64: 1, 128, 128>}, {transform_indices = @transform_9, window_bounds = array<i64: 1, 1, 128>}, {transform_indices = @transform_10, window_bounds = array<i64: 1, 1, 128>}, {transform_indices = @transform_11, window_bounds = array<i64: 1, 1, 128>}, {transform_indices = @transform_12, window_bounds = array<i64: 1, 128, 128>}, {transform_indices = @transform_13, window_bounds = array<i64: 1, 1, 128>}, {transform_indices = @transform_14, window_bounds = array<i64: 1, 128, 128>}, {transform_indices = @transform_15, window_bounds = array<i64: 1, 1, 128>}, {pipeline_mode = #tpu.pipeline_mode<synchronous>, transform_indices = @transform_16, window_bounds = array<i64: 128, 64>}, {pipeline_mode = #tpu.pipeline_mode<synchronous>, transform_indices = @transform_17, window_bounds = array<i64: 1, 64>}, {pipeline_mode = #tpu.pipeline_mode<synchronous>, transform_indices = @transform_18, window_bounds = array<i64: 1, 64>}, {pipeline_mode = #tpu.pipeline_mode<synchronous>, transform_indices = @transform_19, window_bounds = array<i64: 1, 1>}, {pipeline_mode = #tpu.pipeline_mode<synchronous>, transform_indices = @transform_20, window_bounds = array<i64: 2, 1>}, {pipeline_mode = #tpu.pipeline_mode<synchronous>, transform_indices = @transform_21, window_bounds = array<i64: 4, 16, 16>}]} {
    %c0_i32 = arith.constant 0 : i32
    %0 = arith.cmpi eq, %arg0, %c0_i32 : i32
    %1 = arith.extui %0 : i1 to i32
    %c0_i32_0 = arith.constant 0 : i32
    %2 = arith.cmpi ne, %1, %c0_i32_0 : i32
    scf.if %2 {
      %c0_73 = arith.constant 0 : index
      %c0_74 = arith.constant 0 : index
      %162 = vector.load %arg1[%c0_73, %c0_74] : memref<16x8xf32, #tpu.memory_space<vmem>>, vector<16x8xf32>
      %c0_75 = arith.constant 0 : index
      %c0_76 = arith.constant 0 : index
      %163 = vector.load %arg2[%c0_75, %c0_76] : memref<8x128xf32, #tpu.memory_space<vmem>>, vector<8x128xf32>
      %cst_77 = arith.constant dense<0.000000e+00> : vector<16x128xf32>
      %164 = tpu.matmul %162, %163, %cst_77 {dimension_numbers = #tpu.dot_dimension_numbers<[1], [0], [0], [1], [0, 0, 1, 1], [], []>} : vector<16x8xf32>, vector<8x128xf32>, vector<16x128xf32> -> vector<16x128xf32>
      %c0_78 = arith.constant 0 : index
      %c0_79 = arith.constant 0 : index
      %165 = vector.load %arg3[%c0_78, %c0_79] : memref<16x128xf32, #tpu.memory_space<vmem>>, vector<16x128xf32>
      %166 = arith.addf %164, %165 : vector<16x128xf32>
      %c0_80 = arith.constant 0 : index
      %c0_81 = arith.constant 0 : index
      %167 = vector.load %arg23[%c0_80, %c0_81] : memref<16x128xf32, #tpu.memory_space<vmem>>, vector<16x128xf32>
      tpu.vector_store %arg23[%c0_80, %c0_81], %166 {strides = array<i32>} : memref<16x128xf32, #tpu.memory_space<vmem>>, vector<16x128xf32>,
    } else {
    }
    %c0 = arith.constant 0 : index
    %c0_1 = arith.constant 0 : index
    %3 = vector.load %arg23[%c0, %c0_1] : memref<16x128xf32, #tpu.memory_space<vmem>>, vector<16x128xf32>
    %c0_2 = arith.constant 0 : index
    %c0_3 = arith.constant 0 : index
    %c0_4 = arith.constant 0 : index
    %4 = vector.load %arg5[%c0_2, %c0_3, %c0_4] : memref<1x1x128xf32, #tpu.memory_space<vmem>>, vector<1x1x128xf32>
    %5 = vector.shape_cast %4 : vector<1x1x128xf32> to vector<1x128xf32>
    %c0_5 = arith.constant 0 : index
    %c0_6 = arith.constant 0 : index
    %c0_7 = arith.constant 0 : index
    %6 = vector.load %arg6[%c0_5, %c0_6, %c0_7] : memref<1x1x128xf32, #tpu.memory_space<vmem>>, vector<1x1x128xf32>
    %7 = vector.shape_cast %6 : vector<1x1x128xf32> to vector<1x128xf32>
    %cst = arith.constant dense<0.000000e+00> : vector<16xf32>
    %8 = vector.multi_reduction <add>, %3, %cst [1] : vector<16x128xf32> to vector<16xf32>
    %9 = vector.shape_cast %8 : vector<16xf32> to vector<16x1xf32>
    %cst_8 = arith.constant 1.280000e+02 : f32
    %10 = vector.broadcast %cst_8 : f32 to vector<16x1xf32>
    %11 = arith.divf %9, %10 : vector<16x1xf32>
    %12 = arith.mulf %3, %3 : vector<16x128xf32>
    %cst_9 = arith.constant dense<0.000000e+00> : vector<16xf32>
    %13 = vector.multi_reduction <add>, %12, %cst_9 [1] : vector<16x128xf32> to vector<16xf32>
    %14 = vector.shape_cast %13 : vector<16xf32> to vector<16x1xf32>
    %cst_10 = arith.constant 1.280000e+02 : f32
    %15 = vector.broadcast %cst_10 : f32 to vector<16x1xf32>
    %16 = arith.divf %14, %15 : vector<16x1xf32>
    %17 = arith.mulf %11, %11 : vector<16x1xf32>
    %18 = arith.subf %16, %17 : vector<16x1xf32>
    %19 = vector.broadcast %11 : vector<16x1xf32> to vector<16x128xf32>
    %20 = arith.subf %3, %19 : vector<16x128xf32>
    %cst_11 = arith.constant 9.99999974E-6 : f32
    %21 = vector.broadcast %cst_11 : f32 to vector<16x1xf32>
    %22 = arith.addf %18, %21 : vector<16x1xf32>
    %23 = math.rsqrt %22 : vector<16x1xf32>
    %24 = vector.broadcast %23 : vector<16x1xf32> to vector<16x128xf32>
    %25 = arith.mulf %20, %24 : vector<16x128xf32>
    %26 = vector.broadcast %5 : vector<1x128xf32> to vector<16x128xf32>
    %27 = arith.mulf %25, %26 : vector<16x128xf32>
    %28 = vector.broadcast %7 : vector<1x128xf32> to vector<16x128xf32>
    %29 = arith.addf %27, %28 : vector<16x128xf32>
    %c0_12 = arith.constant 0 : index
    %c0_13 = arith.constant 0 : index
    %c0_14 = arith.constant 0 : index
    %30 = vector.load %arg7[%c0_12, %c0_13, %c0_14] : memref<1x128x384xf32, #tpu.memory_space<vmem>>, vector<1x128x384xf32>
    %31 = vector.shape_cast %30 : vector<1x128x384xf32> to vector<128x384xf32>
    %cst_15 = arith.constant dense<0.000000e+00> : vector<16x384xf32>
    %32 = tpu.matmul %29, %31, %cst_15 {dimension_numbers = #tpu.dot_dimension_numbers<[1], [0], [0], [1], [0, 0, 1, 1], [], []>} : vector<16x128xf32>, vector<128x384xf32>, vector<16x384xf32> -> vector<16x384xf32>
    %c0_16 = arith.constant 0 : index
    %c0_17 = arith.constant 0 : index
    %c0_18 = arith.constant 0 : index
    %33 = vector.load %arg8[%c0_16, %c0_17, %c0_18] : memref<1x1x384xf32, #tpu.memory_space<vmem>>, vector<1x1x384xf32>
    %34 = vector.shape_cast %33 : vector<1x1x384xf32> to vector<1x384xf32>
    %35 = vector.broadcast %34 : vector<1x384xf32> to vector<16x384xf32>
    %36 = arith.addf %32, %35 : vector<16x384xf32>
    %37 = vector.extract_strided_slice %36 {offsets = [0, 0], sizes = [16, 128], strides = [1, 1]} : vector<16x384xf32> to vector<16x128xf32>
    %cst_19 = arith.constant 0.176776692 : f32
    %38 = vector.broadcast %cst_19 : f32 to vector<16x128xf32>
    %39 = arith.mulf %37, %38 : vector<16x128xf32>
    %40 = vector.extract_strided_slice %36 {offsets = [0, 128], sizes = [16, 128], strides = [1, 1]} : vector<16x384xf32> to vector<16x128xf32>
    %41 = vector.extract_strided_slice %36 {offsets = [0, 256], sizes = [16, 128], strides = [1, 1]} : vector<16x384xf32> to vector<16x128xf32>
    %42 = vector.extract_strided_slice %39 {offsets = [0, 0], sizes = [16, 32], strides = [1, 1]} : vector<16x128xf32> to vector<16x32xf32>
    %43 = vector.extract_strided_slice %39 {offsets = [0, 32], sizes = [16, 32], strides = [1, 1]} : vector<16x128xf32> to vector<16x32xf32>
    %44 = vector.extract_strided_slice %39 {offsets = [0, 64], sizes = [16, 32], strides = [1, 1]} : vector<16x128xf32> to vector<16x32xf32>
    %45 = vector.extract_strided_slice %39 {offsets = [0, 96], sizes = [16, 32], strides = [1, 1]} : vector<16x128xf32> to vector<16x32xf32>
    %46 = vector.shape_cast %42 : vector<16x32xf32> to vector<1x16x32xf32>
    %47 = vector.shape_cast %43 : vector<16x32xf32> to vector<1x16x32xf32>
    %48 = vector.shape_cast %44 : vector<16x32xf32> to vector<1x16x32xf32>
    %49 = vector.shape_cast %45 : vector<16x32xf32> to vector<1x16x32xf32>
    %50 = tpu.concatenate %46, %47, %48, %49 in 0 : vector<1x16x32xf32>, vector<1x16x32xf32>, vector<1x16x32xf32>, vector<1x16x32xf32> -> vector<4x16x32xf32>
    %51 = vector.extract_strided_slice %40 {offsets = [0, 0], sizes = [16, 32], strides = [1, 1]} : vector<16x128xf32> to vector<16x32xf32>
    %52 = vector.extract_strided_slice %40 {offsets = [0, 32], sizes = [16, 32], strides = [1, 1]} : vector<16x128xf32> to vector<16x32xf32>
    %53 = vector.extract_strided_slice %40 {offsets = [0, 64], sizes = [16, 32], strides = [1, 1]} : vector<16x128xf32> to vector<16x32xf32>
    %54 = vector.extract_strided_slice %40 {offsets = [0, 96], sizes = [16, 32], strides = [1, 1]} : vector<16x128xf32> to vector<16x32xf32>
    %55 = vector.shape_cast %51 : vector<16x32xf32> to vector<1x16x32xf32>
    %56 = vector.shape_cast %52 : vector<16x32xf32> to vector<1x16x32xf32>
    %57 = vector.shape_cast %53 : vector<16x32xf32> to vector<1x16x32xf32>
    %58 = vector.shape_cast %54 : vector<16x32xf32> to vector<1x16x32xf32>
    %59 = tpu.concatenate %55, %56, %57, %58 in 0 : vector<1x16x32xf32>, vector<1x16x32xf32>, vector<1x16x32xf32>, vector<1x16x32xf32> -> vector<4x16x32xf32>
    %60 = vector.extract_strided_slice %41 {offsets = [0, 0], sizes = [16, 32], strides = [1, 1]} : vector<16x128xf32> to vector<16x32xf32>
    %61 = vector.extract_strided_slice %41 {offsets = [0, 32], sizes = [16, 32], strides = [1, 1]} : vector<16x128xf32> to vector<16x32xf32>
    %62 = vector.extract_strided_slice %41 {offsets = [0, 64], sizes = [16, 32], strides = [1, 1]} : vector<16x128xf32> to vector<16x32xf32>
    %63 = vector.extract_strided_slice %41 {offsets = [0, 96], sizes = [16, 32], strides = [1, 1]} : vector<16x128xf32> to vector<16x32xf32>
    %64 = vector.shape_cast %60 : vector<16x32xf32> to vector<1x16x32xf32>
    %65 = vector.shape_cast %61 : vector<16x32xf32> to vector<1x16x32xf32>
    %66 = vector.shape_cast %62 : vector<16x32xf32> to vector<1x16x32xf32>
    %67 = vector.shape_cast %63 : vector<16x32xf32> to vector<1x16x32xf32>
    %68 = tpu.concatenate %64, %65, %66, %67 in 0 : vector<1x16x32xf32>, vector<1x16x32xf32>, vector<1x16x32xf32>, vector<1x16x32xf32> -> vector<4x16x32xf32>
    "tpu.trace_start"() <{level = 10 : i32, message = "hqd,hkd->hqk"}> : () -> ()
    %cst_20 = arith.constant dense<0.000000e+00> : vector<4x16x16xf32>
    %69 = tpu.matmul %50, %59, %cst_20 {dimension_numbers = #tpu.dot_dimension_numbers<[2], [2], [1], [1], [0, 0, 0, 1, 1, 1], [0], [0]>} : vector<4x16x32xf32>, vector<4x16x32xf32>, vector<4x16x16xf32> -> vector<4x16x16xf32>
    "tpu.trace_stop"() : () -> ()
    %c0_21 = arith.constant 0 : index
    %c0_22 = arith.constant 0 : index
    %70 = vector.load %arg4[%c0_21, %c0_22] : memref<16x16xf32, #tpu.memory_space<vmem>>, vector<16x16xf32>
    %71 = vector.shape_cast %70 : vector<16x16xf32> to vector<1x16x16xf32>
    %72 = vector.broadcast %71 : vector<1x16x16xf32> to vector<4x16x16xf32>
    %73 = arith.addf %69, %72 : vector<4x16x16xf32>
    %cst_23 = arith.constant dense<0xFF800000> : vector<4x16xf32>
    %74 = vector.multi_reduction <maximumf>, %73, %cst_23 [2] : vector<4x16x16xf32> to vector<4x16xf32>
    %75 = vector.shape_cast %74 : vector<4x16xf32> to vector<4x16x1xf32>
    %76 = vector.broadcast %75 : vector<4x16x1xf32> to vector<4x16x16xf32>
    %77 = arith.subf %73, %76 : vector<4x16x16xf32>
    %78 = math.exp %77 : vector<4x16x16xf32>
    %cst_24 = arith.constant dense<0.000000e+00> : vector<4x16xf32>
    %79 = vector.multi_reduction <add>, %78, %cst_24 [2] : vector<4x16x16xf32> to vector<4x16xf32>
    %80 = vector.shape_cast %79 : vector<4x16xf32> to vector<4x16x1xf32>
    %81 = vector.broadcast %80 : vector<4x16x1xf32> to vector<4x16x16xf32>
    %82 = arith.divf %78, %81 : vector<4x16x16xf32>
    %c2_i32 = arith.constant 2 : i32
    %83 = arith.cmpi eq, %arg0, %c2_i32 : i32
    %84 = arith.extui %83 : i1 to i32
    %c0_i32_25 = arith.constant 0 : i32
    %85 = arith.cmpi ne, %84, %c0_i32_25 : i32
    scf.if %85 {
      %c0_73 = arith.constant 0 : index
      %c0_74 = arith.constant 0 : index
      %c0_75 = arith.constant 0 : index
      %162 = vector.load %arg22[%c0_73, %c0_74, %c0_75] : memref<4x16x16xf32, #tpu.memory_space<vmem>>, vector<4x16x16xf32>
      tpu.vector_store %arg22[%c0_73, %c0_74, %c0_75], %82 {strides = array<i32>} : memref<4x16x16xf32, #tpu.memory_space<vmem>>, vector<4x16x16xf32>,
    } else {
    }
    "tpu.trace_start"() <{level = 10 : i32, message = "hqk,hkd->hqd"}> : () -> ()
    %cst_26 = arith.constant dense<0.000000e+00> : vector<4x16x32xf32>
    %86 = tpu.matmul %82, %68, %cst_26 {dimension_numbers = #tpu.dot_dimension_numbers<[2], [1], [1], [2], [0, 0, 0, 1, 1, 2], [0], [0]>} : vector<4x16x16xf32>, vector<4x16x32xf32>, vector<4x16x32xf32> -> vector<4x16x32xf32>
    "tpu.trace_stop"() : () -> ()
    %c0_27 = arith.constant 0 : index
    %c0_28 = arith.constant 0 : index
    %c0_29 = arith.constant 0 : index
    %87 = vector.load %arg10[%c0_27, %c0_28, %c0_29] : memref<1x1x128xf32, #tpu.memory_space<vmem>>, vector<1x1x128xf32>
    %88 = vector.shape_cast %87 : vector<1x1x128xf32> to vector<1x128xf32>
    %89 = vector.extract_strided_slice %86 {offsets = [0, 0, 0], sizes = [1, 16, 32], strides = [1, 1, 1]} : vector<4x16x32xf32> to vector<1x16x32xf32>
    %90 = vector.shape_cast %89 : vector<1x16x32xf32> to vector<16x32xf32>
    %c0_30 = arith.constant 0 : index
    %c0_31 = arith.constant 0 : index
    %c0_32 = arith.constant 0 : index
    %91 = vector.load %arg9[%c0_30, %c0_31, %c0_32] : memref<1x128x128xf32, #tpu.memory_space<vmem>>, vector<1x32x128xf32>
    %92 = vector.shape_cast %91 : vector<1x32x128xf32> to vector<32x128xf32>
    %cst_33 = arith.constant dense<0.000000e+00> : vector<16x128xf32>
    %93 = tpu.matmul %90, %92, %cst_33 {dimension_numbers = #tpu.dot_dimension_numbers<[1], [0], [0], [1], [0, 0, 1, 1], [], []>} : vector<16x32xf32>, vector<32x128xf32>, vector<16x128xf32> -> vector<16x128xf32>
    %94 = vector.broadcast %88 : vector<1x128xf32> to vector<16x128xf32>
    %95 = arith.addf %94, %93 : vector<16x128xf32>
    %96 = vector.extract_strided_slice %86 {offsets = [1, 0, 0], sizes = [1, 16, 32], strides = [1, 1, 1]} : vector<4x16x32xf32> to vector<1x16x32xf32>
    %97 = vector.shape_cast %96 : vector<1x16x32xf32> to vector<16x32xf32>
    %c0_34 = arith.constant 0 : index
    %c32 = arith.constant 32 : index
    %c0_35 = arith.constant 0 : index
    %98 = vector.load %arg9[%c0_34, %c32, %c0_35] : memref<1x128x128xf32, #tpu.memory_space<vmem>>, vector<1x32x128xf32>
    %99 = vector.shape_cast %98 : vector<1x32x128xf32> to vector<32x128xf32>
    %cst_36 = arith.constant dense<0.000000e+00> : vector<16x128xf32>
    %100 = tpu.matmul %97, %99, %cst_36 {dimension_numbers = #tpu.dot_dimension_numbers<[1], [0], [0], [1], [0, 0, 1, 1], [], []>} : vector<16x32xf32>, vector<32x128xf32>, vector<16x128xf32> -> vector<16x128xf32>
    %101 = arith.addf %95, %100 : vector<16x128xf32>
    %102 = vector.extract_strided_slice %86 {offsets = [2, 0, 0], sizes = [1, 16, 32], strides = [1, 1, 1]} : vector<4x16x32xf32> to vector<1x16x32xf32>
    %103 = vector.shape_cast %102 : vector<1x16x32xf32> to vector<16x32xf32>
    %c0_37 = arith.constant 0 : index
    %c64 = arith.constant 64 : index
    %c0_38 = arith.constant 0 : index
    %104 = vector.load %arg9[%c0_37, %c64, %c0_38] : memref<1x128x128xf32, #tpu.memory_space<vmem>>, vector<1x32x128xf32>
    %105 = vector.shape_cast %104 : vector<1x32x128xf32> to vector<32x128xf32>
    %cst_39 = arith.constant dense<0.000000e+00> : vector<16x128xf32>
    %106 = tpu.matmul %103, %105, %cst_39 {dimension_numbers = #tpu.dot_dimension_numbers<[1], [0], [0], [1], [0, 0, 1, 1], [], []>} : vector<16x32xf32>, vector<32x128xf32>, vector<16x128xf32> -> vector<16x128xf32>
    %107 = arith.addf %101, %106 : vector<16x128xf32>
    %108 = vector.extract_strided_slice %86 {offsets = [3, 0, 0], sizes = [1, 16, 32], strides = [1, 1, 1]} : vector<4x16x32xf32> to vector<1x16x32xf32>
    %109 = vector.shape_cast %108 : vector<1x16x32xf32> to vector<16x32xf32>
    %c0_40 = arith.constant 0 : index
    %c96 = arith.constant 96 : index
    %c0_41 = arith.constant 0 : index
    %110 = vector.load %arg9[%c0_40, %c96, %c0_41] : memref<1x128x128xf32, #tpu.memory_space<vmem>>, vector<1x32x128xf32>
    %111 = vector.shape_cast %110 : vector<1x32x128xf32> to vector<32x128xf32>
    %cst_42 = arith.constant dense<0.000000e+00> : vector<16x128xf32>
    %112 = tpu.matmul %109, %111, %cst_42 {dimension_numbers = #tpu.dot_dimension_numbers<[1], [0], [0], [1], [0, 0, 1, 1], [], []>} : vector<16x32xf32>, vector<32x128xf32>, vector<16x128xf32> -> vector<16x128xf32>
    %113 = arith.addf %107, %112 : vector<16x128xf32>
    %114 = arith.addf %3, %113 : vector<16x128xf32>
    %c0_43 = arith.constant 0 : index
    %c0_44 = arith.constant 0 : index
    %c0_45 = arith.constant 0 : index
    %115 = vector.load %arg11[%c0_43, %c0_44, %c0_45] : memref<1x1x128xf32, #tpu.memory_space<vmem>>, vector<1x1x128xf32>
    %116 = vector.shape_cast %115 : vector<1x1x128xf32> to vector<1x128xf32>
    %c0_46 = arith.constant 0 : index
    %c0_47 = arith.constant 0 : index
    %c0_48 = arith.constant 0 : index
    %117 = vector.load %arg12[%c0_46, %c0_47, %c0_48] : memref<1x1x128xf32, #tpu.memory_space<vmem>>, vector<1x1x128xf32>
    %118 = vector.shape_cast %117 : vector<1x1x128xf32> to vector<1x128xf32>
    %cst_49 = arith.constant dense<0.000000e+00> : vector<16xf32>
    %119 = vector.multi_reduction <add>, %114, %cst_49 [1] : vector<16x128xf32> to vector<16xf32>
    %120 = vector.shape_cast %119 : vector<16xf32> to vector<16x1xf32>
    %cst_50 = arith.constant 1.280000e+02 : f32
    %121 = vector.broadcast %cst_50 : f32 to vector<16x1xf32>
    %122 = arith.divf %120, %121 : vector<16x1xf32>
    %123 = arith.mulf %114, %114 : vector<16x128xf32>
    %cst_51 = arith.constant dense<0.000000e+00> : vector<16xf32>
    %124 = vector.multi_reduction <add>, %123, %cst_51 [1] : vector<16x128xf32> to vector<16xf32>
    %125 = vector.shape_cast %124 : vector<16xf32> to vector<16x1xf32>
    %cst_52 = arith.constant 1.280000e+02 : f32
    %126 = vector.broadcast %cst_52 : f32 to vector<16x1xf32>
    %127 = arith.divf %125, %126 : vector<16x1xf32>
    %128 = arith.mulf %122, %122 : vector<16x1xf32>
    %129 = arith.subf %127, %128 : vector<16x1xf32>
    %130 = vector.broadcast %122 : vector<16x1xf32> to vector<16x128xf32>
    %131 = arith.subf %114, %130 : vector<16x128xf32>
    %cst_53 = arith.constant 9.99999974E-6 : f32
    %132 = vector.broadcast %cst_53 : f32 to vector<16x1xf32>
    %133 = arith.addf %129, %132 : vector<16x1xf32>
    %134 = math.rsqrt %133 : vector<16x1xf32>
    %135 = vector.broadcast %134 : vector<16x1xf32> to vector<16x128xf32>
    %136 = arith.mulf %131, %135 : vector<16x128xf32>
    %137 = vector.broadcast %116 : vector<1x128xf32> to vector<16x128xf32>
    %138 = arith.mulf %136, %137 : vector<16x128xf32>
    %139 = vector.broadcast %118 : vector<1x128xf32> to vector<16x128xf32>
    %140 = arith.addf %138, %139 : vector<16x128xf32>
    %c0_54 = arith.constant 0 : index
    %c0_55 = arith.constant 0 : index
    %c0_56 = arith.constant 0 : index
    %141 = vector.load %arg13[%c0_54, %c0_55, %c0_56] : memref<1x128x128xf32, #tpu.memory_space<vmem>>, vector<1x128x128xf32>
    %142 = vector.shape_cast %141 : vector<1x128x128xf32> to vector<128x128xf32>
    %cst_57 = arith.constant dense<0.000000e+00> : vector<16x128xf32>
    %143 = tpu.matmul %140, %142, %cst_57 {dimension_numbers = #tpu.dot_dimension_numbers<[1], [0], [0], [1], [0, 0, 1, 1], [], []>} : vector<16x128xf32>, vector<128x128xf32>, vector<16x128xf32> -> vector<16x128xf32>
    %c0_58 = arith.constant 0 : index
    %c0_59 = arith.constant 0 : index
    %c0_60 = arith.constant 0 : index
    %144 = vector.load %arg14[%c0_58, %c0_59, %c0_60] : memref<1x1x128xf32, #tpu.memory_space<vmem>>, vector<1x1x128xf32>
    %145 = vector.shape_cast %144 : vector<1x1x128xf32> to vector<1x128xf32>
    %146 = vector.broadcast %145 : vector<1x128xf32> to vector<16x128xf32>
    %147 = arith.addf %143, %146 : vector<16x128xf32>
    %cst_61 = arith.constant 0.000000e+00 : f32
    %148 = vector.broadcast %cst_61 : f32 to vector<16x128xf32>
    %149 = arith.maximumf %147, %148 : vector<16x128xf32>
    %c0_62 = arith.constant 0 : index
    %c0_63 = arith.constant 0 : index
    %c0_64 = arith.constant 0 : index
    %150 = vector.load %arg15[%c0_62, %c0_63, %c0_64] : memref<1x128x128xf32, #tpu.memory_space<vmem>>, vector<1x128x128xf32>
    %151 = vector.shape_cast %150 : vector<1x128x128xf32> to vector<128x128xf32>
    %cst_65 = arith.constant dense<0.000000e+00> : vector<16x128xf32>
    %152 = tpu.matmul %149, %151, %cst_65 {dimension_numbers = #tpu.dot_dimension_numbers<[1], [0], [0], [1], [0, 0, 1, 1], [], []>} : vector<16x128xf32>, vector<128x128xf32>, vector<16x128xf32> -> vector<16x128xf32>
    %c0_66 = arith.constant 0 : index
    %c0_67 = arith.constant 0 : index
    %c0_68 = arith.constant 0 : index
    %153 = vector.load %arg16[%c0_66, %c0_67, %c0_68] : memref<1x1x128xf32, #tpu.memory_space<vmem>>, vector<1x1x128xf32>
    %154 = vector.shape_cast %153 : vector<1x1x128xf32> to vector<1x128xf32>
    %155 = vector.broadcast %154 : vector<1x128xf32> to vector<16x128xf32>
    %156 = arith.addf %152, %155 : vector<16x128xf32>
    %157 = arith.addf %114, %156 : vector<16x128xf32>
    %c0_69 = arith.constant 0 : index
    %c0_70 = arith.constant 0 : index
    %158 = vector.load %arg23[%c0_69, %c0_70] : memref<16x128xf32, #tpu.memory_space<vmem>>, vector<16x128xf32>
    tpu.vector_store %arg23[%c0_69, %c0_70], %157 {strides = array<i32>} : memref<16x128xf32, #tpu.memory_space<vmem>>, vector<16x128xf32>,
    %c2_i32_71 = arith.constant 2 : i32
    %159 = arith.cmpi eq, %arg0, %c2_i32_71 : i32
    %160 = arith.extui %159 : i1 to i32
    %c0_i32_72 = arith.constant 0 : i32
    %161 = arith.cmpi ne, %160, %c0_i32_72 : i32
    scf.if %161 {
      %162 = vector.shape_cast %157 : vector<16x128xf32> to vector<2x8x128xf32>
      %cst_73 = arith.constant dense<0.000000e+00> : vector<2x128xf32>
      %163 = vector.multi_reduction <add>, %162, %cst_73 [1] : vector<2x8x128xf32> to vector<2x128xf32>
      %cst_74 = arith.constant 8.000000e+00 : f32
      %164 = vector.broadcast %cst_74 : f32 to vector<2x128xf32>
      %165 = arith.divf %163, %164 : vector<2x128xf32>
      %c0_75 = arith.constant 0 : index
      %c0_76 = arith.constant 0 : index
      %166 = vector.load %arg17[%c0_75, %c0_76] : memref<128x64xf32, #tpu.memory_space<vmem>>, vector<128x64xf32>
      %cst_77 = arith.constant dense<0.000000e+00> : vector<2x64xf32>
      %167 = tpu.matmul %165, %166, %cst_77 {dimension_numbers = #tpu.dot_dimension_numbers<[1], [0], [0], [1], [0, 0, 1, 1], [], []>} : vector<2x128xf32>, vector<128x64xf32>, vector<2x64xf32> -> vector<2x64xf32>
      %c0_78 = arith.constant 0 : index
      %c0_79 = arith.constant 0 : index
      %168 = vector.load %arg18[%c0_78, %c0_79] : memref<1x64xf32, #tpu.memory_space<vmem>>, vector<1x64xf32>
      %169 = vector.broadcast %168 : vector<1x64xf32> to vector<2x64xf32>
      %170 = arith.addf %167, %169 : vector<2x64xf32>
      %cst_80 = arith.constant 0.000000e+00 : f32
      %171 = vector.broadcast %cst_80 : f32 to vector<2x64xf32>
      %172 = arith.maximumf %170, %171 : vector<2x64xf32>
      %c0_81 = arith.constant 0 : index
      %c0_82 = arith.constant 0 : index
      %173 = vector.load %arg19[%c0_81, %c0_82] : memref<1x64xf32, #tpu.memory_space<vmem>>, vector<1x64xf32>
      %174 = vector.broadcast %173 : vector<1x64xf32> to vector<2x64xf32>
      %175 = arith.mulf %172, %174 : vector<2x64xf32>
      %cst_83 = arith.constant dense<0.000000e+00> : vector<2xf32>
      %176 = vector.multi_reduction <add>, %175, %cst_83 [1] : vector<2x64xf32> to vector<2xf32>
      %177 = vector.shape_cast %176 : vector<2xf32> to vector<2x1xf32>
      %c0_84 = arith.constant 0 : index
      %c0_85 = arith.constant 0 : index
      %178 = vector.load %arg20[%c0_84, %c0_85] : memref<1x1xf32, #tpu.memory_space<vmem>>, vector<1x1xf32>
      %179 = vector.broadcast %178 : vector<1x1xf32> to vector<2x1xf32>
      %180 = arith.addf %177, %179 : vector<2x1xf32>
      %c0_86 = arith.constant 0 : index
      %c0_87 = arith.constant 0 : index
      %181 = vector.load %arg21[%c0_86, %c0_87] : memref<2x1xf32, #tpu.memory_space<vmem>>, vector<2x1xf32>
      tpu.vector_store %arg21[%c0_86, %c0_87], %180 {strides = array<i32>} : memref<2x1xf32, #tpu.memory_space<vmem>>, vector<2x1xf32>,
    } else {
    }
    return
  }
  func.func @transform_0(%arg0: i32) -> (i32, i32) {
    %c0_i32 = arith.constant 0 : i32
    %c0_i32_0 = arith.constant 0 : i32
    %c0_i32_1 = arith.constant 0 : i32
    return %c0_i32, %c0_i32_0 : i32, i32
  }
  func.func @transform_1(%arg0: i32) -> (i32, i32) {
    %c0_i32 = arith.constant 0 : i32
    %c0_i32_0 = arith.constant 0 : i32
    %c0_i32_1 = arith.constant 0 : i32
    return %c0_i32, %c0_i32_0 : i32, i32
  }
  func.func @transform_2(%arg0: i32) -> (i32, i32) {
    %c0_i32 = arith.constant 0 : i32
    %c0_i32_0 = arith.constant 0 : i32
    %c0_i32_1 = arith.constant 0 : i32
    return %c0_i32, %c0_i32_0 : i32, i32
  }
  func.func @transform_3(%arg0: i32) -> (i32, i32) {
    %c0_i32 = arith.constant 0 : i32
    %c0_i32_0 = arith.constant 0 : i32
    %c0_i32_1 = arith.constant 0 : i32
    return %c0_i32, %c0_i32_0 : i32, i32
  }
  func.func @transform_4(%arg0: i32) -> (i32, i32, i32) {
    %c0_i32 = arith.constant 0 : i32
    %c0_i32_0 = arith.constant 0 : i32
    %c0_i32_1 = arith.constant 0 : i32
    return %arg0, %c0_i32, %c0_i32_0 : i32, i32, i32
  }
  func.func @transform_5(%arg0: i32) -> (i32, i32, i32) {
    %c0_i32 = arith.constant 0 : i32
    %c0_i32_0 = arith.constant 0 : i32
    %c0_i32_1 = arith.constant 0 : i32
    return %arg0, %c0_i32, %c0_i32_0 : i32, i32, i32
  }
  func.func @transform_6(%arg0: i32) -> (i32, i32, i32) {
    %c0_i32 = arith.constant 0 : i32
    %c0_i32_0 = arith.constant 0 : i32
    %c0_i32_1 = arith.constant 0 : i32
    return %arg0, %c0_i32, %c0_i32_0 : i32, i32, i32
  }
  func.func @transform_7(%arg0: i32) -> (i32, i32, i32) {
    %c0_i32 = arith.constant 0 : i32
    %c0_i32_0 = arith.constant 0 : i32
    %c0_i32_1 = arith.constant 0 : i32
    return %arg0, %c0_i32, %c0_i32_0 : i32, i32, i32
  }
  func.func @transform_8(%arg0: i32) -> (i32, i32, i32) {
    %c0_i32 = arith.constant 0 : i32
    %c0_i32_0 = arith.constant 0 : i32
    %c0_i32_1 = arith.constant 0 : i32
    return %arg0, %c0_i32, %c0_i32_0 : i32, i32, i32
  }
  func.func @transform_9(%arg0: i32) -> (i32, i32, i32) {
    %c0_i32 = arith.constant 0 : i32
    %c0_i32_0 = arith.constant 0 : i32
    %c0_i32_1 = arith.constant 0 : i32
    return %arg0, %c0_i32, %c0_i32_0 : i32, i32, i32
  }
  func.func @transform_10(%arg0: i32) -> (i32, i32, i32) {
    %c0_i32 = arith.constant 0 : i32
    %c0_i32_0 = arith.constant 0 : i32
    %c0_i32_1 = arith.constant 0 : i32
    return %arg0, %c0_i32, %c0_i32_0 : i32, i32, i32
  }
  func.func @transform_11(%arg0: i32) -> (i32, i32, i32) {
    %c0_i32 = arith.constant 0 : i32
    %c0_i32_0 = arith.constant 0 : i32
    %c0_i32_1 = arith.constant 0 : i32
    return %arg0, %c0_i32, %c0_i32_0 : i32, i32, i32
  }
  func.func @transform_12(%arg0: i32) -> (i32, i32, i32) {
    %c0_i32 = arith.constant 0 : i32
    %c0_i32_0 = arith.constant 0 : i32
    %c0_i32_1 = arith.constant 0 : i32
    return %arg0, %c0_i32, %c0_i32_0 : i32, i32, i32
  }
  func.func @transform_13(%arg0: i32) -> (i32, i32, i32) {
    %c0_i32 = arith.constant 0 : i32
    %c0_i32_0 = arith.constant 0 : i32
    %c0_i32_1 = arith.constant 0 : i32
    return %arg0, %c0_i32, %c0_i32_0 : i32, i32, i32
  }
  func.func @transform_14(%arg0: i32) -> (i32, i32, i32) {
    %c0_i32 = arith.constant 0 : i32
    %c0_i32_0 = arith.constant 0 : i32
    %c0_i32_1 = arith.constant 0 : i32
    return %arg0, %c0_i32, %c0_i32_0 : i32, i32, i32
  }
  func.func @transform_15(%arg0: i32) -> (i32, i32, i32) {
    %c0_i32 = arith.constant 0 : i32
    %c0_i32_0 = arith.constant 0 : i32
    %c0_i32_1 = arith.constant 0 : i32
    return %arg0, %c0_i32, %c0_i32_0 : i32, i32, i32
  }
  func.func @transform_16(%arg0: i32) -> (i32, i32) {
    %c0_i32 = arith.constant 0 : i32
    %c0_i32_0 = arith.constant 0 : i32
    %c0_i32_1 = arith.constant 0 : i32
    return %c0_i32, %c0_i32_0 : i32, i32
  }
  func.func @transform_17(%arg0: i32) -> (i32, i32) {
    %c0_i32 = arith.constant 0 : i32
    %c0_i32_0 = arith.constant 0 : i32
    %c0_i32_1 = arith.constant 0 : i32
    return %c0_i32, %c0_i32_0 : i32, i32
  }
  func.func @transform_18(%arg0: i32) -> (i32, i32) {
    %c0_i32 = arith.constant 0 : i32
    %c0_i32_0 = arith.constant 0 : i32
    %c0_i32_1 = arith.constant 0 : i32
    return %c0_i32, %c0_i32_0 : i32, i32
  }
  func.func @transform_19(%arg0: i32) -> (i32, i32) {
    %c0_i32 = arith.constant 0 : i32
    %c0_i32_0 = arith.constant 0 : i32
    %c0_i32_1 = arith.constant 0 : i32
    return %c0_i32, %c0_i32_0 : i32, i32
  }
  func.func @transform_20(%arg0: i32) -> (i32, i32) {
    %c0_i32 = arith.constant 0 : i32
    %c0_i32_0 = arith.constant 0 : i32
    %c0_i32_1 = arith.constant 0 : i32
    return %c0_i32, %c0_i32_0 : i32, i32
  }
  func.func @transform_21(%arg0: i32) -> (i32, i32, i32) {
    %c0_i32 = arith.constant 0 : i32
    %c0_i32_0 = arith.constant 0 : i32
    %c0_i32_1 = arith.constant 0 : i32
    %c0_i32_2 = arith.constant 0 : i32
    return %c0_i32, %c0_i32_0, %c0_i32_1 : i32, i32, i32
  }
}

</mosaic_0001>

<llo_original>
// kernel: eq.1
$region0: #{eq.1}
  %s0 = inlined_call_operand.hbm [shape: s32[2,8], index: 0, kind: input, shape index: {}]
  %s1 = inlined_call_operand.vmem [shape: s32[16], index: 1, kind: output, shape index: {}]
  $region1: #{eq.1} parent=0
    #allocation0 [shape = 'u8[1024]{0}', space=vmem, size = 0x400, scoped, tag = 'operand span for operand 0']
    #allocation1 [shape = 's32[1]{0}', space=sflag, size = 0x4, scoped, tag = 'scoped memory for eq.1']
    #allocation2 [shape = 'u8[4096]{0}', space=vmem, size = 0x1000, scoped, tag = 'scoped mem for output reshape']
    #allocation3 [shape = 'u8[4096]{0}', space=vmem, size = 0x1000, scoped, tag = 'scoped mem for input reshape']
    %2 = vsyncpa [#allocation1], 0
    %s4 = ssub.s32 32, 32
    %5 = vsyncadd [#allocation1], %s4
    %s7 = sshll.u32 [#allocation0], 4
    %s8 = int_to_ptr.vmem [resolvable:$true] %s7
    %10 = dma.hbm_to_vmem [thread:$0]  %s0, 32, %s8, [#allocation1]
    %11 = dma.done [#allocation1], 32
    %s13 = sshllo.u32 0, 2
    %v14 = vld [vmem:[#allocation0] sm:%s13]
    %15 = vst [vmem:[#allocation3] sm:%s13] %v14
    %v16 = vld [vmem:[#allocation3] sm:$0x1]
    %vm17 = vcmask 64512
    %18 = vst.msk [vmem:[#allocation2] sm:$0x1] %vm17, %v16
    %s19 = scalar_lea.vmem [#allocation3], 1
    %v20 = vld [vmem:[%s19] sm:$0x1]
    %21 = vrot.lane.b32.xlu0 %v20, 8
    %v22 = vpop.permute.xlu0 %21
    %vm23 = vcmask 130112
    %24 = vst.msk [vmem:[#allocation2] sm:$0x1] %vm23, %v22
    %s26 = sshllo.u32 0, 1
    %v28 = vld [vmem:[#allocation2] sm:%s26]
    %s29 = sshllo.u32 0, 1
    %30 = vst [vmem:[%s1] sm:%s29] %v28
    %31 = vsyncpa [#allocation1], 1

// kernel: model_forward.1
$region0: #{model_forward.1}
  #allocation0 [shape = 'u32[]', space=smem, size = 0x4, offset = 0x4, fixed_abs, tag = 'smem constant byte address 0x4 - core index']
  #allocation1 [shape = 'u32[144,128]{1,0:T(1,128)}', space=vmem, size = 0x12000, scoped, tag = 'internal scratch']
  #allocation2 [shape = 'f32[16,128]{1,0:T(8,128)}', space=vmem, size = 0x2000, scoped, tag = 'scratch operand']
  #allocation3 [shape = 'f32[1,1]{1,0:T(1,128)S(1)}', space=vmem, size = 0x200, scoped, tag = 'scoped memory for model_forward.1']
  %s0 = inlined_call_operand.vmem [shape: f32[16,8], index: 0, kind: input, shape index: {}]
  %s1 = inlined_call_operand.vmem [shape: f32[8,128], index: 1, kind: input, shape index: {}]
  %s2 = inlined_call_operand.vmem [shape: f32[16,128], index: 2, kind: input, shape index: {}]
  %s3 = inlined_call_operand.vmem [shape: f32[16,16], index: 3, kind: input, shape index: {}]
  %s4 = inlined_call_operand.vmem [shape: f32[3,1,128], index: 4, kind: input, shape index: {}]
  %s5 = inlined_call_operand.vmem [shape: f32[3,1,128], index: 5, kind: input, shape index: {}]
  %s6 = inlined_call_operand.hbm [shape: f32[3,128,384], index: 6, kind: input, shape index: {}]
  %s7 = inlined_call_operand.vmem [shape: f32[3,1,384], index: 7, kind: input, shape index: {}]
  %s8 = inlined_call_operand.hbm [shape: f32[3,128,128], index: 8, kind: input, shape index: {}]
  %s9 = inlined_call_operand.vmem [shape: f32[3,1,128], index: 9, kind: input, shape index: {}]
  %s10 = inlined_call_operand.vmem [shape: f32[3,1,128], index: 10, kind: input, shape index: {}]
  %s11 = inlined_call_operand.vmem [shape: f32[3,1,128], index: 11, kind: input, shape index: {}]
  %s12 = inlined_call_operand.hbm [shape: f32[3,128,128], index: 12, kind: input, shape index: {}]
  %s13 = inlined_call_operand.vmem [shape: f32[3,1,128], index: 13, kind: input, shape index: {}]
  %s14 = inlined_call_operand.hbm [shape: f32[3,128,128], index: 14, kind: input, shape index: {}]
  %s15 = inlined_call_operand.vmem [shape: f32[3,1,128], index: 15, kind: input, shape index: {}]
  %s16 = inlined_call_operand.vmem [shape: f32[128,64], index: 16, kind: input, shape index: {}]
  %s17 = inlined_call_operand.vmem [shape: f32[1,64], index: 17, kind: input, shape index: {}]
  %s18 = inlined_call_operand.vmem [shape: f32[1,64], index: 18, kind: input, shape index: {}]
  %s19 = inlined_call_operand.<no memory space> [shape: f32[1,1], index: 19, kind: input, shape index: {}]
  %s20 = inlined_call_operand.vmem [shape: f32[2,1], index: 20, kind: output, shape index: {0}]
  %s21 = inlined_call_operand.vmem [shape: f32[4,16,16], index: 21, kind: output, shape index: {1}]
  %22 = xla_tuple %s20, %s21
  %s23 = sld [smem:[#allocation0]]
  $region149: #{model_forward.1} parent=0
    _
  %s25 = ssub.s32 1, %s23
  %s26 = scalar_select 0, %s25, %s23
  %v27 = vstv %s19
  %28 = vst [vmem:[#allocation3] sm:$0x1] %v27
  $region1: #{model_forward.1} parent=0
    #allocation4 [shape = 'u8[393216]{0}', space=vmem, size = 0x60000, scoped, tag = 'input window, operand 6']
    #allocation5 [shape = 's32[2]{0}', space=sflag, size = 0x8, scoped, tag = 'scoped memory for model_forward.1']
    #allocation6 [shape = 'u8[131072]{0}', space=vmem, size = 0x20000, scoped, tag = 'input window, operand 8']
    #allocation7 [shape = 's32[2]{0}', space=sflag, size = 0x8, scoped, tag = 'scoped memory for model_forward.1']
    #allocation8 [shape = 'u8[131072]{0}', space=vmem, size = 0x20000, scoped, tag = 'input window, operand 12']
    #allocation9 [shape = 'u8[131072]{0}', space=vmem, size = 0x20000, scoped, tag = 'input window, operand 14']
    #allocation10 [shape = 's32[2]{0}', space=sflag, size = 0x8, scoped, tag = 'scoped memory for model_forward.1']
    %29 = vsyncpa [#allocation5], 0
    %s30 = scalar_lea.sflag [#allocation5], 1
    %31 = vsyncpa %s30, 0
    %32 = vsyncpa [#allocation7], 0
    %s33 = scalar_lea.sflag [#allocation7], 1
    %34 = vsyncpa %s33, 0
    %35 = vsyncpa [#allocation10], 0
    %s36 = scalar_lea.sflag [#allocation10], 1
    %37 = vsyncpa %s36, 0
    loop: start=0, step=1, limit=5
    $region2: #{model_forward.1} parent=1 // loop_pre_header
      _
    $region3: #{model_forward.1} parent=1 // loop_header
      %s39 = sphi 0, %s43
      %p40 = scmp.ge.s32.totalorder %s39, 5
      %s47 = sphi 0, %s47
      %s49 = sphi 0, %s47
      %s50 = sphi 0, %s49
      %s64 = sphi 0, %s50
      %s68 = sphi 0, %s68
      %s70 = sphi 0, %s68
      %s71 = sphi 0, %s70
      %s85 = sphi 0, %s71
      %s89 = sphi 0, %s89
      %s91 = sphi 0, %s89
      %s92 = sphi 0, %s91
      %s106 = sphi 0, %s92
      %s110 = sphi 0, %s110
      %s112 = sphi 0, %s110
      %s113 = sphi 0, %s112
      %s127 = sphi 0, %s113
      %s133 = sphi 0, %s135
      %s136 = sphi 0, %s133
      %s137 = sphi 0, %s136
      %s153 = sphi 0, %s137
      %s159 = sphi 0, %s161
      %s162 = sphi 0, %s159
      %s163 = sphi 0, %s162
      %s179 = sphi 0, %s163
      %s185 = sphi 0, %s187
      %s188 = sphi 0, %s185
      %s189 = sphi 0, %s188
      %s205 = sphi 0, %s189
      %s211 = sphi 0, %s213
      %s214 = sphi 0, %s211
      %s215 = sphi 0, %s214
      %s231 = sphi 0, %s215
      %s237 = sphi 0, %s239
      %s240 = sphi 0, %s237
      %s241 = sphi 0, %s240
      %s257 = sphi 0, %s241
      %s263 = sphi 0, %s265
      %s266 = sphi 0, %s263
      %s267 = sphi 0, %s266
      %s283 = sphi 0, %s267
      %s289 = sphi 0, %s291
      %s292 = sphi 0, %s289
      %s293 = sphi 0, %s292
      %s309 = sphi 0, %s293
      %s315 = sphi 0, %s317
      %s318 = sphi 0, %s315
      %s319 = sphi 0, %s318
      %s335 = sphi 0, %s319
      %s341 = sphi 0, %s343
      %s344 = sphi 0, %s341
      %s345 = sphi 0, %s344
      %s361 = sphi 0, %s345
      %s367 = sphi 0, %s369
      %s370 = sphi 0, %s367
      %s371 = sphi 0, %s370
      %s387 = sphi 0, %s371
      %s393 = sphi 0, %s395
      %s396 = sphi 0, %s393
      %s397 = sphi 0, %s396
      %s413 = sphi 0, %s397
      %s419 = sphi 0, %s421
      %s422 = sphi 0, %s419
      %s423 = sphi 0, %s422
      %s439 = sphi 0, %s423
      %s443 = sphi 0, %s443
      %s445 = sphi 0, %s443
      %s446 = sphi 0, %s445
      %s460 = sphi 0, %s446
      %s464 = sphi 0, %s464
      %s466 = sphi 0, %s464
      %s467 = sphi 0, %s466
      %s481 = sphi 0, %s467
      %s485 = sphi 0, %s485
      %s487 = sphi 0, %s485
      %s488 = sphi 0, %s487
      %s502 = sphi 0, %s488
      %s506 = sphi 0, %s506
      %s508 = sphi 0, %s506
      %s509 = sphi 0, %s508
      %s523 = sphi 0, %s509
      %s527 = sphi 0, %s527
      %s529 = sphi 0, %s527
      %s530 = sphi 0, %s529
      %s544 = sphi 0, %s530
      %s548 = sphi 0, %s548
      %s550 = sphi 0, %s548
      %s551 = sphi 0, %s550
      %s565 = sphi 0, %s551
    $region4: #{model_forward.1} parent=1 // loop_header_branch
      %42 = sbr.rel (%p40) target = $region8
    $region5: #{model_forward.1} parent=1 // loop_body
      %s44 = ssub.s32 %s39, 1
      %s45 = ssub.s32 %s39, 2
      %s46 = sadd.s32 %s39, 1
      %s48 = sadd.s32 %s47, 1
      %p51 = scmp.eq.s32.totalorder %s39, 2
      %p52 = scmp.ne.s32.totalorder %s47, %s49
      %p53 = scmp.eq.s32.totalorder %s39, 0
      %p54 = por %p52, %p53
      %p55 = scmp.ne.s32.totalorder %s47, %s49
      %p56 = scmp.eq.s32.totalorder %s44, 2
      %p57 = por %p55, %p56
      %p58 = scmp.ne.s32.totalorder %s49, %s50
      %p59 = scmp.eq.s32.totalorder %s44, 0
      %p60 = por %p58, %p59
      %p61 = scmp.ne.s32.totalorder %s49, %s50
      %p62 = scmp.eq.s32.totalorder %s45, 2
      %p63 = por %p61, %p62
      %p65 = scmp.ne.s32.totalorder %s50, %s64
      %p66 = scmp.eq.s32.totalorder %s45, 0
      %p67 = por %p65, %p66
      %s69 = sadd.s32 %s68, 1
      %p72 = scmp.eq.s32.totalorder %s39, 2
      %p73 = scmp.ne.s32.totalorder %s68, %s70
      %p74 = scmp.eq.s32.totalorder %s39, 0
      %p75 = por %p73, %p74
      %p76 = scmp.ne.s32.totalorder %s68, %s70
      %p77 = scmp.eq.s32.totalorder %s44, 2
      %p78 = por %p76, %p77
      %p79 = scmp.ne.s32.totalorder %s70, %s71
      %p80 = scmp.eq.s32.totalorder %s44, 0
      %p81 = por %p79, %p80
      %p82 = scmp.ne.s32.totalorder %s70, %s71
      %p83 = scmp.eq.s32.totalorder %s45, 2
      %p84 = por %p82, %p83
      %p86 = scmp.ne.s32.totalorder %s71, %s85
      %p87 = scmp.eq.s32.totalorder %s45, 0
      %p88 = por %p86, %p87
      %s90 = sadd.s32 %s89, 1
      %p93 = scmp.eq.s32.totalorder %s39, 2
      %p94 = scmp.ne.s32.totalorder %s89, %s91
      %p95 = scmp.eq.s32.totalorder %s39, 0
      %p96 = por %p94, %p95
      %p97 = scmp.ne.s32.totalorder %s89, %s91
      %p98 = scmp.eq.s32.totalorder %s44, 2
      %p99 = por %p97, %p98
      %p100 = scmp.ne.s32.totalorder %s91, %s92
      %p101 = scmp.eq.s32.totalorder %s44, 0
      %p102 = por %p100, %p101
      %p103 = scmp.ne.s32.totalorder %s91, %s92
      %p104 = scmp.eq.s32.totalorder %s45, 2
      %p105 = por %p103, %p104
      %p107 = scmp.ne.s32.totalorder %s92, %s106
      %p108 = scmp.eq.s32.totalorder %s45, 0
      %p109 = por %p107, %p108
      %s111 = sadd.s32 %s110, 1
      %p114 = scmp.eq.s32.totalorder %s39, 2
      %p115 = scmp.ne.s32.totalorder %s110, %s112
      %p116 = scmp.eq.s32.totalorder %s39, 0
      %p117 = por %p115, %p116
      %p118 = scmp.ne.s32.totalorder %s110, %s112
      %p119 = scmp.eq.s32.totalorder %s44, 2
      %p120 = por %p118, %p119
      %p121 = scmp.ne.s32.totalorder %s112, %s113
      %p122 = scmp.eq.s32.totalorder %s44, 0
      %p123 = por %p121, %p122
      %p124 = scmp.ne.s32.totalorder %s112, %s113
      %p125 = scmp.eq.s32.totalorder %s45, 2
      %p126 = por %p124, %p125
      %p128 = scmp.ne.s32.totalorder %s113, %s127
      %p129 = scmp.eq.s32.totalorder %s45, 0
      %p130 = por %p128, %p129
      %s131 = ssub.s32 %s39, %s46
      %p132 = scmp.eq.s32.totalorder %s131, 0
      %s134 = sadd.s32 %s133, 1
      %s135 = scalar_select %p132, %s133, %s134
      %p138 = pneg %p132
      %p139 = scmp.eq.s32.totalorder %s39, 2
      %p140 = por %p138, %p139
      %p141 = scmp.ne.s32.totalorder %s133, %s136
      %p142 = scmp.eq.s32.totalorder %s39, 0
      %p143 = por %p141, %p142
      %p144 = scmp.ne.s32.totalorder %s133, %s136
      %p145 = scmp.eq.s32.totalorder %s44, 2
      %p146 = por %p144, %p145
      %p147 = scmp.ne.s32.totalorder %s136, %s137
      %p148 = scmp.eq.s32.totalorder %s44, 0
      %p149 = por %p147, %p148
      %p150 = scmp.ne.s32.totalorder %s136, %s137
      %p151 = scmp.eq.s32.totalorder %s45, 2
      %p152 = por %p150, %p151
      %p154 = scmp.ne.s32.totalorder %s137, %s153
      %p155 = scmp.eq.s32.totalorder %s45, 0
      %p156 = por %p154, %p155
      %s157 = ssub.s32 %s39, %s46
      %p158 = scmp.eq.s32.totalorder %s157, 0
      %s160 = sadd.s32 %s159, 1
      %s161 = scalar_select %p158, %s159, %s160
      %p164 = pneg %p158
      %p165 = scmp.eq.s32.totalorder %s39, 2
      %p166 = por %p164, %p165
      %p167 = scmp.ne.s32.totalorder %s159, %s162
      %p168 = scmp.eq.s32.totalorder %s39, 0
      %p169 = por %p167, %p168
      %p170 = scmp.ne.s32.totalorder %s159, %s162
      %p171 = scmp.eq.s32.totalorder %s44, 2
      %p172 = por %p170, %p171
      %p173 = scmp.ne.s32.totalorder %s162, %s163
      %p174 = scmp.eq.s32.totalorder %s44, 0
      %p175 = por %p173, %p174
      %p176 = scmp.ne.s32.totalorder %s162, %s163
      %p177 = scmp.eq.s32.totalorder %s45, 2
      %p178 = por %p176, %p177
      %p180 = scmp.ne.s32.totalorder %s163, %s179
      %p181 = scmp.eq.s32.totalorder %s45, 0
      %p182 = por %p180, %p181
      %s183 = ssub.s32 %s39, %s46
      %p184 = scmp.eq.s32.totalorder %s183, 0
      %s186 = sadd.s32 %s185, 1
      %s187 = scalar_select %p184, %s185, %s186
      %p190 = pneg %p184
      %p191 = scmp.eq.s32.totalorder %s39, 2
      %p192 = por %p190, %p191
      %p193 = scmp.ne.s32.totalorder %s185, %s188
      %p194 = scmp.eq.s32.totalorder %s39, 0
      %p195 = por %p193, %p194
      %p196 = scmp.ne.s32.totalorder %s185, %s188
      %p197 = scmp.eq.s32.totalorder %s44, 2
      %p198 = por %p196, %p197
      %p199 = scmp.ne.s32.totalorder %s188, %s189
      %p200 = scmp.eq.s32.totalorder %s44, 0
      %p201 = por %p199, %p200
      %p202 = scmp.ne.s32.totalorder %s188, %s189
      %p203 = scmp.eq.s32.totalorder %s45, 2
      %p204 = por %p202, %p203
      %p206 = scmp.ne.s32.totalorder %s189, %s205
      %p207 = scmp.eq.s32.totalorder %s45, 0
      %p208 = por %p206, %p207
      %s209 = ssub.s32 %s39, %s46
      %p210 = scmp.eq.s32.totalorder %s209, 0
      %s212 = sadd.s32 %s211, 1
      %s213 = scalar_select %p210, %s211, %s212
      %p216 = pneg %p210
      %p217 = scmp.eq.s32.totalorder %s39, 2
      %p218 = por %p216, %p217
      %p219 = scmp.ne.s32.totalorder %s211, %s214
      %p220 = scmp.eq.s32.totalorder %s39, 0
      %p221 = por %p219, %p220
      %p222 = scmp.ne.s32.totalorder %s211, %s214
      %p223 = scmp.eq.s32.totalorder %s44, 2
      %p224 = por %p222, %p223
      %p225 = scmp.ne.s32.totalorder %s214, %s215
      %p226 = scmp.eq.s32.totalorder %s44, 0
      %p227 = por %p225, %p226
      %p228 = scmp.ne.s32.totalorder %s214, %s215
      %p229 = scmp.eq.s32.totalorder %s45, 2
      %p230 = por %p228, %p229
      %p232 = scmp.ne.s32.totalorder %s215, %s231
      %p233 = scmp.eq.s32.totalorder %s45, 0
      %p234 = por %p232, %p233
      %s235 = ssub.s32 %s39, %s46
      %p236 = scmp.eq.s32.totalorder %s235, 0
      %s238 = sadd.s32 %s237, 1
      %s239 = scalar_select %p236, %s237, %s238
      %p242 = pneg %p236
      %p243 = scmp.eq.s32.totalorder %s39, 2
      %p244 = por %p242, %p243
      %p245 = scmp.ne.s32.totalorder %s237, %s240
      %p246 = scmp.eq.s32.totalorder %s39, 0
      %p247 = por %p245, %p246
      %p248 = scmp.ne.s32.totalorder %s237, %s240
      %p249 = scmp.eq.s32.totalorder %s44, 2
      %p250 = por %p248, %p249
      %p251 = scmp.ne.s32.totalorder %s240, %s241
      %p252 = scmp.eq.s32.totalorder %s44, 0
      %p253 = por %p251, %p252
      %p254 = scmp.ne.s32.totalorder %s240, %s241
      %p255 = scmp.eq.s32.totalorder %s45, 2
      %p256 = por %p254, %p255
      %p258 = scmp.ne.s32.totalorder %s241, %s257
      %p259 = scmp.eq.s32.totalorder %s45, 0
      %p260 = por %p258, %p259
      %s261 = ssub.s32 %s39, %s46
      %p262 = scmp.eq.s32.totalorder %s261, 0
      %s264 = sadd.s32 %s263, 1
      %s265 = scalar_select %p262, %s263, %s264
      %p268 = pneg %p262
      %p269 = scmp.eq.s32.totalorder %s39, 2
      %p270 = por %p268, %p269
      %p271 = scmp.ne.s32.totalorder %s263, %s266
      %p272 = scmp.eq.s32.totalorder %s39, 0
      %p273 = por %p271, %p272
      %p274 = scmp.ne.s32.totalorder %s263, %s266
      %p275 = scmp.eq.s32.totalorder %s44, 2
      %p276 = por %p274, %p275
      %p277 = scmp.ne.s32.totalorder %s266, %s267
      %p278 = scmp.eq.s32.totalorder %s44, 0
      %p279 = por %p277, %p278
      %p280 = scmp.ne.s32.totalorder %s266, %s267
      %p281 = scmp.eq.s32.totalorder %s45, 2
      %p282 = por %p280, %p281
      %p284 = scmp.ne.s32.totalorder %s267, %s283
      %p285 = scmp.eq.s32.totalorder %s45, 0
      %p286 = por %p284, %p285
      %s287 = ssub.s32 %s39, %s46
      %p288 = scmp.eq.s32.totalorder %s287, 0
      %s290 = sadd.s32 %s289, 1
      %s291 = scalar_select %p288, %s289, %s290
      %p294 = pneg %p288
      %p295 = scmp.eq.s32.totalorder %s39, 2
      %p296 = por %p294, %p295
      %p297 = scmp.ne.s32.totalorder %s289, %s292
      %p298 = scmp.eq.s32.totalorder %s39, 0
      %p299 = por %p297, %p298
      %p300 = scmp.ne.s32.totalorder %s289, %s292
      %p301 = scmp.eq.s32.totalorder %s44, 2
      %p302 = por %p300, %p301
      %p303 = scmp.ne.s32.totalorder %s292, %s293
      %p304 = scmp.eq.s32.totalorder %s44, 0
      %p305 = por %p303, %p304
      %p306 = scmp.ne.s32.totalorder %s292, %s293
      %p307 = scmp.eq.s32.totalorder %s45, 2
      %p308 = por %p306, %p307
      %p310 = scmp.ne.s32.totalorder %s293, %s309
      %p311 = scmp.eq.s32.totalorder %s45, 0
      %p312 = por %p310, %p311
      %s313 = ssub.s32 %s39, %s46
      %p314 = scmp.eq.s32.totalorder %s313, 0
      %s316 = sadd.s32 %s315, 1
      %s317 = scalar_select %p314, %s315, %s316
      %p320 = pneg %p314
      %p321 = scmp.eq.s32.totalorder %s39, 2
      %p322 = por %p320, %p321
      %p323 = scmp.ne.s32.totalorder %s315, %s318
      %p324 = scmp.eq.s32.totalorder %s39, 0
      %p325 = por %p323, %p324
      %p326 = scmp.ne.s32.totalorder %s315, %s318
      %p327 = scmp.eq.s32.totalorder %s44, 2
      %p328 = por %p326, %p327
      %p329 = scmp.ne.s32.totalorder %s318, %s319
      %p330 = scmp.eq.s32.totalorder %s44, 0
      %p331 = por %p329, %p330
      %p332 = scmp.ne.s32.totalorder %s318, %s319
      %p333 = scmp.eq.s32.totalorder %s45, 2
      %p334 = por %p332, %p333
      %p336 = scmp.ne.s32.totalorder %s319, %s335
      %p337 = scmp.eq.s32.totalorder %s45, 0
      %p338 = por %p336, %p337
      %s339 = ssub.s32 %s39, %s46
      %p340 = scmp.eq.s32.totalorder %s339, 0
      %s342 = sadd.s32 %s341, 1
      %s343 = scalar_select %p340, %s341, %s342
      %p346 = pneg %p340
      %p347 = scmp.eq.s32.totalorder %s39, 2
      %p348 = por %p346, %p347
      %p349 = scmp.ne.s32.totalorder %s341, %s344
      %p350 = scmp.eq.s32.totalorder %s39, 0
      %p351 = por %p349, %p350
      %p352 = scmp.ne.s32.totalorder %s341, %s344
      %p353 = scmp.eq.s32.totalorder %s44, 2
      %p354 = por %p352, %p353
      %p355 = scmp.ne.s32.totalorder %s344, %s345
      %p356 = scmp.eq.s32.totalorder %s44, 0
      %p357 = por %p355, %p356
      %p358 = scmp.ne.s32.totalorder %s344, %s345
      %p359 = scmp.eq.s32.totalorder %s45, 2
      %p360 = por %p358, %p359
      %p362 = scmp.ne.s32.totalorder %s345, %s361
      %p363 = scmp.eq.s32.totalorder %s45, 0
      %p364 = por %p362, %p363
      %s365 = ssub.s32 %s39, %s46
      %p366 = scmp.eq.s32.totalorder %s365, 0
      %s368 = sadd.s32 %s367, 1
      %s369 = scalar_select %p366, %s367, %s368
      %p372 = pneg %p366
      %p373 = scmp.eq.s32.totalorder %s39, 2
      %p374 = por %p372, %p373
      %p375 = scmp.ne.s32.totalorder %s367, %s370
      %p376 = scmp.eq.s32.totalorder %s39, 0
      %p377 = por %p375, %p376
      %p378 = scmp.ne.s32.totalorder %s367, %s370
      %p379 = scmp.eq.s32.totalorder %s44, 2
      %p380 = por %p378, %p379
      %p381 = scmp.ne.s32.totalorder %s370, %s371
      %p382 = scmp.eq.s32.totalorder %s44, 0
      %p383 = por %p381, %p382
      %p384 = scmp.ne.s32.totalorder %s370, %s371
      %p385 = scmp.eq.s32.totalorder %s45, 2
      %p386 = por %p384, %p385
      %p388 = scmp.ne.s32.totalorder %s371, %s387
      %p389 = scmp.eq.s32.totalorder %s45, 0
      %p390 = por %p388, %p389
      %s391 = ssub.s32 %s39, %s46
      %p392 = scmp.eq.s32.totalorder %s391, 0
      %s394 = sadd.s32 %s393, 1
      %s395 = scalar_select %p392, %s393, %s394
      %p398 = pneg %p392
      %p399 = scmp.eq.s32.totalorder %s39, 2
      %p400 = por %p398, %p399
      %p401 = scmp.ne.s32.totalorder %s393, %s396
      %p402 = scmp.eq.s32.totalorder %s39, 0
      %p403 = por %p401, %p402
      %p404 = scmp.ne.s32.totalorder %s393, %s396
      %p405 = scmp.eq.s32.totalorder %s44, 2
      %p406 = por %p404, %p405
      %p407 = scmp.ne.s32.totalorder %s396, %s397
      %p408 = scmp.eq.s32.totalorder %s44, 0
      %p409 = por %p407, %p408
      %p410 = scmp.ne.s32.totalorder %s396, %s397
      %p411 = scmp.eq.s32.totalorder %s45, 2
      %p412 = por %p410, %p411
      %p414 = scmp.ne.s32.totalorder %s397, %s413
      %p415 = scmp.eq.s32.totalorder %s45, 0
      %p416 = por %p414, %p415
      %s417 = ssub.s32 %s39, %s46
      %p418 = scmp.eq.s32.totalorder %s417, 0
      %s420 = sadd.s32 %s419, 1
      %s421 = scalar_select %p418, %s419, %s420
      %p424 = pneg %p418
      %p425 = scmp.eq.s32.totalorder %s39, 2
      %p426 = por %p424, %p425
      %p427 = scmp.ne.s32.totalorder %s419, %s422
      %p428 = scmp.eq.s32.totalorder %s39, 0
      %p429 = por %p427, %p428
      %p430 = scmp.ne.s32.totalorder %s419, %s422
      %p431 = scmp.eq.s32.totalorder %s44, 2
      %p432 = por %p430, %p431
      %p433 = scmp.ne.s32.totalorder %s422, %s423
      %p434 = scmp.eq.s32.totalorder %s44, 0
      %p435 = por %p433, %p434
      %p436 = scmp.ne.s32.totalorder %s422, %s423
      %p437 = scmp.eq.s32.totalorder %s45, 2
      %p438 = por %p436, %p437
      %p440 = scmp.ne.s32.totalorder %s423, %s439
      %p441 = scmp.eq.s32.totalorder %s45, 0
      %p442 = por %p440, %p441
      %s444 = sadd.s32 %s443, 1
      %p447 = scmp.eq.s32.totalorder %s39, 2
      %p448 = scmp.ne.s32.totalorder %s443, %s445
      %p449 = scmp.eq.s32.totalorder %s39, 0
      %p450 = por %p448, %p449
      %p451 = scmp.ne.s32.totalorder %s443, %s445
      %p452 = scmp.eq.s32.totalorder %s44, 2
      %p453 = por %p451, %p452
      %p454 = scmp.ne.s32.totalorder %s445, %s446
      %p455 = scmp.eq.s32.totalorder %s44, 0
      %p456 = por %p454, %p455
      %p457 = scmp.ne.s32.totalorder %s445, %s446
      %p458 = scmp.eq.s32.totalorder %s45, 2
      %p459 = por %p457, %p458
      %p461 = scmp.ne.s32.totalorder %s446, %s460
      %p462 = scmp.eq.s32.totalorder %s45, 0
      %p463 = por %p461, %p462
      %s465 = sadd.s32 %s464, 1
      %p468 = scmp.eq.s32.totalorder %s39, 2
      %p469 = scmp.ne.s32.totalorder %s464, %s466
      %p470 = scmp.eq.s32.totalorder %s39, 0
      %p471 = por %p469, %p470
      %p472 = scmp.ne.s32.totalorder %s464, %s466
      %p473 = scmp.eq.s32.totalorder %s44, 2
      %p474 = por %p472, %p473
      %p475 = scmp.ne.s32.totalorder %s466, %s467
      %p476 = scmp.eq.s32.totalorder %s44, 0
      %p477 = por %p475, %p476
      %p478 = scmp.ne.s32.totalorder %s466, %s467
      %p479 = scmp.eq.s32.totalorder %s45, 2
      %p480 = por %p478, %p479
      %p482 = scmp.ne.s32.totalorder %s467, %s481
      %p483 = scmp.eq.s32.totalorder %s45, 0
      %p484 = por %p482, %p483
      %s486 = sadd.s32 %s485, 1
      %p489 = scmp.eq.s32.totalorder %s39, 2
      %p490 = scmp.ne.s32.totalorder %s485, %s487
      %p491 = scmp.eq.s32.totalorder %s39, 0
      %p492 = por %p490, %p491
      %p493 = scmp.ne.s32.totalorder %s485, %s487
      %p494 = scmp.eq.s32.totalorder %s44, 2
      %p495 = por %p493, %p494
      %p496 = scmp.ne.s32.totalorder %s487, %s488
      %p497 = scmp.eq.s32.totalorder %s44, 0
      %p498 = por %p496, %p497
      %p499 = scmp.ne.s32.totalorder %s487, %s488
      %p500 = scmp.eq.s32.totalorder %s45, 2
      %p501 = por %p499, %p500
      %p503 = scmp.ne.s32.totalorder %s488, %s502
      %p504 = scmp.eq.s32.totalorder %s45, 0
      %p505 = por %p503, %p504
      %s507 = sadd.s32 %s506, 1
      %p510 = scmp.eq.s32.totalorder %s39, 2
      %p511 = scmp.ne.s32.totalorder %s506, %s508
      %p512 = scmp.eq.s32.totalorder %s39, 0
      %p513 = por %p511, %p512
      %p514 = scmp.ne.s32.totalorder %s506, %s508
      %p515 = scmp.eq.s32.totalorder %s44, 2
      %p516 = por %p514, %p515
      %p517 = scmp.ne.s32.totalorder %s508, %s509
      %p518 = scmp.eq.s32.totalorder %s44, 0
      %p519 = por %p517, %p518
      %p520 = scmp.ne.s32.totalorder %s508, %s509
      %p521 = scmp.eq.s32.totalorder %s45, 2
      %p522 = por %p520, %p521
      %p524 = scmp.ne.s32.totalorder %s509, %s523
      %p525 = scmp.eq.s32.totalorder %s45, 0
      %p526 = por %p524, %p525
      %s528 = sadd.s32 %s527, 1
      %p531 = scmp.eq.s32.totalorder %s39, 2
      %p532 = scmp.ne.s32.totalorder %s527, %s529
      %p533 = scmp.eq.s32.totalorder %s39, 0
      %p534 = por %p532, %p533
      %p535 = scmp.ne.s32.totalorder %s527, %s529
      %p536 = scmp.eq.s32.totalorder %s44, 2
      %p537 = por %p535, %p536
      %p538 = scmp.ne.s32.totalorder %s529, %s530
      %p539 = scmp.eq.s32.totalorder %s44, 0
      %p540 = por %p538, %p539
      %p541 = scmp.ne.s32.totalorder %s529, %s530
      %p542 = scmp.eq.s32.totalorder %s45, 2
      %p543 = por %p541, %p542
      %p545 = scmp.ne.s32.totalorder %s530, %s544
      %p546 = scmp.eq.s32.totalorder %s45, 0
      %p547 = por %p545, %p546
      %s549 = sadd.s32 %s548, 1
      %p552 = scmp.eq.s32.totalorder %s39, 2
      %p553 = scmp.ne.s32.totalorder %s548, %s550
      %p554 = scmp.eq.s32.totalorder %s39, 0
      %p555 = por %p553, %p554
      %p556 = scmp.ne.s32.totalorder %s548, %s550
      %p557 = scmp.eq.s32.totalorder %s44, 2
      %p558 = por %p556, %p557
      %p559 = scmp.ne.s32.totalorder %s550, %s551
      %p560 = scmp.eq.s32.totalorder %s44, 0
      %p561 = por %p559, %p560
      %p562 = scmp.ne.s32.totalorder %s550, %s551
      %p563 = scmp.eq.s32.totalorder %s45, 2
      %p564 = por %p562, %p563
      %p566 = scmp.ne.s32.totalorder %s551, %s565
      %p567 = scmp.eq.s32.totalorder %s45, 0
      %p568 = por %p566, %p567
      %p569 = scmp.le.s32.totalorder 1, %s39
      %p570 = scmp.lt.s32.totalorder %s39, 4
      %p571 = pnand %p569, %p570
      %p572 = pneg %p571
      // Predicated region
      $region9: #{model_forward.1} parent=5 // pred_check
        _
      $region10: #{model_forward.1} parent=5 // pred_check_branch
        %574 = sbr.rel (%p571) target = $region12
      $region11: #{model_forward.1} parent=5 // pred_region
        %s575 = ssub.s32 %s39, 1
        // Predicated region
        $region13: #{model_forward.1} parent=11 // pred_check
          %p576 = pneg %p60
        $region14: #{model_forward.1} parent=11 // pred_check_branch
          %578 = sbr.rel (%p576) target = $region16
        $region15: #{model_forward.1} parent=11 // pred_region
          _
        $region16: #{model_forward.1} parent=11 // pred_fallthru
          _
        // Predicated region
        $region17: #{model_forward.1} parent=11 // pred_check
          %p579 = pneg %p81
        $region18: #{model_forward.1} parent=11 // pred_check_branch
          %581 = sbr.rel (%p579) target = $region20
        $region19: #{model_forward.1} parent=11 // pred_region
          _
        $region20: #{model_forward.1} parent=11 // pred_fallthru
          _
        // Predicated region
        $region21: #{model_forward.1} parent=11 // pred_check
          %p582 = pneg %p102
        $region22: #{model_forward.1} parent=11 // pred_check_branch
          %584 = sbr.rel (%p582) target = $region24
        $region23: #{model_forward.1} parent=11 // pred_region
          _
        $region24: #{model_forward.1} parent=11 // pred_fallthru
          _
        // Predicated region
        $region25: #{model_forward.1} parent=11 // pred_check
          %p585 = pneg %p123
        $region26: #{model_forward.1} parent=11 // pred_check_branch
          %587 = sbr.rel (%p585) target = $region28
        $region27: #{model_forward.1} parent=11 // pred_region
          _
        $region28: #{model_forward.1} parent=11 // pred_fallthru
          _
        // Predicated region
        $region29: #{model_forward.1} parent=11 // pred_check
          %p588 = pneg %p456
        $region30: #{model_forward.1} parent=11 // pred_check_branch
          %590 = sbr.rel (%p588) target = $region32
        $region31: #{model_forward.1} parent=11 // pred_region
          _
        $region32: #{model_forward.1} parent=11 // pred_fallthru
          _
        // Predicated region
        $region33: #{model_forward.1} parent=11 // pred_check
          %p591 = pneg %p477
        $region34: #{model_forward.1} parent=11 // pred_check_branch
          %593 = sbr.rel (%p591) target = $region36
        $region35: #{model_forward.1} parent=11 // pred_region
          _
        $region36: #{model_forward.1} parent=11 // pred_fallthru
          _
        // Predicated region
        $region37: #{model_forward.1} parent=11 // pred_check
          %p594 = pneg %p498
        $region38: #{model_forward.1} parent=11 // pred_check_branch
          %596 = sbr.rel (%p594) target = $region40
        $region39: #{model_forward.1} parent=11 // pred_region
          _
        $region40: #{model_forward.1} parent=11 // pred_fallthru
          _
        // Predicated region
        $region41: #{model_forward.1} parent=11 // pred_check
          %p597 = pneg %p519
        $region42: #{model_forward.1} parent=11 // pred_check_branch
          %599 = sbr.rel (%p597) target = $region44
        $region43: #{model_forward.1} parent=11 // pred_region
          _
        $region44: #{model_forward.1} parent=11 // pred_fallthru
          _
      $region12: #{model_forward.1} parent=5 // pred_fallthru
        _
      %p600 = scmp.lt.s32.totalorder %s39, 3
      // Predicated region
      $region45: #{model_forward.1} parent=5 // pred_check
        %p601 = pneg %p600
      $region46: #{model_forward.1} parent=5 // pred_check_branch
        %603 = sbr.rel (%p601) target = $region48
      $region47: #{model_forward.1} parent=5 // pred_region
        // Predicated region
        $region49: #{model_forward.1} parent=47 // pred_check
          %p604 = pneg %p143
        $region50: #{model_forward.1} parent=47 // pred_check_branch
          %606 = sbr.rel (%p604) target = $region52
        $region51: #{model_forward.1} parent=47 // pred_region
          %p607 = scmp.lt.s32.totalorder %s39, 2
          %s608 = scalar_select %p607, %s39, 2
          %s609 = scalar_lea.vmem %s4, %s608
        $region52: #{model_forward.1} parent=47 // pred_fallthru
          _
        // Predicated region
        $region53: #{model_forward.1} parent=47 // pred_check
          %p610 = pneg %p169
        $region54: #{model_forward.1} parent=47 // pred_check_branch
          %612 = sbr.rel (%p610) target = $region56
        $region55: #{model_forward.1} parent=47 // pred_region
          %p613 = scmp.lt.s32.totalorder %s39, 2
          %s614 = scalar_select %p613, %s39, 2
          %s615 = scalar_lea.vmem %s5, %s614
        $region56: #{model_forward.1} parent=47 // pred_fallthru
          _
        // Predicated region
        $region57: #{model_forward.1} parent=47 // pred_check
          %p616 = pneg %p195
        $region58: #{model_forward.1} parent=47 // pred_check_branch
          %618 = sbr.rel (%p616) target = $region60
        $region59: #{model_forward.1} parent=47 // pred_region
          %s619 = sand.u32 %s185, 1
          %s620 = scalar_lea.sflag [#allocation5], %s619
          %s621 = sand.u32 %s185, 1
          %s622 = smul.addr %s621, 384
          %s623 = scalar_lea.vmem [#allocation4], %s622
          %s625 = ssub.s32 6144, 6144
          %626 = vsyncadd %s620, %s625
          %s627 = smul.addr %s39, 48
          %s628 = smul.addr %s627, 128
          %s629 = scalar_lea.hbm %s6, %s628
          %s630 = sshll.u32 %s623, 4
          %s631 = int_to_ptr.vmem [resolvable:$true] %s630
          %636 = dma.hbm_to_vmem [thread:$0]  %s629, 6144, %s631, %s620, 384, 384, 24
        $region60: #{model_forward.1} parent=47 // pred_fallthru
          _
        // Predicated region
        $region61: #{model_forward.1} parent=47 // pred_check
          %p637 = pneg %p221
        $region62: #{model_forward.1} parent=47 // pred_check_branch
          %639 = sbr.rel (%p637) target = $region64
        $region63: #{model_forward.1} parent=47 // pred_region
          %p640 = scmp.lt.s32.totalorder %s39, 2
          %s641 = scalar_select %p640, %s39, 2
          %s642 = smul.addr %s641, 3
          %s643 = scalar_lea.vmem %s7, %s642
        $region64: #{model_forward.1} parent=47 // pred_fallthru
          _
        // Predicated region
        $region65: #{model_forward.1} parent=47 // pred_check
          %p644 = pneg %p247
        $region66: #{model_forward.1} parent=47 // pred_check_branch
          %646 = sbr.rel (%p644) target = $region68
        $region67: #{model_forward.1} parent=47 // pred_region
          %s647 = sand.u32 %s39, 1
          %s648 = scalar_lea.sflag [#allocation7], %s647
          %s649 = sand.u32 %s237, 1
          %s650 = smul.addr %s649, 128
          %s651 = scalar_lea.vmem [#allocation6], %s650
          %s653 = ssub.s32 2048, 2048
          %654 = vsyncadd %s648, %s653
          %s655 = smul.addr %s39, 16
          %s656 = smul.addr %s655, 128
          %s657 = scalar_lea.hbm %s8, %s656
          %s658 = sshll.u32 %s651, 4
          %s659 = int_to_ptr.vmem [resolvable:$true] %s658
          %664 = dma.hbm_to_vmem [thread:$0]  %s657, 2048, %s659, %s648, 128, 128, 8
        $region68: #{model_forward.1} parent=47 // pred_fallthru
          _
        // Predicated region
        $region69: #{model_forward.1} parent=47 // pred_check
          %p665 = pneg %p273
        $region70: #{model_forward.1} parent=47 // pred_check_branch
          %667 = sbr.rel (%p665) target = $region72
        $region71: #{model_forward.1} parent=47 // pred_region
          %p668 = scmp.lt.s32.totalorder %s39, 2
          %s669 = scalar_select %p668, %s39, 2
          %s670 = scalar_lea.vmem %s9, %s669
        $region72: #{model_forward.1} parent=47 // pred_fallthru
          _
        // Predicated region
        $region73: #{model_forward.1} parent=47 // pred_check
          %p671 = pneg %p299
        $region74: #{model_forward.1} parent=47 // pred_check_branch
          %673 = sbr.rel (%p671) target = $region76
        $region75: #{model_forward.1} parent=47 // pred_region
          %p674 = scmp.lt.s32.totalorder %s39, 2
          %s675 = scalar_select %p674, %s39, 2
          %s676 = scalar_lea.vmem %s10, %s675
        $region76: #{model_forward.1} parent=47 // pred_fallthru
          _
        // Predicated region
        $region77: #{model_forward.1} parent=47 // pred_check
          %p677 = pneg %p325
        $region78: #{model_forward.1} parent=47 // pred_check_branch
          %679 = sbr.rel (%p677) target = $region80
        $region79: #{model_forward.1} parent=47 // pred_region
          %p680 = scmp.lt.s32.totalorder %s39, 2
          %s681 = scalar_select %p680, %s39, 2
          %s682 = scalar_lea.vmem %s11, %s681
        $region80: #{model_forward.1} parent=47 // pred_fallthru
          _
        // Predicated region
        $region81: #{model_forward.1} parent=47 // pred_check
          %p683 = pneg %p351
        $region82: #{model_forward.1} parent=47 // pred_check_branch
          %685 = sbr.rel (%p683) target = $region84
        $region83: #{model_forward.1} parent=47 // pred_region
          %s686 = sand.u32 %s39, 1
          %s687 = scalar_lea.sflag [#allocation7], %s686
          %s688 = sand.u32 %s341, 1
          %s689 = smul.addr %s688, 128
          %s690 = scalar_lea.vmem [#allocation8], %s689
          %s692 = ssub.s32 2048, 2048
          %693 = vsyncadd %s687, %s692
          %s694 = smul.addr %s39, 16
          %s695 = smul.addr %s694, 128
          %s696 = scalar_lea.hbm %s12, %s695
          %s697 = sshll.u32 %s690, 4
          %s698 = int_to_ptr.vmem [resolvable:$true] %s697
          %703 = dma.hbm_to_vmem [thread:$0]  %s696, 2048, %s698, %s687, 128, 128, 8
        $region84: #{model_forward.1} parent=47 // pred_fallthru
          _
        // Predicated region
        $region85: #{model_forward.1} parent=47 // pred_check
          %p704 = pneg %p377
        $region86: #{model_forward.1} parent=47 // pred_check_branch
          %706 = sbr.rel (%p704) target = $region88
        $region87: #{model_forward.1} parent=47 // pred_region
          %p707 = scmp.lt.s32.totalorder %s39, 2
          %s708 = scalar_select %p707, %s39, 2
          %s709 = scalar_lea.vmem %s13, %s708
        $region88: #{model_forward.1} parent=47 // pred_fallthru
          _
        // Predicated region
        $region89: #{model_forward.1} parent=47 // pred_check
          %p710 = pneg %p403
        $region90: #{model_forward.1} parent=47 // pred_check_branch
          %712 = sbr.rel (%p710) target = $region92
        $region91: #{model_forward.1} parent=47 // pred_region
          %s713 = sand.u32 %s393, 1
          %s714 = scalar_lea.sflag [#allocation10], %s713
          %s715 = sand.u32 %s393, 1
          %s716 = smul.addr %s715, 128
          %s717 = scalar_lea.vmem [#allocation9], %s716
          %s719 = ssub.s32 2048, 2048
          %720 = vsyncadd %s714, %s719
          %s721 = smul.addr %s39, 16
          %s722 = smul.addr %s721, 128
          %s723 = scalar_lea.hbm %s14, %s722
          %s724 = sshll.u32 %s717, 4
          %s725 = int_to_ptr.vmem [resolvable:$true] %s724
          %730 = dma.hbm_to_vmem [thread:$0]  %s723, 2048, %s725, %s714, 128, 128, 8
        $region92: #{model_forward.1} parent=47 // pred_fallthru
          _
        // Predicated region
        $region93: #{model_forward.1} parent=47 // pred_check
          %p731 = pneg %p429
        $region94: #{model_forward.1} parent=47 // pred_check_branch
          %733 = sbr.rel (%p731) target = $region96
        $region95: #{model_forward.1} parent=47 // pred_region
          %p734 = scmp.lt.s32.totalorder %s39, 2
          %s735 = scalar_select %p734, %s39, 2
          %s736 = scalar_lea.vmem %s15, %s735
        $region96: #{model_forward.1} parent=47 // pred_fallthru
          _
      $region48: #{model_forward.1} parent=5 // pred_fallthru
        _
      %p737 = scmp.le.s32.totalorder 1, %s39
      %p738 = scmp.lt.s32.totalorder %s39, 4
      %p739 = pnand %p737, %p738
      %p740 = pneg %p739
      // Predicated region
      $region97: #{model_forward.1} parent=5 // pred_check
        _
      $region98: #{model_forward.1} parent=5 // pred_check_branch
        %742 = sbr.rel (%p739) target = $region100
      $region99: #{model_forward.1} parent=5 // pred_region
        %s743 = ssub.s32 %s39, 1
        %s744 = sand.u32 %s188, 1
        %s745 = scalar_lea.sflag [#allocation5], %s744
        %s746 = sand.u32 %s188, 1
        %s747 = smul.addr %s746, 384
        %s748 = scalar_lea.vmem [#allocation4], %s747
        // Predicated region
        $region101: #{model_forward.1} parent=99 // pred_check
          %p749 = pneg %p201
        $region102: #{model_forward.1} parent=99 // pred_check_branch
          %751 = sbr.rel (%p749) target = $region104
        $region103: #{model_forward.1} parent=99 // pred_region
          %752 = dma.done %s745, 6144
        $region104: #{model_forward.1} parent=99 // pred_fallthru
          _
        %s753 = sand.u32 %s44, 1
        %s754 = scalar_lea.sflag [#allocation7], %s753
        %s755 = sand.u32 %s240, 1
        %s756 = smul.addr %s755, 128
        %s757 = scalar_lea.vmem [#allocation6], %s756
        // Predicated region
        $region105: #{model_forward.1} parent=99 // pred_check
          %p758 = pneg %p253
        $region106: #{model_forward.1} parent=99 // pred_check_branch
          %760 = sbr.rel (%p758) target = $region108
        $region107: #{model_forward.1} parent=99 // pred_region
          %761 = dma.done %s754, 2048
        $region108: #{model_forward.1} parent=99 // pred_fallthru
          _
        %s762 = sand.u32 %s44, 1
        %s763 = scalar_lea.sflag [#allocation7], %s762
        %s764 = sand.u32 %s344, 1
        %s765 = smul.addr %s764, 128
        %s766 = scalar_lea.vmem [#allocation8], %s765
        // Predicated region
        $region109: #{model_forward.1} parent=99 // pred_check
          %p767 = pneg %p357
        $region110: #{model_forward.1} parent=99 // pred_check_branch
          %769 = sbr.rel (%p767) target = $region112
        $region111: #{model_forward.1} parent=99 // pred_region
          %770 = dma.done %s763, 2048
        $region112: #{model_forward.1} parent=99 // pred_fallthru
          _
        %s771 = sand.u32 %s396, 1
        %s772 = scalar_lea.sflag [#allocation10], %s771
        %s773 = sand.u32 %s396, 1
        %s774 = smul.addr %s773, 128
        %s775 = scalar_lea.vmem [#allocation9], %s774
        // Predicated region
        $region113: #{model_forward.1} parent=99 // pred_check
          %p776 = pneg %p409
        $region114: #{model_forward.1} parent=99 // pred_check_branch
          %778 = sbr.rel (%p776) target = $region116
        $region115: #{model_forward.1} parent=99 // pred_region
          %779 = dma.done %s772, 2048
        $region116: #{model_forward.1} parent=99 // pred_fallthru
          _
        %p780 = pneg %p60
        %p781 = pneg %p57
        %p782 = pneg %p81
        %p783 = pneg %p78
        %p784 = pneg %p102
        %p785 = pneg %p99
        %p786 = pneg %p123
        %p787 = pneg %p120
        %p788 = scmp.lt.s32.totalorder %s44, 2
        %s789 = scalar_select %p788, %s44, 2
        %s790 = scalar_lea.vmem %s4, %s789
        %p791 = pneg %p149
        %p792 = pneg %p146
        %p793 = scmp.lt.s32.totalorder %s44, 2
        %s794 = scalar_select %p793, %s44, 2
        %s795 = scalar_lea.vmem %s5, %s794
        %p796 = pneg %p175
        %p797 = pneg %p172
        %s798 = sand.u32 %s188, 1
        %s799 = scalar_lea.sflag [#allocation5], %s798
        %s800 = sand.u32 %s188, 1
        %s801 = smul.addr %s800, 384
        %s802 = scalar_lea.vmem [#allocation4], %s801
        %p803 = pneg %p201
        %p804 = pneg %p198
        %p805 = scmp.lt.s32.totalorder %s44, 2
        %s806 = scalar_select %p805, %s44, 2
        %s807 = smul.addr %s806, 3
        %s808 = scalar_lea.vmem %s7, %s807
        %p809 = pneg %p227
        %p810 = pneg %p224
        %s811 = sand.u32 %s44, 1
        %s812 = scalar_lea.sflag [#allocation7], %s811
        %s813 = sand.u32 %s240, 1
        %s814 = smul.addr %s813, 128
        %s815 = scalar_lea.vmem [#allocation6], %s814
        %p816 = pneg %p253
        %p817 = pneg %p250
        %p818 = scmp.lt.s32.totalorder %s44, 2
        %s819 = scalar_select %p818, %s44, 2
        %s820 = scalar_lea.vmem %s9, %s819
        %p821 = pneg %p279
        %p822 = pneg %p276
        %p823 = scmp.lt.s32.totalorder %s44, 2
        %s824 = scalar_select %p823, %s44, 2
        %s825 = scalar_lea.vmem %s10, %s824
        %p826 = pneg %p305
        %p827 = pneg %p302
        %p828 = scmp.lt.s32.totalorder %s44, 2
        %s829 = scalar_select %p828, %s44, 2
        %s830 = scalar_lea.vmem %s11, %s829
        %p831 = pneg %p331
        %p832 = pneg %p328
        %s833 = sand.u32 %s44, 1
        %s834 = scalar_lea.sflag [#allocation7], %s833
        %s835 = sand.u32 %s344, 1
        %s836 = smul.addr %s835, 128
        %s837 = scalar_lea.vmem [#allocation8], %s836
        %p838 = pneg %p357
        %p839 = pneg %p354
        %p840 = scmp.lt.s32.totalorder %s44, 2
        %s841 = scalar_select %p840, %s44, 2
        %s842 = scalar_lea.vmem %s13, %s841
        %p843 = pneg %p383
        %p844 = pneg %p380
        %s845 = sand.u32 %s396, 1
        %s846 = scalar_lea.sflag [#allocation10], %s845
        %s847 = sand.u32 %s396, 1
        %s848 = smul.addr %s847, 128
        %s849 = scalar_lea.vmem [#allocation9], %s848
        %p850 = pneg %p409
        %p851 = pneg %p406
        %p852 = scmp.lt.s32.totalorder %s44, 2
        %s853 = scalar_select %p852, %s44, 2
        %s854 = scalar_lea.vmem %s15, %s853
        %p855 = pneg %p435
        %p856 = pneg %p432
        %p857 = pneg %p456
        %p858 = pneg %p453
        %p859 = pneg %p477
        %p860 = pneg %p474
        %p861 = pneg %p498
        %p862 = pneg %p495
        %p863 = pneg %p519
        %p864 = pneg %p516
        %p865 = pneg %p540
        %p866 = pneg %p537
        %p867 = pneg %p561
        %p868 = pneg %p558
        %p869 = scmp.lt.s32.totalorder %s44, 2
        %s870 = scalar_select %p869, %s44, 2
        %s871 = scalar_lea.vmem %s4, %s870
        %p872 = scmp.lt.s32.totalorder %s44, 2
        %s873 = scalar_select %p872, %s44, 2
        %s874 = scalar_lea.vmem %s5, %s873
        %p875 = scmp.lt.s32.totalorder %s44, 2
        %s876 = scalar_select %p875, %s44, 2
        %s877 = smul.addr %s876, 3
        %s878 = scalar_lea.vmem %s7, %s877
        %p879 = scmp.lt.s32.totalorder %s44, 2
        %s880 = scalar_select %p879, %s44, 2
        %s881 = scalar_lea.vmem %s9, %s880
        %p882 = scmp.lt.s32.totalorder %s44, 2
        %s883 = scalar_select %p882, %s44, 2
        %s884 = scalar_lea.vmem %s10, %s883
        %p885 = scmp.lt.s32.totalorder %s44, 2
        %s886 = scalar_select %p885, %s44, 2
        %s887 = scalar_lea.vmem %s11, %s886
        %p888 = scmp.lt.s32.totalorder %s44, 2
        %s889 = scalar_select %p888, %s44, 2
        %s890 = scalar_lea.vmem %s13, %s889
        %p891 = scmp.lt.s32.totalorder %s44, 2
        %s892 = scalar_select %p891, %s44, 2
        %s893 = scalar_lea.vmem %s15, %s892
        %p894 = scmp.eq.s32.totalorder %s44, 0
        // Predicated region
        $region117: #{model_forward.1} parent=99 // pred_check
          %p895 = pneg %p894
        $region118: #{model_forward.1} parent=99 // pred_check_branch
          %897 = sbr.rel (%p895) target = $region120
        $region119: #{model_forward.1} parent=99 // pred_region
          %v898 = vld [vmem:[%s0] sm:$0xff]
          %v899 = vld [vmem:[%s0 + $0x8] sm:$0xff]
          %v900 = vld [vmem:[%s1] sm:$0xff]
          %v901 = vld [vmem:[%s2] sm:$0xff]
          %v902 = vld [vmem:[%s2 + $0x8] sm:$0xff]
          %vm903 = vcmask 64512
          %v905 = vsel %vm903, %v898, 0
          %v908 = vsel %vm903, %v899, 0
          %910 = vmatprep.subr.mxu0 0.0
          %911 = vmatpush1.msra.mxu0 %v900
          %912 = vmatprep.subr.mxu0 0.0
          %913 = vmatpush1.msra.mxu0 0.0
          %914 = vmatprep.subr.mxu0 0.0
          %915 = vmatpush1.msra.mxu0 0.0
          %916 = vmatprep.subr.mxu0 0.0
          %917 = vmatpush1.msra.mxu0 0.0
          %918 = vmatprep.subr.mxu0 0.0
          %919 = vmatpush1.msra.mxu0 0.0
          %920 = vmatprep.subr.mxu0 0.0
          %921 = vmatpush1.msra.mxu0 0.0
          %922 = vmatprep.subr.mxu0 0.0
          %923 = vmatpush1.msra.mxu0 0.0
          %924 = vmatprep.subr.mxu0 0.0
          %925 = vmatpush1.msra.mxu0 0.0
          %926 = vmatprep.subr.mxu0 0.0
          %927 = vmatpush1.msra.mxu0 0.0
          %928 = vmatprep.subr.mxu0 0.0
          %929 = vmatpush1.msra.mxu0 0.0
          %930 = vmatprep.subr.mxu0 0.0
          %931 = vmatpush1.msra.mxu0 0.0
          %932 = vmatprep.subr.mxu0 0.0
          %933 = vmatpush1.msra.mxu0 0.0
          %934 = vmatprep.subr.mxu0 0.0
          %935 = vmatpush1.msra.mxu0 0.0
          %936 = vmatprep.subr.mxu0 0.0
          %937 = vmatpush1.msra.mxu0 0.0
          %938 = vmatprep.subr.mxu0 0.0
          %939 = vmatpush1.msra.mxu0 0.0
          %940 = vmatprep.subr.mxu0 0.0
          %941 = vmatpush1.msra.mxu0 0.0
          %942 = vmatprep.subr.mxu0 0.0
          %943 = vmatpush1.msra.mxu0 0.0
          %944 = vmatprep.subr.mxu0 0.0
          %945 = vmatpush1.msra.mxu0 0.0
          %946 = vmatprep.subr.mxu0 0.0
          %947 = vmatpush1.msra.mxu0 0.0
          %948 = vmatprep.subr.mxu0 0.0
          %949 = vmatpush1.msra.mxu0 0.0
          %950 = vmatprep.subr.mxu0 0.0
          %951 = vmatpush1.msra.mxu0 0.0
          %952 = vmatprep.subr.mxu0 0.0
          %953 = vmatpush1.msra.mxu0 0.0
          %954 = vmatprep.subr.mxu0 0.0
          %955 = vmatpush1.msra.mxu0 0.0
          %956 = vmatprep.subr.mxu0 0.0
          %957 = vmatpush1.msra.mxu0 0.0
          %958 = vmatprep.subr.mxu0 0.0
          %959 = vmatpush1.msra.mxu0 0.0
          %960 = vmatprep.subr.mxu0 0.0
          %961 = vmatpush1.msra.mxu0 0.0
          %962 = vmatprep.subr.mxu0 0.0
          %963 = vmatpush1.msra.mxu0 0.0
          %964 = vmatprep.subr.mxu0 0.0
          %965 = vmatpush1.msra.mxu0 0.0
          %966 = vmatprep.subr.mxu0 0.0
          %967 = vmatpush1.msra.mxu0 0.0
          %968 = vmatprep.subr.mxu0 0.0
          %969 = vmatpush1.msra.mxu0 0.0
          %970 = vmatprep.subr.mxu0 0.0
          %971 = vmatpush1.msra.mxu0 0.0
          %972 = vmatprep.subr.mxu0 0.0
          %973 = vmatpush1.msra.mxu0 0.0
          %974 = vmatprep.mubr.f32.mxu0 0.0
          %975 = vmatmul.mubr.f32.gmra.mrb[0].mxu0 %v905
          %v976 = vpop.f32.mrb[0].mxu0
          %v977 = vadd.f32 %v901, %v976
          %v978 = vpop.f32.mrb[0].mxu0
          %979 = vmatprep.mubr.f32.mxu0 0.0
          %980 = vmatmul.mubr.f32.gmra.mrb[0].mxu0 %v908
          %v981 = vpop.f32.mrb[0].mxu0
          %v982 = vadd.f32 %v902, %v981
          %v983 = vpop.f32.mrb[0].mxu0
          %984 = vdwg.mxu0
          %985 = vst [vmem:[#allocation2] sm:$0xff] %v977
          %986 = vst [vmem:[#allocation2 + $0x8] sm:$0xff] %v982
        $region120: #{model_forward.1} parent=99 // pred_fallthru
          _
        %v987 = vld [vmem:[#allocation2] sm:$0xff]
        %v988 = vld [vmem:[#allocation2 + $0x8] sm:$0xff]
        %v989 = vld [vmem:[%s871] sm:$0x1]
        %v990 = vld [vmem:[%s874] sm:$0x1]
        %991 = vadd.xlane.f32.xlu0 %v987
        %v992 = vpop.xlane.xlu0 %991
        %993 = vadd.xlane.f32.xlu0 %v988
        %v994 = vpop.xlane.xlu0 %993
        %v995 = vrcp.pop 128.0
        %v996 = vmul.f32 %v992, %v995
        %v997 = vmul.f32 %v994, %v995
        %v998 = vmul.f32 %v987, %v987
        %v999 = vmul.f32 %v988, %v988
        %1000 = vadd.xlane.f32.xlu0 %v998
        %v1001 = vpop.xlane.xlu0 %1000
        %1002 = vadd.xlane.f32.xlu0 %v999
        %v1003 = vpop.xlane.xlu0 %1002
        %v1004 = vmul.f32 %v1001, %v995
        %v1005 = vmul.f32 %v1003, %v995
        %v1006 = vmul.f32 %v996, %v996
        %v1007 = vmul.f32 %v997, %v997
        %v1008 = vsub.f32 %v1004, %v1006
        %v1009 = vsub.f32 %v1005, %v1007
        %v1010 = vsub.f32 %v987, %v996
        %v1011 = vsub.f32 %v988, %v997
        %v1012 = vadd.f32 %v1008, 1e-05
        %v1013 = vadd.f32 %v1009, 1e-05
        %v1014 = vrsqrt.pop %v1012
        %v1015 = vrsqrt.pop %v1013
        %v1016 = vmul.f32 %v1010, %v1014
        %v1017 = vmul.f32 %v1011, %v1015
        %v1019 = vlaneseq
        %v1020 = vshrl.u32 %v1019, 7
        %v1021 = vsub.s32 0, %v1020
        %v1022 = vrot.slane %v989, %v1021
        %v1024 = vmul.f32 %v1016, %v1022
        %v1025 = vmul.f32 %v1017, %v1022
        %v1027 = vlaneseq
        %v1028 = vshrl.u32 %v1027, 7
        %v1029 = vsub.s32 0, %v1028
        %v1030 = vrot.slane %v990, %v1029
        %v1032 = vadd.f32 %v1024, %v1030
        %v1033 = vadd.f32 %v1025, %v1030
        %v1034 = vld [vmem:[%s748] sm:$0xff]
        %v1035 = vld [vmem:[%s748 + $0x8] sm:$0xff]
        %v1036 = vld [vmem:[%s748 + $0x10] sm:$0xff]
        %v1037 = vld [vmem:[%s748 + $0x18] sm:$0xff]
        %v1038 = vld [vmem:[%s748 + $0x20] sm:$0xff]
        %v1039 = vld [vmem:[%s748 + $0x28] sm:$0xff]
        %v1040 = vld [vmem:[%s748 + $0x30] sm:$0xff]
        %v1041 = vld [vmem:[%s748 + $0x38] sm:$0xff]
        %v1042 = vld [vmem:[%s748 + $0x40] sm:$0xff]
        %v1043 = vld [vmem:[%s748 + $0x48] sm:$0xff]
        %v1044 = vld [vmem:[%s748 + $0x50] sm:$0xff]
        %v1045 = vld [vmem:[%s748 + $0x58] sm:$0xff]
        %v1046 = vld [vmem:[%s748 + $0x60] sm:$0xff]
        %v1047 = vld [vmem:[%s748 + $0x68] sm:$0xff]
        %v1048 = vld [vmem:[%s748 + $0x70] sm:$0xff]
        %v1049 = vld [vmem:[%s748 + $0x78] sm:$0xff]
        %v1050 = vld [vmem:[%s748 + $0x80] sm:$0xff]
        %v1051 = vld [vmem:[%s748 + $0x88] sm:$0xff]
        %v1052 = vld [vmem:[%s748 + $0x90] sm:$0xff]
        %v1053 = vld [vmem:[%s748 + $0x98] sm:$0xff]
        %v1054 = vld [vmem:[%s748 + $0xa0] sm:$0xff]
        %v1055 = vld [vmem:[%s748 + $0xa8] sm:$0xff]
        %v1056 = vld [vmem:[%s748 + $0xb0] sm:$0xff]
        %v1057 = vld [vmem:[%s748 + $0xb8] sm:$0xff]
        %v1058 = vld [vmem:[%s748 + $0xc0] sm:$0xff]
        %v1059 = vld [vmem:[%s748 + $0xc8] sm:$0xff]
        %v1060 = vld [vmem:[%s748 + $0xd0] sm:$0xff]
        %v1061 = vld [vmem:[%s748 + $0xd8] sm:$0xff]
        %v1062 = vld [vmem:[%s748 + $0xe0] sm:$0xff]
        %v1063 = vld [vmem:[%s748 + $0xe8] sm:$0xff]
        %v1064 = vld [vmem:[%s748 + $0xf0] sm:$0xff]
        %v1065 = vld [vmem:[%s748 + $0xf8] sm:$0xff]
        %v1066 = vld [vmem:[%s748 + $0x100] sm:$0xff]
        %v1067 = vld [vmem:[%s748 + $0x108] sm:$0xff]
        %v1068 = vld [vmem:[%s748 + $0x110] sm:$0xff]
        %v1069 = vld [vmem:[%s748 + $0x118] sm:$0xff]
        %v1070 = vld [vmem:[%s748 + $0x120] sm:$0xff]
        %v1071 = vld [vmem:[%s748 + $0x128] sm:$0xff]
        %v1072 = vld [vmem:[%s748 + $0x130] sm:$0xff]
        %v1073 = vld [vmem:[%s748 + $0x138] sm:$0xff]
        %v1074 = vld [vmem:[%s748 + $0x140] sm:$0xff]
        %v1075 = vld [vmem:[%s748 + $0x148] sm:$0xff]
        %v1076 = vld [vmem:[%s748 + $0x150] sm:$0xff]
        %v1077 = vld [vmem:[%s748 + $0x158] sm:$0xff]
        %v1078 = vld [vmem:[%s748 + $0x160] sm:$0xff]
        %v1079 = vld [vmem:[%s748 + $0x168] sm:$0xff]
        %v1080 = vld [vmem:[%s748 + $0x170] sm:$0xff]
        %v1081 = vld [vmem:[%s748 + $0x178] sm:$0xff]
        %v1082 = vld [vmem:[%s878] sm:$0x7]
        %v1084 = vlaneseq
        %v1085 = vshrl.u32 %v1084, 7
        %v1086 = vsub.s32 0, %v1085
        %v1087 = vrot.slane %v1082, %v1086
        %v1088 = vlaneseq
        %v1089 = vshrl.u32 %v1088, 7
        %v1090 = vsub.s32 1, %v1089
        %v1091 = vrot.slane %v1082, %v1090
        %v1092 = vlaneseq
        %v1093 = vshrl.u32 %v1092, 7
        %v1094 = vsub.s32 2, %v1093
        %v1095 = vrot.slane %v1082, %v1094
        %1099 = vmatprep.subr.mxu0 %v1035
        %1100 = vmatpush1.msra.mxu0 %v1034
        %1101 = vmatprep.subr.mxu0 %v1038
        %1102 = vmatpush1.msra.mxu0 %v1037
        %1103 = vmatprep.subr.mxu0 %v1041
        %1104 = vmatpush1.msra.mxu0 %v1040
        %1105 = vmatprep.subr.mxu0 %v1044
        %1106 = vmatpush1.msra.mxu0 %v1043
        %1107 = vmatprep.subr.mxu0 %v1047
        %1108 = vmatpush1.msra.mxu0 %v1046
        %1109 = vmatprep.subr.mxu0 %v1050
        %1110 = vmatpush1.msra.mxu0 %v1049
        %1111 = vmatprep.subr.mxu0 %v1053
        %1112 = vmatpush1.msra.mxu0 %v1052
        %1113 = vmatprep.subr.mxu0 %v1056
        %1114 = vmatpush1.msra.mxu0 %v1055
        %1115 = vmatprep.subr.mxu0 %v1059
        %1116 = vmatpush1.msra.mxu0 %v1058
        %1117 = vmatprep.subr.mxu0 %v1062
        %1118 = vmatpush1.msra.mxu0 %v1061
        %1119 = vmatprep.subr.mxu0 %v1065
        %1120 = vmatpush1.msra.mxu0 %v1064
        %1121 = vmatprep.subr.mxu0 %v1068
        %1122 = vmatpush1.msra.mxu0 %v1067
        %1123 = vmatprep.subr.mxu0 %v1071
        %1124 = vmatpush1.msra.mxu0 %v1070
        %1125 = vmatprep.subr.mxu0 %v1074
        %1126 = vmatpush1.msra.mxu0 %v1073
        %1127 = vmatprep.subr.mxu0 %v1077
        %1128 = vmatpush1.msra.mxu0 %v1076
        %1129 = vmatprep.subr.mxu0 %v1080
        %1130 = vmatpush1.msra.mxu0 %v1079
        %1131 = vmatprep.subr.mxu0 0.0
        %1132 = vmatpush1.msra.mxu0 0.0
        %1133 = vmatprep.subr.mxu0 0.0
        %1134 = vmatpush1.msra.mxu0 0.0
        %1135 = vmatprep.subr.mxu0 0.0
        %1136 = vmatpush1.msra.mxu0 0.0
        %1137 = vmatprep.subr.mxu0 0.0
        %1138 = vmatpush1.msra.mxu0 0.0
        %1139 = vmatprep.subr.mxu0 0.0
        %1140 = vmatpush1.msra.mxu0 0.0
        %1141 = vmatprep.subr.mxu0 0.0
        %1142 = vmatpush1.msra.mxu0 0.0
        %1143 = vmatprep.subr.mxu0 0.0
        %1144 = vmatpush1.msra.mxu0 0.0
        %1145 = vmatprep.subr.mxu0 0.0
        %1146 = vmatpush1.msra.mxu0 0.0
        %1147 = vmatprep.subr.mxu0 0.0
        %1148 = vmatpush1.msra.mxu0 0.0
        %1149 = vmatprep.subr.mxu0 0.0
        %1150 = vmatpush1.msra.mxu0 0.0
        %1151 = vmatprep.subr.mxu0 0.0
        %1152 = vmatpush1.msra.mxu0 0.0
        %1153 = vmatprep.subr.mxu0 0.0
        %1154 = vmatpush1.msra.mxu0 0.0
        %1155 = vmatprep.subr.mxu0 0.0
        %1156 = vmatpush1.msra.mxu0 0.0
        %1157 = vmatprep.subr.mxu0 0.0
        %1158 = vmatpush1.msra.mxu0 0.0
        %1159 = vmatprep.subr.mxu0 0.0
        %1160 = vmatpush1.msra.mxu0 0.0
        %1161 = vmatprep.subr.mxu0 0.0
        %1162 = vmatpush1.msra.mxu0 0.0
        %1163 = vmatprep.mubr.f32.mxu0 0.0
        %1164 = vmatmul.mubr.f32.gmra.mrb[0].mxu0 %v1032
        %v1165 = vpop.f32.mrb[0].mxu0
        %v1166 = vadd.f32 %v1087, %v1165
        %v1167 = vpop.f32.mrb[0].mxu0
        %v1168 = vadd.f32 %v1091, %v1167
        %1169 = vmatprep.mubr.f32.mxu0 0.0
        %1170 = vmatmul.mubr.f32.gmra.mrb[0].mxu0 %v1033
        %v1171 = vpop.f32.mrb[0].mxu0
        %v1172 = vadd.f32 %v1087, %v1171
        %v1173 = vpop.f32.mrb[0].mxu0
        %v1174 = vadd.f32 %v1091, %v1173
        %1175 = vdwg.mxu0
        %1176 = vmatprep.subr.mxu0 0.0
        %1177 = vmatpush1.msra.mxu0 %v1036
        %1178 = vmatprep.subr.mxu0 0.0
        %1179 = vmatpush1.msra.mxu0 %v1039
        %1180 = vmatprep.subr.mxu0 0.0
        %1181 = vmatpush1.msra.mxu0 %v1042
        %1182 = vmatprep.subr.mxu0 0.0
        %1183 = vmatpush1.msra.mxu0 %v1045
        %1184 = vmatprep.subr.mxu0 0.0
        %1185 = vmatpush1.msra.mxu0 %v1048
        %1186 = vmatprep.subr.mxu0 0.0
        %1187 = vmatpush1.msra.mxu0 %v1051
        %1188 = vmatprep.subr.mxu0 0.0
        %1189 = vmatpush1.msra.mxu0 %v1054
        %1190 = vmatprep.subr.mxu0 0.0
        %1191 = vmatpush1.msra.mxu0 %v1057
        %1192 = vmatprep.subr.mxu0 0.0
        %1193 = vmatpush1.msra.mxu0 %v1060
        %1194 = vmatprep.subr.mxu0 0.0
        %1195 = vmatpush1.msra.mxu0 %v1063
        %1196 = vmatprep.subr.mxu0 0.0
        %1197 = vmatpush1.msra.mxu0 %v1066
        %1198 = vmatprep.subr.mxu0 0.0
        %1199 = vmatpush1.msra.mxu0 %v1069
        %1200 = vmatprep.subr.mxu0 0.0
        %1201 = vmatpush1.msra.mxu0 %v1072
        %1202 = vmatprep.subr.mxu0 0.0
        %1203 = vmatpush1.msra.mxu0 %v1075
        %1204 = vmatprep.subr.mxu0 0.0
        %1205 = vmatpush1.msra.mxu0 %v1078
        %1206 = vmatprep.subr.mxu0 0.0
        %1207 = vmatpush1.msra.mxu0 %v1081
        %1208 = vmatprep.subr.mxu0 0.0
        %1209 = vmatpush1.msra.mxu0 0.0
        %1210 = vmatprep.subr.mxu0 0.0
        %1211 = vmatpush1.msra.mxu0 0.0
        %1212 = vmatprep.subr.mxu0 0.0
        %1213 = vmatpush1.msra.mxu0 0.0
        %1214 = vmatprep.subr.mxu0 0.0
        %1215 = vmatpush1.msra.mxu0 0.0
        %1216 = vmatprep.subr.mxu0 0.0
        %1217 = vmatpush1.msra.mxu0 0.0
        %1218 = vmatprep.subr.mxu0 0.0
        %1219 = vmatpush1.msra.mxu0 0.0
        %1220 = vmatprep.subr.mxu0 0.0
        %1221 = vmatpush1.msra.mxu0 0.0
        %1222 = vmatprep.subr.mxu0 0.0
        %1223 = vmatpush1.msra.mxu0 0.0
        %1224 = vmatprep.subr.mxu0 0.0
        %1225 = vmatpush1.msra.mxu0 0.0
        %1226 = vmatprep.subr.mxu0 0.0
        %1227 = vmatpush1.msra.mxu0 0.0
        %1228 = vmatprep.subr.mxu0 0.0
        %1229 = vmatpush1.msra.mxu0 0.0
        %1230 = vmatprep.subr.mxu0 0.0
        %1231 = vmatpush1.msra.mxu0 0.0
        %1232 = vmatprep.subr.mxu0 0.0
        %1233 = vmatpush1.msra.mxu0 0.0
        %1234 = vmatprep.subr.mxu0 0.0
        %1235 = vmatpush1.msra.mxu0 0.0
        %1236 = vmatprep.subr.mxu0 0.0
        %1237 = vmatpush1.msra.mxu0 0.0
        %1238 = vmatprep.subr.mxu0 0.0
        %1239 = vmatpush1.msra.mxu0 0.0
        %1240 = vmatprep.mubr.f32.mxu0 0.0
        %1241 = vmatmul.mubr.f32.gmra.mrb[0].mxu0 %v1032
        %v1242 = vpop.f32.mrb[0].mxu0
        %v1243 = vadd.f32 %v1095, %v1242
        %v1244 = vpop.f32.mrb[0].mxu0
        %1245 = vmatprep.mubr.f32.mxu0 0.0
        %1246 = vmatmul.mubr.f32.gmra.mrb[0].mxu0 %v1033
        %v1247 = vpop.f32.mrb[0].mxu0
        %v1248 = vadd.f32 %v1095, %v1247
        %v1249 = vpop.f32.mrb[0].mxu0
        %1250 = vdwg.mxu0
        %v1251 = vmul.f32 %v1166, 0.17677669
        %v1252 = vmul.f32 %v1172, 0.17677669
        %1255 = vrot.lane.b32.xlu0 %v1251, 96
        %v1256 = vpop.permute.xlu0 %1255
        %1257 = vrot.lane.b32.xlu0 %v1252, 96
        %v1258 = vpop.permute.xlu0 %1257
        %1259 = vrot.lane.b32.xlu0 %v1251, 64
        %v1260 = vpop.permute.xlu0 %1259
        %1261 = vrot.lane.b32.xlu0 %v1252, 64
        %v1262 = vpop.permute.xlu0 %1261
        %1263 = vrot.lane.b32.xlu0 %v1251, 32
        %v1264 = vpop.permute.xlu0 %1263
        %1265 = vrot.lane.b32.xlu0 %v1252, 32
        %v1266 = vpop.permute.xlu0 %1265
        %1269 = vrot.lane.b32.xlu0 %v1168, 96
        %v1270 = vpop.permute.xlu0 %1269
        %1271 = vrot.lane.b32.xlu0 %v1174, 96
        %v1272 = vpop.permute.xlu0 %1271
        %1273 = vrot.lane.b32.xlu0 %v1168, 64
        %v1274 = vpop.permute.xlu0 %1273
        %1275 = vrot.lane.b32.xlu0 %v1174, 64
        %v1276 = vpop.permute.xlu0 %1275
        %1277 = vrot.lane.b32.xlu0 %v1168, 32
        %v1278 = vpop.permute.xlu0 %1277
        %1279 = vrot.lane.b32.xlu0 %v1174, 32
        %v1280 = vpop.permute.xlu0 %1279
        %1283 = vrot.lane.b32.xlu0 %v1243, 96
        %v1284 = vpop.permute.xlu0 %1283
        %1285 = vrot.lane.b32.xlu0 %v1248, 96
        %v1286 = vpop.permute.xlu0 %1285
        %1289 = vrot.lane.b32.xlu0 %v1243, 64
        %v1290 = vpop.permute.xlu0 %1289
        %1291 = vrot.lane.b32.xlu0 %v1248, 64
        %v1292 = vpop.permute.xlu0 %1291
        %1295 = vrot.lane.b32.xlu0 %v1243, 32
        %v1296 = vpop.permute.xlu0 %1295
        %1297 = vrot.lane.b32.xlu0 %v1248, 32
        %v1298 = vpop.permute.xlu0 %1297
        %v1301 = vld [vmem:[%s3] sm:$0xff]
        %v1302 = vld [vmem:[%s3 + $0x8] sm:$0xff]
        %vm1303 = vcmask 261120
        %v1304 = vsel %vm1303, %v1251, 0
        %v1306 = vsel %vm1303, %v1252, 0
        %v1308 = vsel %vm1303, %v1168, 0
        %v1310 = vsel %vm1303, %v1174, 0
        %1312 = vmatprep.subr.mxu0 0.0
        %1313 = vmatpush1.xpose.msra.mxu0 %v1308
        %1314 = vmatprep.subr.mxu0 0.0
        %1315 = vmatpush1.xpose.msra.mxu0 %v1310
        %1316 = vmatprep.subr.mxu0 0.0
        %1317 = vmatpush1.xpose.msra.mxu0 0.0
        %1318 = vmatprep.subr.mxu0 0.0
        %1319 = vmatpush1.xpose.msra.mxu0 0.0
        %1320 = vmatprep.subr.mxu0 0.0
        %1321 = vmatpush1.xpose.msra.mxu0 0.0
        %1322 = vmatprep.subr.mxu0 0.0
        %1323 = vmatpush1.xpose.msra.mxu0 0.0
        %1324 = vmatprep.subr.mxu0 0.0
        %1325 = vmatpush1.xpose.msra.mxu0 0.0
        %1326 = vmatprep.subr.mxu0 0.0
        %1327 = vmatpush1.xpose.msra.mxu0 0.0
        %1328 = vmatprep.subr.mxu0 0.0
        %1329 = vmatpush1.xpose.msra.mxu0 0.0
        %1330 = vmatprep.subr.mxu0 0.0
        %1331 = vmatpush1.xpose.msra.mxu0 0.0
        %1332 = vmatprep.subr.mxu0 0.0
        %1333 = vmatpush1.xpose.msra.mxu0 0.0
        %1334 = vmatprep.subr.mxu0 0.0
        %1335 = vmatpush1.xpose.msra.mxu0 0.0
        %1336 = vmatprep.subr.mxu0 0.0
        %1337 = vmatpush1.xpose.msra.mxu0 0.0
        %1338 = vmatprep.subr.mxu0 0.0
        %1339 = vmatpush1.xpose.msra.mxu0 0.0
        %1340 = vmatprep.subr.mxu0 0.0
        %1341 = vmatpush1.xpose.msra.mxu0 0.0
        %1342 = vmatprep.subr.mxu0 0.0
        %1343 = vmatpush1.xpose.msra.mxu0 0.0
        %1344 = vmatprep.subr.mxu0 0.0
        %1345 = vmatpush1.xpose.msra.mxu0 0.0
        %1346 = vmatprep.subr.mxu0 0.0
        %1347 = vmatpush1.xpose.msra.mxu0 0.0
        %1348 = vmatprep.subr.mxu0 0.0
        %1349 = vmatpush1.xpose.msra.mxu0 0.0
        %1350 = vmatprep.subr.mxu0 0.0
        %1351 = vmatpush1.xpose.msra.mxu0 0.0
        %1352 = vmatprep.subr.mxu0 0.0
        %1353 = vmatpush1.xpose.msra.mxu0 0.0
        %1354 = vmatprep.subr.mxu0 0.0
        %1355 = vmatpush1.xpose.msra.mxu0 0.0
        %1356 = vmatprep.subr.mxu0 0.0
        %1357 = vmatpush1.xpose.msra.mxu0 0.0
        %1358 = vmatprep.subr.mxu0 0.0
        %1359 = vmatpush1.xpose.msra.mxu0 0.0
        %1360 = vmatprep.subr.mxu0 0.0
        %1361 = vmatpush1.xpose.msra.mxu0 0.0
        %1362 = vmatprep.subr.mxu0 0.0
        %1363 = vmatpush1.xpose.msra.mxu0 0.0
        %1364 = vmatprep.subr.mxu0 0.0
        %1365 = vmatpush1.xpose.msra.mxu0 0.0
        %1366 = vmatprep.subr.mxu0 0.0
        %1367 = vmatpush1.xpose.msra.mxu0 0.0
        %1368 = vmatprep.subr.mxu0 0.0
        %1369 = vmatpush1.xpose.msra.mxu0 0.0
        %1370 = vmatprep.subr.mxu0 0.0
        %1371 = vmatpush1.xpose.msra.mxu0 0.0
        %1372 = vmatprep.subr.mxu0 0.0
        %1373 = vmatpush1.xpose.msra.mxu0 0.0
        %1374 = vmatprep.subr.mxu0 0.0
        %1375 = vmatpush1.xpose.msra.mxu0 0.0
        %1376 = vmatprep.mubr.f32.mxu0 0.0
        %1377 = vmatmul.mubr.f32.gmra.mrb[0].mxu0 %v1304
        %v1378 = vpop.f32.mrb[0].mxu0
        %v1379 = vadd.f32 %v1301, %v1378
        %v1380 = vpop.f32.mrb[0].mxu0
        %1381 = vmatprep.mubr.f32.mxu0 0.0
        %1382 = vmatmul.mubr.f32.gmra.mrb[0].mxu0 %v1306
        %v1383 = vpop.f32.mrb[0].mxu0
        %v1384 = vadd.f32 %v1302, %v1383
        %v1385 = vpop.f32.mrb[0].mxu0
        %1386 = vdwg.mxu0
        %v1387 = vsel %vm1303, %v1256, 0
        %v1389 = vsel %vm1303, %v1258, 0
        %v1391 = vsel %vm1303, %v1270, 0
        %v1393 = vsel %vm1303, %v1272, 0
        %1395 = vmatprep.subr.mxu0 0.0
        %1396 = vmatpush1.xpose.msra.mxu0 %v1391
        %1397 = vmatprep.subr.mxu0 0.0
        %1398 = vmatpush1.xpose.msra.mxu0 %v1393
        %1399 = vmatprep.subr.mxu0 0.0
        %1400 = vmatpush1.xpose.msra.mxu0 0.0
        %1401 = vmatprep.subr.mxu0 0.0
        %1402 = vmatpush1.xpose.msra.mxu0 0.0
        %1403 = vmatprep.subr.mxu0 0.0
        %1404 = vmatpush1.xpose.msra.mxu0 0.0
        %1405 = vmatprep.subr.mxu0 0.0
        %1406 = vmatpush1.xpose.msra.mxu0 0.0
        %1407 = vmatprep.subr.mxu0 0.0
        %1408 = vmatpush1.xpose.msra.mxu0 0.0
        %1409 = vmatprep.subr.mxu0 0.0
        %1410 = vmatpush1.xpose.msra.mxu0 0.0
        %1411 = vmatprep.subr.mxu0 0.0
        %1412 = vmatpush1.xpose.msra.mxu0 0.0
        %1413 = vmatprep.subr.mxu0 0.0
        %1414 = vmatpush1.xpose.msra.mxu0 0.0
        %1415 = vmatprep.subr.mxu0 0.0
        %1416 = vmatpush1.xpose.msra.mxu0 0.0
        %1417 = vmatprep.subr.mxu0 0.0
        %1418 = vmatpush1.xpose.msra.mxu0 0.0
        %1419 = vmatprep.subr.mxu0 0.0
        %1420 = vmatpush1.xpose.msra.mxu0 0.0
        %1421 = vmatprep.subr.mxu0 0.0
        %1422 = vmatpush1.xpose.msra.mxu0 0.0
        %1423 = vmatprep.subr.mxu0 0.0
        %1424 = vmatpush1.xpose.msra.mxu0 0.0
        %1425 = vmatprep.subr.mxu0 0.0
        %1426 = vmatpush1.xpose.msra.mxu0 0.0
        %1427 = vmatprep.subr.mxu0 0.0
        %1428 = vmatpush1.xpose.msra.mxu0 0.0
        %1429 = vmatprep.subr.mxu0 0.0
        %1430 = vmatpush1.xpose.msra.mxu0 0.0
        %1431 = vmatprep.subr.mxu0 0.0
        %1432 = vmatpush1.xpose.msra.mxu0 0.0
        %1433 = vmatprep.subr.mxu0 0.0
        %1434 = vmatpush1.xpose.msra.mxu0 0.0
        %1435 = vmatprep.subr.mxu0 0.0
        %1436 = vmatpush1.xpose.msra.mxu0 0.0
        %1437 = vmatprep.subr.mxu0 0.0
        %1438 = vmatpush1.xpose.msra.mxu0 0.0
        %1439 = vmatprep.subr.mxu0 0.0
        %1440 = vmatpush1.xpose.msra.mxu0 0.0
        %1441 = vmatprep.subr.mxu0 0.0
        %1442 = vmatpush1.xpose.msra.mxu0 0.0
        %1443 = vmatprep.subr.mxu0 0.0
        %1444 = vmatpush1.xpose.msra.mxu0 0.0
        %1445 = vmatprep.subr.mxu0 0.0
        %1446 = vmatpush1.xpose.msra.mxu0 0.0
        %1447 = vmatprep.subr.mxu0 0.0
        %1448 = vmatpush1.xpose.msra.mxu0 0.0
        %1449 = vmatprep.subr.mxu0 0.0
        %1450 = vmatpush1.xpose.msra.mxu0 0.0
        %1451 = vmatprep.subr.mxu0 0.0
        %1452 = vmatpush1.xpose.msra.mxu0 0.0
        %1453 = vmatprep.subr.mxu0 0.0
        %1454 = vmatpush1.xpose.msra.mxu0 0.0
        %1455 = vmatprep.subr.mxu0 0.0
        %1456 = vmatpush1.xpose.msra.mxu0 0.0
        %1457 = vmatprep.subr.mxu0 0.0
        %1458 = vmatpush1.xpose.msra.mxu0 0.0
        %1459 = vmatprep.mubr.f32.mxu0 0.0
        %1460 = vmatmul.mubr.f32.gmra.mrb[0].mxu0 %v1387
        %v1461 = vpop.f32.mrb[0].mxu0
        %v1462 = vadd.f32 %v1301, %v1461
        %v1463 = vpop.f32.mrb[0].mxu0
        %1464 = vmatprep.mubr.f32.mxu0 0.0
        %1465 = vmatmul.mubr.f32.gmra.mrb[0].mxu0 %v1389
        %v1466 = vpop.f32.mrb[0].mxu0
        %v1467 = vadd.f32 %v1302, %v1466
        %v1468 = vpop.f32.mrb[0].mxu0
        %1469 = vdwg.mxu0
        %v1470 = vsel %vm1303, %v1260, 0
        %v1472 = vsel %vm1303, %v1262, 0
        %v1474 = vsel %vm1303, %v1274, 0
        %v1476 = vsel %vm1303, %v1276, 0
        %1478 = vmatprep.subr.mxu0 0.0
        %1479 = vmatpush1.xpose.msra.mxu0 %v1474
        %1480 = vmatprep.subr.mxu0 0.0
        %1481 = vmatpush1.xpose.msra.mxu0 %v1476
        %1482 = vmatprep.subr.mxu0 0.0
        %1483 = vmatpush1.xpose.msra.mxu0 0.0
        %1484 = vmatprep.subr.mxu0 0.0
        %1485 = vmatpush1.xpose.msra.mxu0 0.0
        %1486 = vmatprep.subr.mxu0 0.0
        %1487 = vmatpush1.xpose.msra.mxu0 0.0
        %1488 = vmatprep.subr.mxu0 0.0
        %1489 = vmatpush1.xpose.msra.mxu0 0.0
        %1490 = vmatprep.subr.mxu0 0.0
        %1491 = vmatpush1.xpose.msra.mxu0 0.0
        %1492 = vmatprep.subr.mxu0 0.0
        %1493 = vmatpush1.xpose.msra.mxu0 0.0
        %1494 = vmatprep.subr.mxu0 0.0
        %1495 = vmatpush1.xpose.msra.mxu0 0.0
        %1496 = vmatprep.subr.mxu0 0.0
        %1497 = vmatpush1.xpose.msra.mxu0 0.0
        %1498 = vmatprep.subr.mxu0 0.0
        %1499 = vmatpush1.xpose.msra.mxu0 0.0
        %1500 = vmatprep.subr.mxu0 0.0
        %1501 = vmatpush1.xpose.msra.mxu0 0.0
        %1502 = vmatprep.subr.mxu0 0.0
        %1503 = vmatpush1.xpose.msra.mxu0 0.0
        %1504 = vmatprep.subr.mxu0 0.0
        %1505 = vmatpush1.xpose.msra.mxu0 0.0
        %1506 = vmatprep.subr.mxu0 0.0
        %1507 = vmatpush1.xpose.msra.mxu0 0.0
        %1508 = vmatprep.subr.mxu0 0.0
        %1509 = vmatpush1.xpose.msra.mxu0 0.0
        %1510 = vmatprep.subr.mxu0 0.0
        %1511 = vmatpush1.xpose.msra.mxu0 0.0
        %1512 = vmatprep.subr.mxu0 0.0
        %1513 = vmatpush1.xpose.msra.mxu0 0.0
        %1514 = vmatprep.subr.mxu0 0.0
        %1515 = vmatpush1.xpose.msra.mxu0 0.0
        %1516 = vmatprep.subr.mxu0 0.0
        %1517 = vmatpush1.xpose.msra.mxu0 0.0
        %1518 = vmatprep.subr.mxu0 0.0
        %1519 = vmatpush1.xpose.msra.mxu0 0.0
        %1520 = vmatprep.subr.mxu0 0.0
        %1521 = vmatpush1.xpose.msra.mxu0 0.0
        %1522 = vmatprep.subr.mxu0 0.0
        %1523 = vmatpush1.xpose.msra.mxu0 0.0
        %1524 = vmatprep.subr.mxu0 0.0
        %1525 = vmatpush1.xpose.msra.mxu0 0.0
        %1526 = vmatprep.subr.mxu0 0.0
        %1527 = vmatpush1.xpose.msra.mxu0 0.0
        %1528 = vmatprep.subr.mxu0 0.0
        %1529 = vmatpush1.xpose.msra.mxu0 0.0
        %1530 = vmatprep.subr.mxu0 0.0
        %1531 = vmatpush1.xpose.msra.mxu0 0.0
        %1532 = vmatprep.subr.mxu0 0.0
        %1533 = vmatpush1.xpose.msra.mxu0 0.0
        %1534 = vmatprep.subr.mxu0 0.0
        %1535 = vmatpush1.xpose.msra.mxu0 0.0
        %1536 = vmatprep.subr.mxu0 0.0
        %1537 = vmatpush1.xpose.msra.mxu0 0.0
        %1538 = vmatprep.subr.mxu0 0.0
        %1539 = vmatpush1.xpose.msra.mxu0 0.0
        %1540 = vmatprep.subr.mxu0 0.0
        %1541 = vmatpush1.xpose.msra.mxu0 0.0
        %1542 = vmatprep.mubr.f32.mxu0 0.0
        %1543 = vmatmul.mubr.f32.gmra.mrb[0].mxu0 %v1470
        %v1544 = vpop.f32.mrb[0].mxu0
        %v1545 = vadd.f32 %v1301, %v1544
        %v1546 = vpop.f32.mrb[0].mxu0
        %1547 = vmatprep.mubr.f32.mxu0 0.0
        %1548 = vmatmul.mubr.f32.gmra.mrb[0].mxu0 %v1472
        %v1549 = vpop.f32.mrb[0].mxu0
        %v1550 = vadd.f32 %v1302, %v1549
        %v1551 = vpop.f32.mrb[0].mxu0
        %1552 = vdwg.mxu0
        %v1553 = vsel %vm1303, %v1264, 0
        %v1555 = vsel %vm1303, %v1266, 0
        %v1557 = vsel %vm1303, %v1278, 0
        %v1559 = vsel %vm1303, %v1280, 0
        %1561 = vmatprep.subr.mxu0 0.0
        %1562 = vmatpush1.xpose.msra.mxu0 %v1557
        %1563 = vmatprep.subr.mxu0 0.0
        %1564 = vmatpush1.xpose.msra.mxu0 %v1559
        %1565 = vmatprep.subr.mxu0 0.0
        %1566 = vmatpush1.xpose.msra.mxu0 0.0
        %1567 = vmatprep.subr.mxu0 0.0
        %1568 = vmatpush1.xpose.msra.mxu0 0.0
        %1569 = vmatprep.subr.mxu0 0.0
        %1570 = vmatpush1.xpose.msra.mxu0 0.0
        %1571 = vmatprep.subr.mxu0 0.0
        %1572 = vmatpush1.xpose.msra.mxu0 0.0
        %1573 = vmatprep.subr.mxu0 0.0
        %1574 = vmatpush1.xpose.msra.mxu0 0.0
        %1575 = vmatprep.subr.mxu0 0.0
        %1576 = vmatpush1.xpose.msra.mxu0 0.0
        %1577 = vmatprep.subr.mxu0 0.0
        %1578 = vmatpush1.xpose.msra.mxu0 0.0
        %1579 = vmatprep.subr.mxu0 0.0
        %1580 = vmatpush1.xpose.msra.mxu0 0.0
        %1581 = vmatprep.subr.mxu0 0.0
        %1582 = vmatpush1.xpose.msra.mxu0 0.0
        %1583 = vmatprep.subr.mxu0 0.0
        %1584 = vmatpush1.xpose.msra.mxu0 0.0
        %1585 = vmatprep.subr.mxu0 0.0
        %1586 = vmatpush1.xpose.msra.mxu0 0.0
        %1587 = vmatprep.subr.mxu0 0.0
        %1588 = vmatpush1.xpose.msra.mxu0 0.0
        %1589 = vmatprep.subr.mxu0 0.0
        %1590 = vmatpush1.xpose.msra.mxu0 0.0
        %1591 = vmatprep.subr.mxu0 0.0
        %1592 = vmatpush1.xpose.msra.mxu0 0.0
        %1593 = vmatprep.subr.mxu0 0.0
        %1594 = vmatpush1.xpose.msra.mxu0 0.0
        %1595 = vmatprep.subr.mxu0 0.0
        %1596 = vmatpush1.xpose.msra.mxu0 0.0
        %1597 = vmatprep.subr.mxu0 0.0
        %1598 = vmatpush1.xpose.msra.mxu0 0.0
        %1599 = vmatprep.subr.mxu0 0.0
        %1600 = vmatpush1.xpose.msra.mxu0 0.0
        %1601 = vmatprep.subr.mxu0 0.0
        %1602 = vmatpush1.xpose.msra.mxu0 0.0
        %1603 = vmatprep.subr.mxu0 0.0
        %1604 = vmatpush1.xpose.msra.mxu0 0.0
        %1605 = vmatprep.subr.mxu0 0.0
        %1606 = vmatpush1.xpose.msra.mxu0 0.0
        %1607 = vmatprep.subr.mxu0 0.0
        %1608 = vmatpush1.xpose.msra.mxu0 0.0
        %1609 = vmatprep.subr.mxu0 0.0
        %1610 = vmatpush1.xpose.msra.mxu0 0.0
        %1611 = vmatprep.subr.mxu0 0.0
        %1612 = vmatpush1.xpose.msra.mxu0 0.0
        %1613 = vmatprep.subr.mxu0 0.0
        %1614 = vmatpush1.xpose.msra.mxu0 0.0
        %1615 = vmatprep.subr.mxu0 0.0
        %1616 = vmatpush1.xpose.msra.mxu0 0.0
        %1617 = vmatprep.subr.mxu0 0.0
        %1618 = vmatpush1.xpose.msra.mxu0 0.0
        %1619 = vmatprep.subr.mxu0 0.0
        %1620 = vmatpush1.xpose.msra.mxu0 0.0
        %1621 = vmatprep.subr.mxu0 0.0
        %1622 = vmatpush1.xpose.msra.mxu0 0.0
        %1623 = vmatprep.subr.mxu0 0.0
        %1624 = vmatpush1.xpose.msra.mxu0 0.0
        %1625 = vmatprep.mubr.f32.mxu0 0.0
        %1626 = vmatmul.mubr.f32.gmra.mrb[0].mxu0 %v1553
        %v1627 = vpop.f32.mrb[0].mxu0
        %v1628 = vadd.f32 %v1301, %v1627
        %v1629 = vpop.f32.mrb[0].mxu0
        %1630 = vmatprep.mubr.f32.mxu0 0.0
        %1631 = vmatmul.mubr.f32.gmra.mrb[0].mxu0 %v1555
        %v1632 = vpop.f32.mrb[0].mxu0
        %v1633 = vadd.f32 %v1302, %v1632
        %v1634 = vpop.f32.mrb[0].mxu0
        %1635 = vdwg.mxu0
        %vm1636 = vcmask 130048
        %v1637 = vsel %vm1636, %v1379, -inf
        %1638 = vmax.xlane.f32.xlu0 %v1637
        %v1639 = vpop.xlane.xlu0 %1638
        %v1640 = vsel %vm1636, %v1384, -inf
        %1641 = vmax.xlane.f32.xlu0 %v1640
        %v1642 = vpop.xlane.xlu0 %1641
        %v1643 = vsel %vm1636, %v1462, -inf
        %1644 = vmax.xlane.f32.xlu0 %v1643
        %v1645 = vpop.xlane.xlu0 %1644
        %v1646 = vsel %vm1636, %v1467, -inf
        %1647 = vmax.xlane.f32.xlu0 %v1646
        %v1648 = vpop.xlane.xlu0 %1647
        %v1649 = vsel %vm1636, %v1545, -inf
        %1650 = vmax.xlane.f32.xlu0 %v1649
        %v1651 = vpop.xlane.xlu0 %1650
        %v1652 = vsel %vm1636, %v1550, -inf
        %1653 = vmax.xlane.f32.xlu0 %v1652
        %v1654 = vpop.xlane.xlu0 %1653
        %v1655 = vsel %vm1636, %v1628, -inf
        %1656 = vmax.xlane.f32.xlu0 %v1655
        %v1657 = vpop.xlane.xlu0 %1656
        %v1658 = vsel %vm1636, %v1633, -inf
        %1659 = vmax.xlane.f32.xlu0 %v1658
        %v1660 = vpop.xlane.xlu0 %1659
        %v1661 = vsub.f32 %v1379, %v1639
        %v1662 = vsub.f32 %v1384, %v1642
        %v1663 = vsub.f32 %v1462, %v1645
        %v1664 = vsub.f32 %v1467, %v1648
        %v1665 = vsub.f32 %v1545, %v1651
        %v1666 = vsub.f32 %v1550, %v1654
        %v1667 = vsub.f32 %v1628, %v1657
        %v1668 = vsub.f32 %v1633, %v1660
        %v1669 = vmul.f32 %v1661, 1.442695
        %v1670 = vpow.pop %v1669
        %v1671 = vmul.f32 %v1662, 1.442695
        %v1672 = vpow.pop %v1671
        %v1673 = vmul.f32 %v1663, 1.442695
        %v1674 = vpow.pop %v1673
        %v1675 = vmul.f32 %v1664, 1.442695
        %v1676 = vpow.pop %v1675
        %v1677 = vmul.f32 %v1665, 1.442695
        %v1678 = vpow.pop %v1677
        %v1679 = vmul.f32 %v1666, 1.442695
        %v1680 = vpow.pop %v1679
        %v1681 = vmul.f32 %v1667, 1.442695
        %v1682 = vpow.pop %v1681
        %v1683 = vmul.f32 %v1668, 1.442695
        %v1684 = vpow.pop %v1683
        %v1685 = vsel %vm1636, %v1670, 0.0
        %1686 = vadd.xlane.f32.xlu0 %v1685
        %v1687 = vpop.xlane.xlu0 %1686
        %v1688 = vsel %vm1636, %v1672, 0.0
        %1689 = vadd.xlane.f32.xlu0 %v1688
        %v1690 = vpop.xlane.xlu0 %1689
        %v1691 = vsel %vm1636, %v1674, 0.0
        %1692 = vadd.xlane.f32.xlu0 %v1691
        %v1693 = vpop.xlane.xlu0 %1692
        %v1694 = vsel %vm1636, %v1676, 0.0
        %1695 = vadd.xlane.f32.xlu0 %v1694
        %v1696 = vpop.xlane.xlu0 %1695
        %v1697 = vsel %vm1636, %v1678, 0.0
        %1698 = vadd.xlane.f32.xlu0 %v1697
        %v1699 = vpop.xlane.xlu0 %1698
        %v1700 = vsel %vm1636, %v1680, 0.0
        %1701 = vadd.xlane.f32.xlu0 %v1700
        %v1702 = vpop.xlane.xlu0 %1701
        %v1703 = vsel %vm1636, %v1682, 0.0
        %1704 = vadd.xlane.f32.xlu0 %v1703
        %v1705 = vpop.xlane.xlu0 %1704
        %v1706 = vsel %vm1636, %v1684, 0.0
        %1707 = vadd.xlane.f32.xlu0 %v1706
        %v1708 = vpop.xlane.xlu0 %1707
        %v1709 = vrcp.pop %v1687
        %v1710 = vmul.f32 %v1670, %v1709
        %v1711 = vrcp.pop %v1690
        %v1712 = vmul.f32 %v1672, %v1711
        %v1713 = vrcp.pop %v1693
        %v1714 = vmul.f32 %v1674, %v1713
        %v1715 = vrcp.pop %v1696
        %v1716 = vmul.f32 %v1676, %v1715
        %v1717 = vrcp.pop %v1699
        %v1718 = vmul.f32 %v1678, %v1717
        %v1719 = vrcp.pop %v1702
        %v1720 = vmul.f32 %v1680, %v1719
        %v1721 = vrcp.pop %v1705
        %v1722 = vmul.f32 %v1682, %v1721
        %v1723 = vrcp.pop %v1708
        %v1724 = vmul.f32 %v1684, %v1723
        %p1725 = scmp.eq.s32.totalorder %s44, 2
        // Predicated region
        $region121: #{model_forward.1} parent=99 // pred_check
          %p1726 = pneg %p1725
        $region122: #{model_forward.1} parent=99 // pred_check_branch
          %1728 = sbr.rel (%p1726) target = $region124
        $region123: #{model_forward.1} parent=99 // pred_region
          %1729 = vst.msk [vmem:[%s21] sm:$0xff] %vm1636, %v1710
          %1730 = vst.msk [vmem:[%s21 + $0x8] sm:$0xff] %vm1636, %v1712
          %1731 = vst.msk [vmem:[%s21 + $0x10] sm:$0xff] %vm1636, %v1714
          %1732 = vst.msk [vmem:[%s21 + $0x18] sm:$0xff] %vm1636, %v1716
          %1733 = vst.msk [vmem:[%s21 + $0x20] sm:$0xff] %vm1636, %v1718
          %1734 = vst.msk [vmem:[%s21 + $0x28] sm:$0xff] %vm1636, %v1720
          %1735 = vst.msk [vmem:[%s21 + $0x30] sm:$0xff] %vm1636, %v1722
          %1736 = vst.msk [vmem:[%s21 + $0x38] sm:$0xff] %vm1636, %v1724
        $region124: #{model_forward.1} parent=99 // pred_fallthru
          _
        %v1738 = vsel %vm1636, %v1710, 0
        %v1741 = vsel %vm1636, %v1712, 0
        %1743 = vmatprep.subr.mxu0 0.0
        %1744 = vmatpush1.msra.mxu0 %v1243
        %1745 = vmatprep.subr.mxu0 0.0
        %1746 = vmatpush1.msra.mxu0 %v1248
        %1747 = vmatprep.subr.mxu0 0.0
        %1748 = vmatpush1.msra.mxu0 0.0
        %1749 = vmatprep.subr.mxu0 0.0
        %1750 = vmatpush1.msra.mxu0 0.0
        %1751 = vmatprep.subr.mxu0 0.0
        %1752 = vmatpush1.msra.mxu0 0.0
        %1753 = vmatprep.subr.mxu0 0.0
        %1754 = vmatpush1.msra.mxu0 0.0
        %1755 = vmatprep.subr.mxu0 0.0
        %1756 = vmatpush1.msra.mxu0 0.0
        %1757 = vmatprep.subr.mxu0 0.0
        %1758 = vmatpush1.msra.mxu0 0.0
        %1759 = vmatprep.subr.mxu0 0.0
        %1760 = vmatpush1.msra.mxu0 0.0
        %1761 = vmatprep.subr.mxu0 0.0
        %1762 = vmatpush1.msra.mxu0 0.0
        %1763 = vmatprep.subr.mxu0 0.0
        %1764 = vmatpush1.msra.mxu0 0.0
        %1765 = vmatprep.subr.mxu0 0.0
        %1766 = vmatpush1.msra.mxu0 0.0
        %1767 = vmatprep.subr.mxu0 0.0
        %1768 = vmatpush1.msra.mxu0 0.0
        %1769 = vmatprep.subr.mxu0 0.0
        %1770 = vmatpush1.msra.mxu0 0.0
        %1771 = vmatprep.subr.mxu0 0.0
        %1772 = vmatpush1.msra.mxu0 0.0
        %1773 = vmatprep.subr.mxu0 0.0
        %1774 = vmatpush1.msra.mxu0 0.0
        %1775 = vmatprep.subr.mxu0 0.0
        %1776 = vmatpush1.msra.mxu0 0.0
        %1777 = vmatprep.subr.mxu0 0.0
        %1778 = vmatpush1.msra.mxu0 0.0
        %1779 = vmatprep.subr.mxu0 0.0
        %1780 = vmatpush1.msra.mxu0 0.0
        %1781 = vmatprep.subr.mxu0 0.0
        %1782 = vmatpush1.msra.mxu0 0.0
        %1783 = vmatprep.subr.mxu0 0.0
        %1784 = vmatpush1.msra.mxu0 0.0
        %1785 = vmatprep.subr.mxu0 0.0
        %1786 = vmatpush1.msra.mxu0 0.0
        %1787 = vmatprep.subr.mxu0 0.0
        %1788 = vmatpush1.msra.mxu0 0.0
        %1789 = vmatprep.subr.mxu0 0.0
        %1790 = vmatpush1.msra.mxu0 0.0
        %1791 = vmatprep.subr.mxu0 0.0
        %1792 = vmatpush1.msra.mxu0 0.0
        %1793 = vmatprep.subr.mxu0 0.0
        %1794 = vmatpush1.msra.mxu0 0.0
        %1795 = vmatprep.subr.mxu0 0.0
        %1796 = vmatpush1.msra.mxu0 0.0
        %1797 = vmatprep.subr.mxu0 0.0
        %1798 = vmatpush1.msra.mxu0 0.0
        %1799 = vmatprep.subr.mxu0 0.0
        %1800 = vmatpush1.msra.mxu0 0.0
        %1801 = vmatprep.subr.mxu0 0.0
        %1802 = vmatpush1.msra.mxu0 0.0
        %1803 = vmatprep.subr.mxu0 0.0
        %1804 = vmatpush1.msra.mxu0 0.0
        %1805 = vmatprep.subr.mxu0 0.0
        %1806 = vmatpush1.msra.mxu0 0.0
        %1807 = vmatprep.mubr.f32.mxu0 0.0
        %1808 = vmatmul.mubr.f32.gmra.mrb[0].mxu0 %v1738
        %v1809 = vpop.f32.mrb[0].mxu0
        %v1810 = vadd.f32 0.0, %v1809
        %v1811 = vpop.f32.mrb[0].mxu0
        %1812 = vmatprep.mubr.f32.mxu0 0.0
        %1813 = vmatmul.mubr.f32.gmra.mrb[0].mxu0 %v1741
        %v1814 = vpop.f32.mrb[0].mxu0
        %v1815 = vadd.f32 0.0, %v1814
        %v1816 = vpop.f32.mrb[0].mxu0
        %1817 = vdwg.mxu0
        %v1819 = vsel %vm1636, %v1714, 0
        %v1822 = vsel %vm1636, %v1716, 0
        %1824 = vmatprep.subr.mxu0 0.0
        %1825 = vmatpush1.msra.mxu0 %v1284
        %1826 = vmatprep.subr.mxu0 0.0
        %1827 = vmatpush1.msra.mxu0 %v1286
        %1828 = vmatprep.subr.mxu0 0.0
        %1829 = vmatpush1.msra.mxu0 0.0
        %1830 = vmatprep.subr.mxu0 0.0
        %1831 = vmatpush1.msra.mxu0 0.0
        %1832 = vmatprep.subr.mxu0 0.0
        %1833 = vmatpush1.msra.mxu0 0.0
        %1834 = vmatprep.subr.mxu0 0.0
        %1835 = vmatpush1.msra.mxu0 0.0
        %1836 = vmatprep.subr.mxu0 0.0
        %1837 = vmatpush1.msra.mxu0 0.0
        %1838 = vmatprep.subr.mxu0 0.0
        %1839 = vmatpush1.msra.mxu0 0.0
        %1840 = vmatprep.subr.mxu0 0.0
        %1841 = vmatpush1.msra.mxu0 0.0
        %1842 = vmatprep.subr.mxu0 0.0
        %1843 = vmatpush1.msra.mxu0 0.0
        %1844 = vmatprep.subr.mxu0 0.0
        %1845 = vmatpush1.msra.mxu0 0.0
        %1846 = vmatprep.subr.mxu0 0.0
        %1847 = vmatpush1.msra.mxu0 0.0
        %1848 = vmatprep.subr.mxu0 0.0
        %1849 = vmatpush1.msra.mxu0 0.0
        %1850 = vmatprep.subr.mxu0 0.0
        %1851 = vmatpush1.msra.mxu0 0.0
        %1852 = vmatprep.subr.mxu0 0.0
        %1853 = vmatpush1.msra.mxu0 0.0
        %1854 = vmatprep.subr.mxu0 0.0
        %1855 = vmatpush1.msra.mxu0 0.0
        %1856 = vmatprep.subr.mxu0 0.0
        %1857 = vmatpush1.msra.mxu0 0.0
        %1858 = vmatprep.subr.mxu0 0.0
        %1859 = vmatpush1.msra.mxu0 0.0
        %1860 = vmatprep.subr.mxu0 0.0
        %1861 = vmatpush1.msra.mxu0 0.0
        %1862 = vmatprep.subr.mxu0 0.0
        %1863 = vmatpush1.msra.mxu0 0.0
        %1864 = vmatprep.subr.mxu0 0.0
        %1865 = vmatpush1.msra.mxu0 0.0
        %1866 = vmatprep.subr.mxu0 0.0
        %1867 = vmatpush1.msra.mxu0 0.0
        %1868 = vmatprep.subr.mxu0 0.0
        %1869 = vmatpush1.msra.mxu0 0.0
        %1870 = vmatprep.subr.mxu0 0.0
        %1871 = vmatpush1.msra.mxu0 0.0
        %1872 = vmatprep.subr.mxu0 0.0
        %1873 = vmatpush1.msra.mxu0 0.0
        %1874 = vmatprep.subr.mxu0 0.0
        %1875 = vmatpush1.msra.mxu0 0.0
        %1876 = vmatprep.subr.mxu0 0.0
        %1877 = vmatpush1.msra.mxu0 0.0
        %1878 = vmatprep.subr.mxu0 0.0
        %1879 = vmatpush1.msra.mxu0 0.0
        %1880 = vmatprep.subr.mxu0 0.0
        %1881 = vmatpush1.msra.mxu0 0.0
        %1882 = vmatprep.subr.mxu0 0.0
        %1883 = vmatpush1.msra.mxu0 0.0
        %1884 = vmatprep.subr.mxu0 0.0
        %1885 = vmatpush1.msra.mxu0 0.0
        %1886 = vmatprep.subr.mxu0 0.0
        %1887 = vmatpush1.msra.mxu0 0.0
        %1888 = vmatprep.mubr.f32.mxu0 0.0
        %1889 = vmatmul.mubr.f32.gmra.mrb[0].mxu0 %v1819
        %v1890 = vpop.f32.mrb[0].mxu0
        %v1891 = vadd.f32 0.0, %v1890
        %v1892 = vpop.f32.mrb[0].mxu0
        %1893 = vmatprep.mubr.f32.mxu0 0.0
        %1894 = vmatmul.mubr.f32.gmra.mrb[0].mxu0 %v1822
        %v1895 = vpop.f32.mrb[0].mxu0
        %v1896 = vadd.f32 0.0, %v1895
        %v1897 = vpop.f32.mrb[0].mxu0
        %1898 = vdwg.mxu0
        %v1900 = vsel %vm1636, %v1718, 0
        %v1903 = vsel %vm1636, %v1720, 0
        %1905 = vmatprep.subr.mxu0 0.0
        %1906 = vmatpush1.msra.mxu0 %v1290
        %1907 = vmatprep.subr.mxu0 0.0
        %1908 = vmatpush1.msra.mxu0 %v1292
        %1909 = vmatprep.subr.mxu0 0.0
        %1910 = vmatpush1.msra.mxu0 0.0
        %1911 = vmatprep.subr.mxu0 0.0
        %1912 = vmatpush1.msra.mxu0 0.0
        %1913 = vmatprep.subr.mxu0 0.0
        %1914 = vmatpush1.msra.mxu0 0.0
        %1915 = vmatprep.subr.mxu0 0.0
        %1916 = vmatpush1.msra.mxu0 0.0
        %1917 = vmatprep.subr.mxu0 0.0
        %1918 = vmatpush1.msra.mxu0 0.0
        %1919 = vmatprep.subr.mxu0 0.0
        %1920 = vmatpush1.msra.mxu0 0.0
        %1921 = vmatprep.subr.mxu0 0.0
        %1922 = vmatpush1.msra.mxu0 0.0
        %1923 = vmatprep.subr.mxu0 0.0
        %1924 = vmatpush1.msra.mxu0 0.0
        %1925 = vmatprep.subr.mxu0 0.0
        %1926 = vmatpush1.msra.mxu0 0.0
        %1927 = vmatprep.subr.mxu0 0.0
        %1928 = vmatpush1.msra.mxu0 0.0
        %1929 = vmatprep.subr.mxu0 0.0
        %1930 = vmatpush1.msra.mxu0 0.0
        %1931 = vmatprep.subr.mxu0 0.0
        %1932 = vmatpush1.msra.mxu0 0.0
        %1933 = vmatprep.subr.mxu0 0.0
        %1934 = vmatpush1.msra.mxu0 0.0
        %1935 = vmatprep.subr.mxu0 0.0
        %1936 = vmatpush1.msra.mxu0 0.0
        %1937 = vmatprep.subr.mxu0 0.0
        %1938 = vmatpush1.msra.mxu0 0.0
        %1939 = vmatprep.subr.mxu0 0.0
        %1940 = vmatpush1.msra.mxu0 0.0
        %1941 = vmatprep.subr.mxu0 0.0
        %1942 = vmatpush1.msra.mxu0 0.0
        %1943 = vmatprep.subr.mxu0 0.0
        %1944 = vmatpush1.msra.mxu0 0.0
        %1945 = vmatprep.subr.mxu0 0.0
        %1946 = vmatpush1.msra.mxu0 0.0
        %1947 = vmatprep.subr.mxu0 0.0
        %1948 = vmatpush1.msra.mxu0 0.0
        %1949 = vmatprep.subr.mxu0 0.0
        %1950 = vmatpush1.msra.mxu0 0.0
        %1951 = vmatprep.subr.mxu0 0.0
        %1952 = vmatpush1.msra.mxu0 0.0
        %1953 = vmatprep.subr.mxu0 0.0
        %1954 = vmatpush1.msra.mxu0 0.0
        %1955 = vmatprep.subr.mxu0 0.0
        %1956 = vmatpush1.msra.mxu0 0.0
        %1957 = vmatprep.subr.mxu0 0.0
        %1958 = vmatpush1.msra.mxu0 0.0
        %1959 = vmatprep.subr.mxu0 0.0
        %1960 = vmatpush1.msra.mxu0 0.0
        %1961 = vmatprep.subr.mxu0 0.0
        %1962 = vmatpush1.msra.mxu0 0.0
        %1963 = vmatprep.subr.mxu0 0.0
        %1964 = vmatpush1.msra.mxu0 0.0
        %1965 = vmatprep.subr.mxu0 0.0
        %1966 = vmatpush1.msra.mxu0 0.0
        %1967 = vmatprep.subr.mxu0 0.0
        %1968 = vmatpush1.msra.mxu0 0.0
        %1969 = vmatprep.mubr.f32.mxu0 0.0
        %1970 = vmatmul.mubr.f32.gmra.mrb[0].mxu0 %v1900
        %v1971 = vpop.f32.mrb[0].mxu0
        %v1972 = vadd.f32 0.0, %v1971
        %v1973 = vpop.f32.mrb[0].mxu0
        %1974 = vmatprep.mubr.f32.mxu0 0.0
        %1975 = vmatmul.mubr.f32.gmra.mrb[0].mxu0 %v1903
        %v1976 = vpop.f32.mrb[0].mxu0
        %v1977 = vadd.f32 0.0, %v1976
        %v1978 = vpop.f32.mrb[0].mxu0
        %1979 = vdwg.mxu0
        %v1981 = vsel %vm1636, %v1722, 0
        %v1984 = vsel %vm1636, %v1724, 0
        %1986 = vmatprep.subr.mxu0 0.0
        %1987 = vmatpush1.msra.mxu0 %v1296
        %1988 = vmatprep.subr.mxu0 0.0
        %1989 = vmatpush1.msra.mxu0 %v1298
        %1990 = vmatprep.subr.mxu0 0.0
        %1991 = vmatpush1.msra.mxu0 0.0
        %1992 = vmatprep.subr.mxu0 0.0
        %1993 = vmatpush1.msra.mxu0 0.0
        %1994 = vmatprep.subr.mxu0 0.0
        %1995 = vmatpush1.msra.mxu0 0.0
        %1996 = vmatprep.subr.mxu0 0.0
        %1997 = vmatpush1.msra.mxu0 0.0
        %1998 = vmatprep.subr.mxu0 0.0
        %1999 = vmatpush1.msra.mxu0 0.0
        %2000 = vmatprep.subr.mxu0 0.0
        %2001 = vmatpush1.msra.mxu0 0.0
        %2002 = vmatprep.subr.mxu0 0.0
        %2003 = vmatpush1.msra.mxu0 0.0
        %2004 = vmatprep.subr.mxu0 0.0
        %2005 = vmatpush1.msra.mxu0 0.0
        %2006 = vmatprep.subr.mxu0 0.0
        %2007 = vmatpush1.msra.mxu0 0.0
        %2008 = vmatprep.subr.mxu0 0.0
        %2009 = vmatpush1.msra.mxu0 0.0
        %2010 = vmatprep.subr.mxu0 0.0
        %2011 = vmatpush1.msra.mxu0 0.0
        %2012 = vmatprep.subr.mxu0 0.0
        %2013 = vmatpush1.msra.mxu0 0.0
        %2014 = vmatprep.subr.mxu0 0.0
        %2015 = vmatpush1.msra.mxu0 0.0
        %2016 = vmatprep.subr.mxu0 0.0
        %2017 = vmatpush1.msra.mxu0 0.0
        %2018 = vmatprep.subr.mxu0 0.0
        %2019 = vmatpush1.msra.mxu0 0.0
        %2020 = vmatprep.subr.mxu0 0.0
        %2021 = vmatpush1.msra.mxu0 0.0
        %2022 = vmatprep.subr.mxu0 0.0
        %2023 = vmatpush1.msra.mxu0 0.0
        %2024 = vmatprep.subr.mxu0 0.0
        %2025 = vmatpush1.msra.mxu0 0.0
        %2026 = vmatprep.subr.mxu0 0.0
        %2027 = vmatpush1.msra.mxu0 0.0
        %2028 = vmatprep.subr.mxu0 0.0
        %2029 = vmatpush1.msra.mxu0 0.0
        %2030 = vmatprep.subr.mxu0 0.0
        %2031 = vmatpush1.msra.mxu0 0.0
        %2032 = vmatprep.subr.mxu0 0.0
        %2033 = vmatpush1.msra.mxu0 0.0
        %2034 = vmatprep.subr.mxu0 0.0
        %2035 = vmatpush1.msra.mxu0 0.0
        %2036 = vmatprep.subr.mxu0 0.0
        %2037 = vmatpush1.msra.mxu0 0.0
        %2038 = vmatprep.subr.mxu0 0.0
        %2039 = vmatpush1.msra.mxu0 0.0
        %2040 = vmatprep.subr.mxu0 0.0
        %2041 = vmatpush1.msra.mxu0 0.0
        %2042 = vmatprep.subr.mxu0 0.0
        %2043 = vmatpush1.msra.mxu0 0.0
        %2044 = vmatprep.subr.mxu0 0.0
        %2045 = vmatpush1.msra.mxu0 0.0
        %2046 = vmatprep.subr.mxu0 0.0
        %2047 = vmatpush1.msra.mxu0 0.0
        %2048 = vmatprep.subr.mxu0 0.0
        %2049 = vmatpush1.msra.mxu0 0.0
        %2050 = vmatprep.mubr.f32.mxu0 0.0
        %2051 = vmatmul.mubr.f32.gmra.mrb[0].mxu0 %v1981
        %v2052 = vpop.f32.mrb[0].mxu0
        %v2053 = vadd.f32 0.0, %v2052
        %v2054 = vpop.f32.mrb[0].mxu0
        %2055 = vmatprep.mubr.f32.mxu0 0.0
        %2056 = vmatmul.mubr.f32.gmra.mrb[0].mxu0 %v1984
        %v2057 = vpop.f32.mrb[0].mxu0
        %v2058 = vadd.f32 0.0, %v2057
        %v2059 = vpop.f32.mrb[0].mxu0
        %2060 = vdwg.mxu0
        %v2061 = vld [vmem:[%s881] sm:$0x1]
        %v2062 = vld [vmem:[%s757] sm:$0xff]
        %v2063 = vld [vmem:[%s757 + $0x8] sm:$0xff]
        %v2064 = vld [vmem:[%s757 + $0x10] sm:$0xff]
        %v2065 = vld [vmem:[%s757 + $0x18] sm:$0xff]
        %v2067 = vsel %vm1303, %v1810, 0
        %v2070 = vsel %vm1303, %v1815, 0
        %2072 = vmatprep.subr.mxu0 0.0
        %2073 = vmatpush1.msra.mxu0 %v2062
        %2074 = vmatprep.subr.mxu0 0.0
        %2075 = vmatpush1.msra.mxu0 %v2063
        %2076 = vmatprep.subr.mxu0 0.0
        %2077 = vmatpush1.msra.mxu0 %v2064
        %2078 = vmatprep.subr.mxu0 0.0
        %2079 = vmatpush1.msra.mxu0 %v2065
        %2080 = vmatprep.subr.mxu0 0.0
        %2081 = vmatpush1.msra.mxu0 0.0
        %2082 = vmatprep.subr.mxu0 0.0
        %2083 = vmatpush1.msra.mxu0 0.0
        %2084 = vmatprep.subr.mxu0 0.0
        %2085 = vmatpush1.msra.mxu0 0.0
        %2086 = vmatprep.subr.mxu0 0.0
        %2087 = vmatpush1.msra.mxu0 0.0
        %2088 = vmatprep.subr.mxu0 0.0
        %2089 = vmatpush1.msra.mxu0 0.0
        %2090 = vmatprep.subr.mxu0 0.0
        %2091 = vmatpush1.msra.mxu0 0.0
        %2092 = vmatprep.subr.mxu0 0.0
        %2093 = vmatpush1.msra.mxu0 0.0
        %2094 = vmatprep.subr.mxu0 0.0
        %2095 = vmatpush1.msra.mxu0 0.0
        %2096 = vmatprep.subr.mxu0 0.0
        %2097 = vmatpush1.msra.mxu0 0.0
        %2098 = vmatprep.subr.mxu0 0.0
        %2099 = vmatpush1.msra.mxu0 0.0
        %2100 = vmatprep.subr.mxu0 0.0
        %2101 = vmatpush1.msra.mxu0 0.0
        %2102 = vmatprep.subr.mxu0 0.0
        %2103 = vmatpush1.msra.mxu0 0.0
        %2104 = vmatprep.subr.mxu0 0.0
        %2105 = vmatpush1.msra.mxu0 0.0
        %2106 = vmatprep.subr.mxu0 0.0
        %2107 = vmatpush1.msra.mxu0 0.0
        %2108 = vmatprep.subr.mxu0 0.0
        %2109 = vmatpush1.msra.mxu0 0.0
        %2110 = vmatprep.subr.mxu0 0.0
        %2111 = vmatpush1.msra.mxu0 0.0
        %2112 = vmatprep.subr.mxu0 0.0
        %2113 = vmatpush1.msra.mxu0 0.0
        %2114 = vmatprep.subr.mxu0 0.0
        %2115 = vmatpush1.msra.mxu0 0.0
        %2116 = vmatprep.subr.mxu0 0.0
        %2117 = vmatpush1.msra.mxu0 0.0
        %2118 = vmatprep.subr.mxu0 0.0
        %2119 = vmatpush1.msra.mxu0 0.0
        %2120 = vmatprep.subr.mxu0 0.0
        %2121 = vmatpush1.msra.mxu0 0.0
        %2122 = vmatprep.subr.mxu0 0.0
        %2123 = vmatpush1.msra.mxu0 0.0
        %2124 = vmatprep.subr.mxu0 0.0
        %2125 = vmatpush1.msra.mxu0 0.0
        %2126 = vmatprep.subr.mxu0 0.0
        %2127 = vmatpush1.msra.mxu0 0.0
        %2128 = vmatprep.subr.mxu0 0.0
        %2129 = vmatpush1.msra.mxu0 0.0
        %2130 = vmatprep.subr.mxu0 0.0
        %2131 = vmatpush1.msra.mxu0 0.0
        %2132 = vmatprep.subr.mxu0 0.0
        %2133 = vmatpush1.msra.mxu0 0.0
        %2134 = vmatprep.subr.mxu0 0.0
        %2135 = vmatpush1.msra.mxu0 0.0
        %2136 = vmatprep.mubr.f32.mxu0 0.0
        %2137 = vmatmul.mubr.f32.gmra.mrb[0].mxu0 %v2067
        %v2138 = vpop.f32.mrb[0].mxu0
        %v2139 = vadd.f32 0.0, %v2138
        %v2140 = vpop.f32.mrb[0].mxu0
        %2141 = vmatprep.mubr.f32.mxu0 0.0
        %2142 = vmatmul.mubr.f32.gmra.mrb[0].mxu0 %v2070
        %v2143 = vpop.f32.mrb[0].mxu0
        %v2144 = vadd.f32 0.0, %v2143
        %v2145 = vpop.f32.mrb[0].mxu0
        %2146 = vdwg.mxu0
        %v2148 = vlaneseq
        %v2149 = vshrl.u32 %v2148, 7
        %v2150 = vsub.s32 0, %v2149
        %v2151 = vrot.slane %v2061, %v2150
        %v2153 = vadd.f32 %v2151, %v2139
        %v2154 = vadd.f32 %v2151, %v2144
        %v2155 = vld [vmem:[%s757 + $0x20] sm:$0xff]
        %v2156 = vld [vmem:[%s757 + $0x28] sm:$0xff]
        %v2157 = vld [vmem:[%s757 + $0x30] sm:$0xff]
        %v2158 = vld [vmem:[%s757 + $0x38] sm:$0xff]
        %v2160 = vsel %vm1303, %v1891, 0
        %v2163 = vsel %vm1303, %v1896, 0
        %2165 = vmatprep.subr.mxu0 0.0
        %2166 = vmatpush1.msra.mxu0 %v2155
        %2167 = vmatprep.subr.mxu0 0.0
        %2168 = vmatpush1.msra.mxu0 %v2156
        %2169 = vmatprep.subr.mxu0 0.0
        %2170 = vmatpush1.msra.mxu0 %v2157
        %2171 = vmatprep.subr.mxu0 0.0
        %2172 = vmatpush1.msra.mxu0 %v2158
        %2173 = vmatprep.subr.mxu0 0.0
        %2174 = vmatpush1.msra.mxu0 0.0
        %2175 = vmatprep.subr.mxu0 0.0
        %2176 = vmatpush1.msra.mxu0 0.0
        %2177 = vmatprep.subr.mxu0 0.0
        %2178 = vmatpush1.msra.mxu0 0.0
        %2179 = vmatprep.subr.mxu0 0.0
        %2180 = vmatpush1.msra.mxu0 0.0
        %2181 = vmatprep.subr.mxu0 0.0
        %2182 = vmatpush1.msra.mxu0 0.0
        %2183 = vmatprep.subr.mxu0 0.0
        %2184 = vmatpush1.msra.mxu0 0.0
        %2185 = vmatprep.subr.mxu0 0.0
        %2186 = vmatpush1.msra.mxu0 0.0
        %2187 = vmatprep.subr.mxu0 0.0
        %2188 = vmatpush1.msra.mxu0 0.0
        %2189 = vmatprep.subr.mxu0 0.0
        %2190 = vmatpush1.msra.mxu0 0.0
        %2191 = vmatprep.subr.mxu0 0.0
        %2192 = vmatpush1.msra.mxu0 0.0
        %2193 = vmatprep.subr.mxu0 0.0
        %2194 = vmatpush1.msra.mxu0 0.0
        %2195 = vmatprep.subr.mxu0 0.0
        %2196 = vmatpush1.msra.mxu0 0.0
        %2197 = vmatprep.subr.mxu0 0.0
        %2198 = vmatpush1.msra.mxu0 0.0
        %2199 = vmatprep.subr.mxu0 0.0
        %2200 = vmatpush1.msra.mxu0 0.0
        %2201 = vmatprep.subr.mxu0 0.0
        %2202 = vmatpush1.msra.mxu0 0.0
        %2203 = vmatprep.subr.mxu0 0.0
        %2204 = vmatpush1.msra.mxu0 0.0
        %2205 = vmatprep.subr.mxu0 0.0
        %2206 = vmatpush1.msra.mxu0 0.0
        %2207 = vmatprep.subr.mxu0 0.0
        %2208 = vmatpush1.msra.mxu0 0.0
        %2209 = vmatprep.subr.mxu0 0.0
        %2210 = vmatpush1.msra.mxu0 0.0
        %2211 = vmatprep.subr.mxu0 0.0
        %2212 = vmatpush1.msra.mxu0 0.0
        %2213 = vmatprep.subr.mxu0 0.0
        %2214 = vmatpush1.msra.mxu0 0.0
        %2215 = vmatprep.subr.mxu0 0.0
        %2216 = vmatpush1.msra.mxu0 0.0
        %2217 = vmatprep.subr.mxu0 0.0
        %2218 = vmatpush1.msra.mxu0 0.0
        %2219 = vmatprep.subr.mxu0 0.0
        %2220 = vmatpush1.msra.mxu0 0.0
        %2221 = vmatprep.subr.mxu0 0.0
        %2222 = vmatpush1.msra.mxu0 0.0
        %2223 = vmatprep.subr.mxu0 0.0
        %2224 = vmatpush1.msra.mxu0 0.0
        %2225 = vmatprep.subr.mxu0 0.0
        %2226 = vmatpush1.msra.mxu0 0.0
        %2227 = vmatprep.subr.mxu0 0.0
        %2228 = vmatpush1.msra.mxu0 0.0
        %2229 = vmatprep.mubr.f32.mxu0 0.0
        %2230 = vmatmul.mubr.f32.gmra.mrb[0].mxu0 %v2160
        %v2231 = vpop.f32.mrb[0].mxu0
        %v2232 = vadd.f32 0.0, %v2231
        %v2233 = vpop.f32.mrb[0].mxu0
        %2234 = vmatprep.mubr.f32.mxu0 0.0
        %2235 = vmatmul.mubr.f32.gmra.mrb[0].mxu0 %v2163
        %v2236 = vpop.f32.mrb[0].mxu0
        %v2237 = vadd.f32 0.0, %v2236
        %v2238 = vpop.f32.mrb[0].mxu0
        %2239 = vdwg.mxu0
        %v2240 = vadd.f32 %v2153, %v2232
        %v2241 = vadd.f32 %v2154, %v2237
        %v2242 = vld [vmem:[%s757 + $0x40] sm:$0xff]
        %v2243 = vld [vmem:[%s757 + $0x48] sm:$0xff]
        %v2244 = vld [vmem:[%s757 + $0x50] sm:$0xff]
        %v2245 = vld [vmem:[%s757 + $0x58] sm:$0xff]
        %v2247 = vsel %vm1303, %v1972, 0
        %v2250 = vsel %vm1303, %v1977, 0
        %2252 = vmatprep.subr.mxu0 0.0
        %2253 = vmatpush1.msra.mxu0 %v2242
        %2254 = vmatprep.subr.mxu0 0.0
        %2255 = vmatpush1.msra.mxu0 %v2243
        %2256 = vmatprep.subr.mxu0 0.0
        %2257 = vmatpush1.msra.mxu0 %v2244
        %2258 = vmatprep.subr.mxu0 0.0
        %2259 = vmatpush1.msra.mxu0 %v2245
        %2260 = vmatprep.subr.mxu0 0.0
        %2261 = vmatpush1.msra.mxu0 0.0
        %2262 = vmatprep.subr.mxu0 0.0
        %2263 = vmatpush1.msra.mxu0 0.0
        %2264 = vmatprep.subr.mxu0 0.0
        %2265 = vmatpush1.msra.mxu0 0.0
        %2266 = vmatprep.subr.mxu0 0.0
        %2267 = vmatpush1.msra.mxu0 0.0
        %2268 = vmatprep.subr.mxu0 0.0
        %2269 = vmatpush1.msra.mxu0 0.0
        %2270 = vmatprep.subr.mxu0 0.0
        %2271 = vmatpush1.msra.mxu0 0.0
        %2272 = vmatprep.subr.mxu0 0.0
        %2273 = vmatpush1.msra.mxu0 0.0
        %2274 = vmatprep.subr.mxu0 0.0
        %2275 = vmatpush1.msra.mxu0 0.0
        %2276 = vmatprep.subr.mxu0 0.0
        %2277 = vmatpush1.msra.mxu0 0.0
        %2278 = vmatprep.subr.mxu0 0.0
        %2279 = vmatpush1.msra.mxu0 0.0
        %2280 = vmatprep.subr.mxu0 0.0
        %2281 = vmatpush1.msra.mxu0 0.0
        %2282 = vmatprep.subr.mxu0 0.0
        %2283 = vmatpush1.msra.mxu0 0.0
        %2284 = vmatprep.subr.mxu0 0.0
        %2285 = vmatpush1.msra.mxu0 0.0
        %2286 = vmatprep.subr.mxu0 0.0
        %2287 = vmatpush1.msra.mxu0 0.0
        %2288 = vmatprep.subr.mxu0 0.0
        %2289 = vmatpush1.msra.mxu0 0.0
        %2290 = vmatprep.subr.mxu0 0.0
        %2291 = vmatpush1.msra.mxu0 0.0
        %2292 = vmatprep.subr.mxu0 0.0
        %2293 = vmatpush1.msra.mxu0 0.0
        %2294 = vmatprep.subr.mxu0 0.0
        %2295 = vmatpush1.msra.mxu0 0.0
        %2296 = vmatprep.subr.mxu0 0.0
        %2297 = vmatpush1.msra.mxu0 0.0
        %2298 = vmatprep.subr.mxu0 0.0
        %2299 = vmatpush1.msra.mxu0 0.0
        %2300 = vmatprep.subr.mxu0 0.0
        %2301 = vmatpush1.msra.mxu0 0.0
        %2302 = vmatprep.subr.mxu0 0.0
        %2303 = vmatpush1.msra.mxu0 0.0
        %2304 = vmatprep.subr.mxu0 0.0
        %2305 = vmatpush1.msra.mxu0 0.0
        %2306 = vmatprep.subr.mxu0 0.0
        %2307 = vmatpush1.msra.mxu0 0.0
        %2308 = vmatprep.subr.mxu0 0.0
        %2309 = vmatpush1.msra.mxu0 0.0
        %2310 = vmatprep.subr.mxu0 0.0
        %2311 = vmatpush1.msra.mxu0 0.0
        %2312 = vmatprep.subr.mxu0 0.0
        %2313 = vmatpush1.msra.mxu0 0.0
        %2314 = vmatprep.subr.mxu0 0.0
        %2315 = vmatpush1.msra.mxu0 0.0
        %2316 = vmatprep.mubr.f32.mxu0 0.0
        %2317 = vmatmul.mubr.f32.gmra.mrb[0].mxu0 %v2247
        %v2318 = vpop.f32.mrb[0].mxu0
        %v2319 = vadd.f32 0.0, %v2318
        %v2320 = vpop.f32.mrb[0].mxu0
        %2321 = vmatprep.mubr.f32.mxu0 0.0
        %2322 = vmatmul.mubr.f32.gmra.mrb[0].mxu0 %v2250
        %v2323 = vpop.f32.mrb[0].mxu0
        %v2324 = vadd.f32 0.0, %v2323
        %v2325 = vpop.f32.mrb[0].mxu0
        %2326 = vdwg.mxu0
        %v2327 = vadd.f32 %v2240, %v2319
        %v2328 = vadd.f32 %v2241, %v2324
        %v2329 = vld [vmem:[%s757 + $0x60] sm:$0xff]
        %v2330 = vld [vmem:[%s757 + $0x68] sm:$0xff]
        %v2331 = vld [vmem:[%s757 + $0x70] sm:$0xff]
        %v2332 = vld [vmem:[%s757 + $0x78] sm:$0xff]
        %v2334 = vsel %vm1303, %v2053, 0
        %v2337 = vsel %vm1303, %v2058, 0
        %2339 = vmatprep.subr.mxu0 0.0
        %2340 = vmatpush1.msra.mxu0 %v2329
        %2341 = vmatprep.subr.mxu0 0.0
        %2342 = vmatpush1.msra.mxu0 %v2330
        %2343 = vmatprep.subr.mxu0 0.0
        %2344 = vmatpush1.msra.mxu0 %v2331
        %2345 = vmatprep.subr.mxu0 0.0
        %2346 = vmatpush1.msra.mxu0 %v2332
        %2347 = vmatprep.subr.mxu0 0.0
        %2348 = vmatpush1.msra.mxu0 0.0
        %2349 = vmatprep.subr.mxu0 0.0
        %2350 = vmatpush1.msra.mxu0 0.0
        %2351 = vmatprep.subr.mxu0 0.0
        %2352 = vmatpush1.msra.mxu0 0.0
        %2353 = vmatprep.subr.mxu0 0.0
        %2354 = vmatpush1.msra.mxu0 0.0
        %2355 = vmatprep.subr.mxu0 0.0
        %2356 = vmatpush1.msra.mxu0 0.0
        %2357 = vmatprep.subr.mxu0 0.0
        %2358 = vmatpush1.msra.mxu0 0.0
        %2359 = vmatprep.subr.mxu0 0.0
        %2360 = vmatpush1.msra.mxu0 0.0
        %2361 = vmatprep.subr.mxu0 0.0
        %2362 = vmatpush1.msra.mxu0 0.0
        %2363 = vmatprep.subr.mxu0 0.0
        %2364 = vmatpush1.msra.mxu0 0.0
        %2365 = vmatprep.subr.mxu0 0.0
        %2366 = vmatpush1.msra.mxu0 0.0
        %2367 = vmatprep.subr.mxu0 0.0
        %2368 = vmatpush1.msra.mxu0 0.0
        %2369 = vmatprep.subr.mxu0 0.0
        %2370 = vmatpush1.msra.mxu0 0.0
        %2371 = vmatprep.subr.mxu0 0.0
        %2372 = vmatpush1.msra.mxu0 0.0
        %2373 = vmatprep.subr.mxu0 0.0
        %2374 = vmatpush1.msra.mxu0 0.0
        %2375 = vmatprep.subr.mxu0 0.0
        %2376 = vmatpush1.msra.mxu0 0.0
        %2377 = vmatprep.subr.mxu0 0.0
        %2378 = vmatpush1.msra.mxu0 0.0
        %2379 = vmatprep.subr.mxu0 0.0
        %2380 = vmatpush1.msra.mxu0 0.0
        %2381 = vmatprep.subr.mxu0 0.0
        %2382 = vmatpush1.msra.mxu0 0.0
        %2383 = vmatprep.subr.mxu0 0.0
        %2384 = vmatpush1.msra.mxu0 0.0
        %2385 = vmatprep.subr.mxu0 0.0
        %2386 = vmatpush1.msra.mxu0 0.0
        %2387 = vmatprep.subr.mxu0 0.0
        %2388 = vmatpush1.msra.mxu0 0.0
        %2389 = vmatprep.subr.mxu0 0.0
        %2390 = vmatpush1.msra.mxu0 0.0
        %2391 = vmatprep.subr.mxu0 0.0
        %2392 = vmatpush1.msra.mxu0 0.0
        %2393 = vmatprep.subr.mxu0 0.0
        %2394 = vmatpush1.msra.mxu0 0.0
        %2395 = vmatprep.subr.mxu0 0.0
        %2396 = vmatpush1.msra.mxu0 0.0
        %2397 = vmatprep.subr.mxu0 0.0
        %2398 = vmatpush1.msra.mxu0 0.0
        %2399 = vmatprep.subr.mxu0 0.0
        %2400 = vmatpush1.msra.mxu0 0.0
        %2401 = vmatprep.subr.mxu0 0.0
        %2402 = vmatpush1.msra.mxu0 0.0
        %2403 = vmatprep.mubr.f32.mxu0 0.0
        %2404 = vmatmul.mubr.f32.gmra.mrb[0].mxu0 %v2334
        %v2405 = vpop.f32.mrb[0].mxu0
        %v2406 = vadd.f32 0.0, %v2405
        %v2407 = vpop.f32.mrb[0].mxu0
        %2408 = vmatprep.mubr.f32.mxu0 0.0
        %2409 = vmatmul.mubr.f32.gmra.mrb[0].mxu0 %v2337
        %v2410 = vpop.f32.mrb[0].mxu0
        %v2411 = vadd.f32 0.0, %v2410
        %v2412 = vpop.f32.mrb[0].mxu0
        %2413 = vdwg.mxu0
        %v2414 = vadd.f32 %v2327, %v2406
        %v2415 = vadd.f32 %v2328, %v2411
        %v2416 = vadd.f32 %v987, %v2414
        %v2417 = vadd.f32 %v988, %v2415
        %v2418 = vld [vmem:[%s884] sm:$0x1]
        %v2419 = vld [vmem:[%s887] sm:$0x1]
        %2420 = vadd.xlane.f32.xlu0 %v2416
        %v2421 = vpop.xlane.xlu0 %2420
        %2422 = vadd.xlane.f32.xlu0 %v2417
        %v2423 = vpop.xlane.xlu0 %2422
        %v2424 = vmul.f32 %v2421, %v995
        %v2425 = vmul.f32 %v2423, %v995
        %v2426 = vmul.f32 %v2416, %v2416
        %v2427 = vmul.f32 %v2417, %v2417
        %2428 = vadd.xlane.f32.xlu0 %v2426
        %v2429 = vpop.xlane.xlu0 %2428
        %2430 = vadd.xlane.f32.xlu0 %v2427
        %v2431 = vpop.xlane.xlu0 %2430
        %v2432 = vmul.f32 %v2429, %v995
        %v2433 = vmul.f32 %v2431, %v995
        %v2434 = vmul.f32 %v2424, %v2424
        %v2435 = vmul.f32 %v2425, %v2425
        %v2436 = vsub.f32 %v2432, %v2434
        %v2437 = vsub.f32 %v2433, %v2435
        %v2438 = vsub.f32 %v2416, %v2424
        %v2439 = vsub.f32 %v2417, %v2425
        %v2440 = vadd.f32 %v2436, 1e-05
        %v2441 = vadd.f32 %v2437, 1e-05
        %v2442 = vrsqrt.pop %v2440
        %v2443 = vrsqrt.pop %v2441
        %v2444 = vmul.f32 %v2438, %v2442
        %v2445 = vmul.f32 %v2439, %v2443
        %v2447 = vlaneseq
        %v2448 = vshrl.u32 %v2447, 7
        %v2449 = vsub.s32 0, %v2448
        %v2450 = vrot.slane %v2418, %v2449
        %v2452 = vmul.f32 %v2444, %v2450
        %v2453 = vmul.f32 %v2445, %v2450
        %v2455 = vlaneseq
        %v2456 = vshrl.u32 %v2455, 7
        %v2457 = vsub.s32 0, %v2456
        %v2458 = vrot.slane %v2419, %v2457
        %v2460 = vadd.f32 %v2452, %v2458
        %v2461 = vadd.f32 %v2453, %v2458
        %v2462 = vld [vmem:[%s766] sm:$0xff]
        %v2463 = vld [vmem:[%s766 + $0x8] sm:$0xff]
        %v2464 = vld [vmem:[%s766 + $0x10] sm:$0xff]
        %v2465 = vld [vmem:[%s766 + $0x18] sm:$0xff]
        %v2466 = vld [vmem:[%s766 + $0x20] sm:$0xff]
        %v2467 = vld [vmem:[%s766 + $0x28] sm:$0xff]
        %v2468 = vld [vmem:[%s766 + $0x30] sm:$0xff]
        %v2469 = vld [vmem:[%s766 + $0x38] sm:$0xff]
        %v2470 = vld [vmem:[%s766 + $0x40] sm:$0xff]
        %v2471 = vld [vmem:[%s766 + $0x48] sm:$0xff]
        %v2472 = vld [vmem:[%s766 + $0x50] sm:$0xff]
        %v2473 = vld [vmem:[%s766 + $0x58] sm:$0xff]
        %v2474 = vld [vmem:[%s766 + $0x60] sm:$0xff]
        %v2475 = vld [vmem:[%s766 + $0x68] sm:$0xff]
        %v2476 = vld [vmem:[%s766 + $0x70] sm:$0xff]
        %v2477 = vld [vmem:[%s766 + $0x78] sm:$0xff]
        %v2478 = vld [vmem:[%s890] sm:$0x1]
        %v2480 = vlaneseq
        %v2481 = vshrl.u32 %v2480, 7
        %v2482 = vsub.s32 0, %v2481
        %v2483 = vrot.slane %v2478, %v2482
        %2485 = vmatprep.subr.mxu0 0.0
        %2486 = vmatpush1.msra.mxu0 %v2462
        %2487 = vmatprep.subr.mxu0 0.0
        %2488 = vmatpush1.msra.mxu0 %v2463
        %2489 = vmatprep.subr.mxu0 0.0
        %2490 = vmatpush1.msra.mxu0 %v2464
        %2491 = vmatprep.subr.mxu0 0.0
        %2492 = vmatpush1.msra.mxu0 %v2465
        %2493 = vmatprep.subr.mxu0 0.0
        %2494 = vmatpush1.msra.mxu0 %v2466
        %2495 = vmatprep.subr.mxu0 0.0
        %2496 = vmatpush1.msra.mxu0 %v2467
        %2497 = vmatprep.subr.mxu0 0.0
        %2498 = vmatpush1.msra.mxu0 %v2468
        %2499 = vmatprep.subr.mxu0 0.0
        %2500 = vmatpush1.msra.mxu0 %v2469
        %2501 = vmatprep.subr.mxu0 0.0
        %2502 = vmatpush1.msra.mxu0 %v2470
        %2503 = vmatprep.subr.mxu0 0.0
        %2504 = vmatpush1.msra.mxu0 %v2471
        %2505 = vmatprep.subr.mxu0 0.0
        %2506 = vmatpush1.msra.mxu0 %v2472
        %2507 = vmatprep.subr.mxu0 0.0
        %2508 = vmatpush1.msra.mxu0 %v2473
        %2509 = vmatprep.subr.mxu0 0.0
        %2510 = vmatpush1.msra.mxu0 %v2474
        %2511 = vmatprep.subr.mxu0 0.0
        %2512 = vmatpush1.msra.mxu0 %v2475
        %2513 = vmatprep.subr.mxu0 0.0
        %2514 = vmatpush1.msra.mxu0 %v2476
        %2515 = vmatprep.subr.mxu0 0.0
        %2516 = vmatpush1.msra.mxu0 %v2477
        %2517 = vmatprep.subr.mxu0 0.0
        %2518 = vmatpush1.msra.mxu0 0.0
        %2519 = vmatprep.subr.mxu0 0.0
        %2520 = vmatpush1.msra.mxu0 0.0
        %2521 = vmatprep.subr.mxu0 0.0
        %2522 = vmatpush1.msra.mxu0 0.0
        %2523 = vmatprep.subr.mxu0 0.0
        %2524 = vmatpush1.msra.mxu0 0.0
        %2525 = vmatprep.subr.mxu0 0.0
        %2526 = vmatpush1.msra.mxu0 0.0
        %2527 = vmatprep.subr.mxu0 0.0
        %2528 = vmatpush1.msra.mxu0 0.0
        %2529 = vmatprep.subr.mxu0 0.0
        %2530 = vmatpush1.msra.mxu0 0.0
        %2531 = vmatprep.subr.mxu0 0.0
        %2532 = vmatpush1.msra.mxu0 0.0
        %2533 = vmatprep.subr.mxu0 0.0
        %2534 = vmatpush1.msra.mxu0 0.0
        %2535 = vmatprep.subr.mxu0 0.0
        %2536 = vmatpush1.msra.mxu0 0.0
        %2537 = vmatprep.subr.mxu0 0.0
        %2538 = vmatpush1.msra.mxu0 0.0
        %2539 = vmatprep.subr.mxu0 0.0
        %2540 = vmatpush1.msra.mxu0 0.0
        %2541 = vmatprep.subr.mxu0 0.0
        %2542 = vmatpush1.msra.mxu0 0.0
        %2543 = vmatprep.subr.mxu0 0.0
        %2544 = vmatpush1.msra.mxu0 0.0
        %2545 = vmatprep.subr.mxu0 0.0
        %2546 = vmatpush1.msra.mxu0 0.0
        %2547 = vmatprep.subr.mxu0 0.0
        %2548 = vmatpush1.msra.mxu0 0.0
        %2549 = vmatprep.mubr.f32.mxu0 0.0
        %2550 = vmatmul.mubr.f32.gmra.mrb[0].mxu0 %v2460
        %v2551 = vpop.f32.mrb[0].mxu0
        %v2552 = vadd.f32 %v2483, %v2551
        %v2553 = vpop.f32.mrb[0].mxu0
        %2554 = vmatprep.mubr.f32.mxu0 0.0
        %2555 = vmatmul.mubr.f32.gmra.mrb[0].mxu0 %v2461
        %v2556 = vpop.f32.mrb[0].mxu0
        %v2557 = vadd.f32 %v2483, %v2556
        %v2558 = vpop.f32.mrb[0].mxu0
        %2559 = vdwg.mxu0
        %v2560 = vmax.f32 %v2552, 0.0
        %v2561 = vmax.f32 %v2557, 0.0
        %v2562 = vld [vmem:[%s775] sm:$0xff]
        %v2563 = vld [vmem:[%s775 + $0x8] sm:$0xff]
        %v2564 = vld [vmem:[%s775 + $0x10] sm:$0xff]
        %v2565 = vld [vmem:[%s775 + $0x18] sm:$0xff]
        %v2566 = vld [vmem:[%s775 + $0x20] sm:$0xff]
        %v2567 = vld [vmem:[%s775 + $0x28] sm:$0xff]
        %v2568 = vld [vmem:[%s775 + $0x30] sm:$0xff]
        %v2569 = vld [vmem:[%s775 + $0x38] sm:$0xff]
        %v2570 = vld [vmem:[%s775 + $0x40] sm:$0xff]
        %v2571 = vld [vmem:[%s775 + $0x48] sm:$0xff]
        %v2572 = vld [vmem:[%s775 + $0x50] sm:$0xff]
        %v2573 = vld [vmem:[%s775 + $0x58] sm:$0xff]
        %v2574 = vld [vmem:[%s775 + $0x60] sm:$0xff]
        %v2575 = vld [vmem:[%s775 + $0x68] sm:$0xff]
        %v2576 = vld [vmem:[%s775 + $0x70] sm:$0xff]
        %v2577 = vld [vmem:[%s775 + $0x78] sm:$0xff]
        %v2578 = vld [vmem:[%s893] sm:$0x1]
        %v2580 = vlaneseq
        %v2581 = vshrl.u32 %v2580, 7
        %v2582 = vsub.s32 0, %v2581
        %v2583 = vrot.slane %v2578, %v2582
        %2585 = vmatprep.subr.mxu0 0.0
        %2586 = vmatpush1.msra.mxu0 %v2562
        %2587 = vmatprep.subr.mxu0 0.0
        %2588 = vmatpush1.msra.mxu0 %v2563
        %2589 = vmatprep.subr.mxu0 0.0
        %2590 = vmatpush1.msra.mxu0 %v2564
        %2591 = vmatprep.subr.mxu0 0.0
        %2592 = vmatpush1.msra.mxu0 %v2565
        %2593 = vmatprep.subr.mxu0 0.0
        %2594 = vmatpush1.msra.mxu0 %v2566
        %2595 = vmatprep.subr.mxu0 0.0
        %2596 = vmatpush1.msra.mxu0 %v2567
        %2597 = vmatprep.subr.mxu0 0.0
        %2598 = vmatpush1.msra.mxu0 %v2568
        %2599 = vmatprep.subr.mxu0 0.0
        %2600 = vmatpush1.msra.mxu0 %v2569
        %2601 = vmatprep.subr.mxu0 0.0
        %2602 = vmatpush1.msra.mxu0 %v2570
        %2603 = vmatprep.subr.mxu0 0.0
        %2604 = vmatpush1.msra.mxu0 %v2571
        %2605 = vmatprep.subr.mxu0 0.0
        %2606 = vmatpush1.msra.mxu0 %v2572
        %2607 = vmatprep.subr.mxu0 0.0
        %2608 = vmatpush1.msra.mxu0 %v2573
        %2609 = vmatprep.subr.mxu0 0.0
        %2610 = vmatpush1.msra.mxu0 %v2574
        %2611 = vmatprep.subr.mxu0 0.0
        %2612 = vmatpush1.msra.mxu0 %v2575
        %2613 = vmatprep.subr.mxu0 0.0
        %2614 = vmatpush1.msra.mxu0 %v2576
        %2615 = vmatprep.subr.mxu0 0.0
        %2616 = vmatpush1.msra.mxu0 %v2577
        %2617 = vmatprep.subr.mxu0 0.0
        %2618 = vmatpush1.msra.mxu0 0.0
        %2619 = vmatprep.subr.mxu0 0.0
        %2620 = vmatpush1.msra.mxu0 0.0
        %2621 = vmatprep.subr.mxu0 0.0
        %2622 = vmatpush1.msra.mxu0 0.0
        %2623 = vmatprep.subr.mxu0 0.0
        %2624 = vmatpush1.msra.mxu0 0.0
        %2625 = vmatprep.subr.mxu0 0.0
        %2626 = vmatpush1.msra.mxu0 0.0
        %2627 = vmatprep.subr.mxu0 0.0
        %2628 = vmatpush1.msra.mxu0 0.0
        %2629 = vmatprep.subr.mxu0 0.0
        %2630 = vmatpush1.msra.mxu0 0.0
        %2631 = vmatprep.subr.mxu0 0.0
        %2632 = vmatpush1.msra.mxu0 0.0
        %2633 = vmatprep.subr.mxu0 0.0
        %2634 = vmatpush1.msra.mxu0 0.0
        %2635 = vmatprep.subr.mxu0 0.0
        %2636 = vmatpush1.msra.mxu0 0.0
        %2637 = vmatprep.subr.mxu0 0.0
        %2638 = vmatpush1.msra.mxu0 0.0
        %2639 = vmatprep.subr.mxu0 0.0
        %2640 = vmatpush1.msra.mxu0 0.0
        %2641 = vmatprep.subr.mxu0 0.0
        %2642 = vmatpush1.msra.mxu0 0.0
        %2643 = vmatprep.subr.mxu0 0.0
        %2644 = vmatpush1.msra.mxu0 0.0
        %2645 = vmatprep.subr.mxu0 0.0
        %2646 = vmatpush1.msra.mxu0 0.0
        %2647 = vmatprep.subr.mxu0 0.0
        %2648 = vmatpush1.msra.mxu0 0.0
        %2649 = vmatprep.mubr.f32.mxu0 0.0
        %2650 = vmatmul.mubr.f32.gmra.mrb[0].mxu0 %v2560
        %v2651 = vpop.f32.mrb[0].mxu0
        %v2652 = vadd.f32 %v2583, %v2651
        %v2653 = vpop.f32.mrb[0].mxu0
        %2654 = vmatprep.mubr.f32.mxu0 0.0
        %2655 = vmatmul.mubr.f32.gmra.mrb[0].mxu0 %v2561
        %v2656 = vpop.f32.mrb[0].mxu0
        %v2657 = vadd.f32 %v2583, %v2656
        %v2658 = vpop.f32.mrb[0].mxu0
        %2659 = vdwg.mxu0
        %v2660 = vadd.f32 %v2416, %v2652
        %v2661 = vadd.f32 %v2417, %v2657
        %2662 = vst [vmem:[#allocation2] sm:$0xff] %v2660
        %2663 = vst [vmem:[#allocation2 + $0x8] sm:$0xff] %v2661
        // Predicated region
        $region125: #{model_forward.1} parent=99 // pred_check
          %p2664 = pneg %p1725
        $region126: #{model_forward.1} parent=99 // pred_check_branch
          %2666 = sbr.rel (%p2664) target = $region128
        $region127: #{model_forward.1} parent=99 // pred_region
          %v2667 = vrot.slane %v2660, 4
          %v2668 = vadd.f32 %v2660, %v2667
          %v2669 = vrot.slane %v2668, 2
          %v2670 = vadd.f32 %v2668, %v2669
          %v2671 = vrot.slane %v2670, 1
          %v2672 = vadd.f32 %v2670, %v2671
          %v2673 = vrot.slane %v2661, 4
          %v2674 = vadd.f32 %v2661, %v2673
          %v2675 = vrot.slane %v2674, 2
          %v2676 = vadd.f32 %v2674, %v2675
          %v2677 = vrot.slane %v2676, 1
          %v2678 = vadd.f32 %v2676, %v2677
          %v2679 = vrcp.pop 8.0
          %v2680 = vmul.f32 %v2672, %v2679
          %v2681 = vmul.f32 %v2678, %v2679
          %v2682 = vld [vmem:[%s16] sm:$0xff]
          %v2683 = vld [vmem:[%s16 + $0x8] sm:$0xff]
          %v2684 = vld [vmem:[%s16 + $0x10] sm:$0xff]
          %v2685 = vld [vmem:[%s16 + $0x18] sm:$0xff]
          %v2686 = vld [vmem:[%s16 + $0x20] sm:$0xff]
          %v2687 = vld [vmem:[%s16 + $0x28] sm:$0xff]
          %v2688 = vld [vmem:[%s16 + $0x30] sm:$0xff]
          %v2689 = vld [vmem:[%s16 + $0x38] sm:$0xff]
          %v2690 = vld [vmem:[%s16 + $0x40] sm:$0xff]
          %v2691 = vld [vmem:[%s16 + $0x48] sm:$0xff]
          %v2692 = vld [vmem:[%s16 + $0x50] sm:$0xff]
          %v2693 = vld [vmem:[%s16 + $0x58] sm:$0xff]
          %v2694 = vld [vmem:[%s16 + $0x60] sm:$0xff]
          %v2695 = vld [vmem:[%s16 + $0x68] sm:$0xff]
          %v2696 = vld [vmem:[%s16 + $0x70] sm:$0xff]
          %v2697 = vld [vmem:[%s16 + $0x78] sm:$0xff]
          %v2698 = vld [vmem:[%s17] sm:$0x1]
          %v2700 = vlaneseq
          %v2701 = vshrl.u32 %v2700, 7
          %v2702 = vsub.s32 0, %v2701
          %v2703 = vrot.slane %v2698, %v2702
          %vm2707 = vcmask 1041409
          %v2708 = vsel %vm2707, %v2681, %v2680
          %2710 = vmatprep.subr.mxu0 0.0
          %2711 = vmatpush1.msra.mxu0 %v2682
          %2712 = vmatprep.subr.mxu0 0.0
          %2713 = vmatpush1.msra.mxu0 %v2683
          %2714 = vmatprep.subr.mxu0 0.0
          %2715 = vmatpush1.msra.mxu0 %v2684
          %2716 = vmatprep.subr.mxu0 0.0
          %2717 = vmatpush1.msra.mxu0 %v2685
          %2718 = vmatprep.subr.mxu0 0.0
          %2719 = vmatpush1.msra.mxu0 %v2686
          %2720 = vmatprep.subr.mxu0 0.0
          %2721 = vmatpush1.msra.mxu0 %v2687
          %2722 = vmatprep.subr.mxu0 0.0
          %2723 = vmatpush1.msra.mxu0 %v2688
          %2724 = vmatprep.subr.mxu0 0.0
          %2725 = vmatpush1.msra.mxu0 %v2689
          %2726 = vmatprep.subr.mxu0 0.0
          %2727 = vmatpush1.msra.mxu0 %v2690
          %2728 = vmatprep.subr.mxu0 0.0
          %2729 = vmatpush1.msra.mxu0 %v2691
          %2730 = vmatprep.subr.mxu0 0.0
          %2731 = vmatpush1.msra.mxu0 %v2692
          %2732 = vmatprep.subr.mxu0 0.0
          %2733 = vmatpush1.msra.mxu0 %v2693
          %2734 = vmatprep.subr.mxu0 0.0
          %2735 = vmatpush1.msra.mxu0 %v2694
          %2736 = vmatprep.subr.mxu0 0.0
          %2737 = vmatpush1.msra.mxu0 %v2695
          %2738 = vmatprep.subr.mxu0 0.0
          %2739 = vmatpush1.msra.mxu0 %v2696
          %2740 = vmatprep.subr.mxu0 0.0
          %2741 = vmatpush1.msra.mxu0 %v2697
          %2742 = vmatprep.subr.mxu0 0.0
          %2743 = vmatpush1.msra.mxu0 0.0
          %2744 = vmatprep.subr.mxu0 0.0
          %2745 = vmatpush1.msra.mxu0 0.0
          %2746 = vmatprep.subr.mxu0 0.0
          %2747 = vmatpush1.msra.mxu0 0.0
          %2748 = vmatprep.subr.mxu0 0.0
          %2749 = vmatpush1.msra.mxu0 0.0
          %2750 = vmatprep.subr.mxu0 0.0
          %2751 = vmatpush1.msra.mxu0 0.0
          %2752 = vmatprep.subr.mxu0 0.0
          %2753 = vmatpush1.msra.mxu0 0.0
          %2754 = vmatprep.subr.mxu0 0.0
          %2755 = vmatpush1.msra.mxu0 0.0
          %2756 = vmatprep.subr.mxu0 0.0
          %2757 = vmatpush1.msra.mxu0 0.0
          %2758 = vmatprep.subr.mxu0 0.0
          %2759 = vmatpush1.msra.mxu0 0.0
          %2760 = vmatprep.subr.mxu0 0.0
          %2761 = vmatpush1.msra.mxu0 0.0
          %2762 = vmatprep.subr.mxu0 0.0
          %2763 = vmatpush1.msra.mxu0 0.0
          %2764 = vmatprep.subr.mxu0 0.0
          %2765 = vmatpush1.msra.mxu0 0.0
          %2766 = vmatprep.subr.mxu0 0.0
          %2767 = vmatpush1.msra.mxu0 0.0
          %2768 = vmatprep.subr.mxu0 0.0
          %2769 = vmatpush1.msra.mxu0 0.0
          %2770 = vmatprep.subr.mxu0 0.0
          %2771 = vmatpush1.msra.mxu0 0.0
          %2772 = vmatprep.subr.mxu0 0.0
          %2773 = vmatpush1.msra.mxu0 0.0
          %2774 = vmatprep.mubr.f32.mxu0 0.0
          %2775 = vmatmul.mubr.f32.gmra.mrb[0].mxu0 %v2708
          %v2776 = vpop.f32.mrb[0].mxu0
          %v2777 = vadd.f32 %v2703, %v2776
          %v2778 = vpop.f32.mrb[0].mxu0
          %2779 = vdwg.mxu0
          %v2780 = vmax.f32 %v2777, 0.0
          %v2781 = vld [vmem:[%s18] sm:$0x1]
          %v2783 = vlaneseq
          %v2784 = vshrl.u32 %v2783, 7
          %v2785 = vsub.s32 0, %v2784
          %v2786 = vrot.slane %v2781, %v2785
          %v2788 = vmul.f32 %v2780, %v2786
          %vm2789 = vcmask 517120
          %v2790 = vsel %vm2789, %v2788, 0.0
          %2791 = vadd.xlane.f32.xlu0 %v2790
          %v2792 = vpop.xlane.xlu0 %2791
          %v2793 = vld [vmem:[#allocation3] sm:$0x1]
          %v2795 = vlaneseq
          %v2796 = vshrl.u32 %v2795, 7
          %v2797 = vsub.s32 0, %v2796
          %v2798 = vrot.slane %v2793, %v2797
          %v2800 = vadd.f32 %v2792, %v2798
          %vm2801 = vcmask 1024
          %2802 = vst.msk [vmem:[%s20] sm:$0x3] %vm2801, %v2800
        $region128: #{model_forward.1} parent=99 // pred_fallthru
          _
        // Predicated region
        $region129: #{model_forward.1} parent=99 // pred_check
          %p2803 = pneg %p537
        $region130: #{model_forward.1} parent=99 // pred_check_branch
          %2805 = sbr.rel (%p2803) target = $region132
        $region131: #{model_forward.1} parent=99 // pred_region
          _
        $region132: #{model_forward.1} parent=99 // pred_fallthru
          _
        // Predicated region
        $region133: #{model_forward.1} parent=99 // pred_check
          %p2806 = pneg %p558
        $region134: #{model_forward.1} parent=99 // pred_check_branch
          %2808 = sbr.rel (%p2806) target = $region136
        $region135: #{model_forward.1} parent=99 // pred_region
          _
        $region136: #{model_forward.1} parent=99 // pred_fallthru
          _
        // Predicated region
        $region137: #{model_forward.1} parent=99 // pred_check
          %p2809 = pneg %p537
        $region138: #{model_forward.1} parent=99 // pred_check_branch
          %2811 = sbr.rel (%p2809) target = $region140
        $region139: #{model_forward.1} parent=99 // pred_region
          _
        $region140: #{model_forward.1} parent=99 // pred_fallthru
          _
        // Predicated region
        $region141: #{model_forward.1} parent=99 // pred_check
          %p2812 = pneg %p558
        $region142: #{model_forward.1} parent=99 // pred_check_branch
          %2814 = sbr.rel (%p2812) target = $region144
        $region143: #{model_forward.1} parent=99 // pred_region
          _
        $region144: #{model_forward.1} parent=99 // pred_fallthru
          _
      $region100: #{model_forward.1} parent=5 // pred_fallthru
        _
      %p2815 = scmp.le.s32.totalorder 2, %s39
      // Predicated region
      $region145: #{model_forward.1} parent=5 // pred_check
        %p2816 = pneg %p2815
      $region146: #{model_forward.1} parent=5 // pred_check_branch
        %2818 = sbr.rel (%p2816) target = $region148
      $region147: #{model_forward.1} parent=5 // pred_region
        %s2819 = ssub.s32 %s39, 2
      $region148: #{model_forward.1} parent=5 // pred_fallthru
        _
    $region6: #{model_forward.1} parent=1 // loop_footer
      %s43 = sadd.s32 1, %s39
    $region7: #{model_forward.1} parent=1 // loop_footer_branch
      %38 = sbr.rel target = $region3
    $region8: #{model_forward.1} parent=1 // loop_exit
      _
    %2820 = vsyncpa [#allocation5], 1
    %s2821 = scalar_lea.sflag [#allocation5], 1
    %2822 = vsyncpa %s2821, 1
    %2823 = vsyncpa [#allocation7], 1
    %s2824 = scalar_lea.sflag [#allocation7], 1
    %2825 = vsyncpa %s2824, 1
    %2826 = vsyncpa [#allocation10], 1
    %s2827 = scalar_lea.sflag [#allocation10], 1
    %2828 = vsyncpa %s2827, 1

</llo_original>
